<compile_context>
chip_gen: v6e
topology: v6e:2x2x1
jax: 0.10.0
libtpu: 0.0.40
codegen_flags: <defaults>
</compile_context>

<pallas_src>
import functools

import jax
import jax.numpy as jnp
from jax import lax
from jax.experimental import pallas as pl
from jax.experimental.pallas import tpu as pltpu

EPS = 1e-5


def _dense_layer_kernel(x_ref, w_ref, scale_ref, shift_ref, out_ref, pad_ref):
    """Fused folded-BN + ReLU + 3x3 same-pad conv + dense concat for one row tile.

    x_ref:     (1, H, W, Cin)        f32   full image (resident across h tiles)
    w_ref:     (9*Cin, Cout)         bf16  im2col-ordered weight matrix (kh*3+kw major)
    scale_ref: (1, 1, 1, Cin)        f32   gamma * rsqrt(var + eps)
    shift_ref: (1, 1, 1, Cin)        f32   beta - mean * scale
    out_ref:   (1, TH, W, Cin+Cout)  f32/bf16  NHWC output row tile (x ++ conv)
    pad_ref:   (TH+2, Wp, Cin)       bf16  scratch: per-tile padded BN+ReLU activation
    """
    _, H, W, Cin = x_ref.shape
    TH = out_ref.shape[1]
    Cout = w_ref.shape[1]
    Wp = pad_ref.shape[1]

    h = pl.program_id(1)
    row0 = pl.multiple_of(h * TH, TH)

    # ---- Per-tile BN (pre-folded global stats) + ReLU with a 1-row halo. --------
    top = jnp.maximum(row0 - 1, 0)          # clamped halo row indices (masked below)
    bot = jnp.minimum(row0 + TH, H - 1)
    x_top = x_ref[:, pl.ds(top, 1), :, :][0]       # (1,  W, Cin)
    x_mid = x_ref[:, pl.ds(row0, TH), :, :][0]     # (TH, W, Cin)
    x_bot = x_ref[:, pl.ds(bot, 1), :, :][0]       # (1,  W, Cin)
    x_rows = jnp.concatenate([x_top, x_mid, x_bot], axis=0)      # (TH+2, W, Cin)

    scale = scale_ref[...].reshape(1, 1, Cin)
    shift = shift_ref[...].reshape(1, 1, Cin)
    a = jnp.maximum(x_rows * scale + shift, 0.0)                  # f32 on the VPU

    # Zero the halo rows that fall outside the image (top of first / bottom of last).
    r = lax.broadcasted_iota(jnp.int32, (TH + 2, 1, 1), 0) + (row0 - 1)
    a = jnp.where((r >= 0) & (r < H), a, 0.0)

    # Write padded activation to scratch (bf16 only for the MXU path).  Left halo
    # column + right halo/alignment columns are zero-filled, interior written once.
    pad_ref[:, 0:1, :] = jnp.zeros((TH + 2, 1, Cin), pad_ref.dtype)
    pad_ref[:, W + 1:Wp, :] = jnp.zeros((TH + 2, Wp - W - 1, Cin), pad_ref.dtype)
    pad_ref[:, 1:W + 1, :] = a.astype(pad_ref.dtype)

    # ---- 3x3 conv: 9 accumulated MXU dots, no im2col materialization. -----------
    acc = jnp.zeros((TH * W, Cout), jnp.float32)
    for t in range(9):
        dy, dx = divmod(t, 3)
        win = pad_ref[dy:dy + TH, dx:dx + W, :].reshape(TH * W, Cin)   # bf16
        acc = acc + jnp.dot(win, w_ref[t * Cin:(t + 1) * Cin, :],
                            preferred_element_type=jnp.float32)

    # ---- Dense connection fused + single lane-dense output store. ---------------
    out_ref[...] = jnp.concatenate(
        [x_mid.reshape(1, TH, W, Cin).astype(out_ref.dtype),
         acc.reshape(1, TH, W, Cout).astype(out_ref.dtype)],
        axis=-1)


def _pick_row_tile(H):
    for th in (32, 16, 8):
        if H % th == 0:
            return th
    return H


def dense_layer_forward_nhwc(x_nhwc, conv_w_oihw, gamma, beta, *,
                             out_dtype=jnp.float32, row_tile=None):
    """NHWC core: returns concat([x, conv(relu(bn(x)))], channel axis) in NHWC."""
    N, H, W, Cin = x_nhwc.shape
    Cout = conv_w_oihw.shape[0]
    Ctot = Cin + Cout
    xf = x_nhwc.astype(jnp.float32)

    # Single-pass training-mode batch statistics (one HBM read of x), folded into
    # per-channel scale/shift so the tiled kernel is exact under any grid.
    cnt = float(N * H * W)
    s1 = jnp.sum(xf, axis=(0, 1, 2))
    s2 = jnp.sum(xf * xf, axis=(0, 1, 2))
    mean = s1 / cnt
    var = jnp.maximum(s2 / cnt - mean * mean, 0.0)   # biased var, BN train mode
    inv = lax.rsqrt(var + EPS)
    g = gamma.astype(jnp.float32)
    b = beta.astype(jnp.float32)
    scale = (g * inv).reshape(1, 1, 1, Cin)
    shift = (b - mean * g * inv).reshape(1, 1, 1, Cin)

    # OIHW -> HWIO -> (9*Cin, Cout) weight matrix; bf16 MXU operands, f32 accumulate.
    w_mat = jnp.transpose(conv_w_oihw, (2, 3, 1, 0)).reshape(9 * Cin, Cout)
    w_mat = w_mat.astype(jnp.bfloat16)

    TH = int(row_tile) if row_tile is not None else _pick_row_tile(H)
    assert H % TH == 0, (H, TH)
    Wp = ((W + 2 + 7) // 8) * 8           # sublane-aligned padded scratch width
    grid = (N, H // TH)

    # VMEM budget: double-buffered x/out blocks + weights + scale/shift + scratch,
    # with headroom, clamped below the v7x 64 MiB/TC ceiling.
    out_isz = jnp.dtype(out_dtype).itemsize
    vmem_bytes = (2 * H * W * Cin * 4
                  + 2 * TH * W * Ctot * out_isz
                  + 2 * 9 * Cin * Cout * 2
                  + (TH + 2) * Wp * Cin * 2
                  + (2 << 20))
    vmem_limit = int(min(max(vmem_bytes, 32 * 1024 * 1024), 56 * 1024 * 1024))

    out = pl.pallas_call(
        _dense_layer_kernel,
        out_shape=jax.ShapeDtypeStruct((N, H, W, Ctot), out_dtype),
        grid=grid,
        in_specs=[
            pl.BlockSpec((1, H, W, Cin), lambda n, h: (n, 0, 0, 0)),   # image, resident across h
            pl.BlockSpec((9 * Cin, Cout), lambda n, h: (0, 0)),        # weights, resident
            pl.BlockSpec((1, 1, 1, Cin), lambda n, h: (0, 0, 0, 0)),
            pl.BlockSpec((1, 1, 1, Cin), lambda n, h: (0, 0, 0, 0)),
        ],
        out_specs=pl.BlockSpec((1, TH, W, Ctot), lambda n, h: (n, h, 0, 0)),
        scratch_shapes=[
            pltpu.VMEM((TH + 2, Wp, Cin), jnp.bfloat16),   # per-tile padded activation
        ],
        compiler_params=pltpu.CompilerParams(
            # No cross-iteration scratch dependency -> both axes independent; on
            # megacore parts (v7x) either axis can be sharded across TensorCores.
            dimension_semantics=("parallel", "parallel"),
            vmem_limit_bytes=vmem_limit,
        ),
    )(xf, w_mat, scale, shift)
    return out


def dense_layer_forward(x_nchw, conv_w_oihw, gamma, beta, *,
                        out_dtype=jnp.float32, row_tile=None):
    """Public NCHW wrapper (PyTorch parity).

    For a full DenseNet block, call dense_layer_forward_nhwc directly and stay NHWC
    end-to-end to avoid the two layout transposes per layer.
    """
    x_nhwc = jnp.transpose(x_nchw, (0, 2, 3, 1))
    out_nhwc = dense_layer_forward_nhwc(x_nhwc, conv_w_oihw, gamma, beta,
                                        out_dtype=out_dtype, row_tile=row_tile)
    return jnp.transpose(out_nhwc, (0, 3, 1, 2))


def _reference(x_nchw, conv_w_oihw, gamma, beta):
    """Pure-JAX f32 reference (PyTorch DenseLayer forward, train-mode BN)."""
    xf = x_nchw.astype(jnp.float32)
    mean = jnp.mean(xf, axis=(0, 2, 3), keepdims=True)
    var = jnp.mean((xf - mean) ** 2, axis=(0, 2, 3), keepdims=True)
    a = (xf - mean) * lax.rsqrt(var + EPS)
    a = a * gamma.reshape(1, -1, 1, 1) + beta.reshape(1, -1, 1, 1)
    a = jnp.maximum(a, 0.0)
    out = lax.conv_general_dilated(
        a, conv_w_oihw.astype(jnp.float32),
        window_strides=(1, 1), padding="SAME",
        dimension_numbers=("NCHW", "OIHW", "NCHW"))
    return jnp.concatenate([xf, out], axis=1)


if __name__ == "__main__":
    key = jax.random.PRNGKey(0)
    k_x, k_w, k_g, k_b = jax.random.split(key, 4)

    N, Cin, H, W = 2, 4, 16, 16
    growth_rate = 8

    x = jax.random.normal(k_x, (N, Cin, H, W), dtype=jnp.float32)
    conv_w = jax.random.normal(k_w, (growth_rate, Cin, 3, 3), dtype=jnp.float32) * 0.1
    gamma = 1.0 + 0.1 * jax.random.normal(k_g, (Cin,), dtype=jnp.float32)
    beta = 0.1 * jax.random.normal(k_b, (Cin,), dtype=jnp.float32)

    y_ref = _reference(x, conv_w, gamma, beta)

    # Default tiling (single row tile per image at this H) -- parity vs f32 reference.
    fwd = jax.jit(dense_layer_forward)
    y = jax.block_until_ready(fwd(x, conv_w, gamma, beta))
    assert y.shape == (N, Cin + growth_rate, H, W), y.shape
    err = float(jnp.max(jnp.abs(y - y_ref)))
    # bf16 MXU operands vs. an f32 reference -> bf16-scale tolerance.
    assert jnp.allclose(y, y_ref, atol=2e-2, rtol=2e-2), err

    # Multi-row-tile path (exercises the per-tile halo build and tile boundaries).
    fwd_t = jax.jit(functools.partial(dense_layer_forward, row_tile=8))
    y_t = jax.block_until_ready(fwd_t(x, conv_w, gamma, beta))
    err_t = float(jnp.max(jnp.abs(y_t - y_ref)))
    assert jnp.allclose(y_t, y_ref, atol=2e-2, rtol=2e-2), err_t

    # bf16-output production path: smoke test (shape + finiteness only).
    fwd_bf16 = jax.jit(functools.partial(dense_layer_forward, out_dtype=jnp.bfloat16))
    y_bf16 = jax.block_until_ready(fwd_bf16(x, conv_w, gamma, beta))
    assert y_bf16.dtype == jnp.bfloat16 and y_bf16.shape == y.shape
    assert bool(jnp.all(jnp.isfinite(y_bf16.astype(jnp.float32))))

    print("KERNEL_OK")
</pallas_src>

<mosaic_0001>
module attributes {stable_mosaic.version = 11 : i64} {
  func.func @_dense_layer_kernel(%arg0: i32, %arg1: i32, %arg2: memref<1x16x16x4xf32, #tpu.memory_space<vmem>>, %arg3: memref<36x8xbf16, #tpu.memory_space<vmem>>, %arg4: memref<1x1x1x4xf32, #tpu.memory_space<vmem>>, %arg5: memref<1x1x1x4xf32, #tpu.memory_space<vmem>>, %arg6: memref<1x16x16x12xf32, #tpu.memory_space<vmem>>, %arg7: memref<18x24x4xbf16, #tpu.memory_space<vmem>>) attributes {dimension_semantics = [#tpu.dimension_semantics<parallel>, #tpu.dimension_semantics<parallel>], iteration_bounds = array<i64: 2, 1>, scalar_prefetch = 0 : i64, scratch_operands = 1 : i64, tpu.core_type = #tpu.core_type<tc>, window_params = [{transform_indices = @transform_0, window_bounds = array<i64: 1, 16, 16, 4>}, {pipeline_mode = #tpu.pipeline_mode<synchronous>, transform_indices = @transform_1, window_bounds = array<i64: 36, 8>}, {pipeline_mode = #tpu.pipeline_mode<synchronous>, transform_indices = @transform_2, window_bounds = array<i64: 1, 1, 1, 4>}, {pipeline_mode = #tpu.pipeline_mode<synchronous>, transform_indices = @transform_3, window_bounds = array<i64: 1, 1, 1, 4>}, {transform_indices = @transform_4, window_bounds = array<i64: 1, 16, 16, 12>}]} {
    %c16_i32 = arith.constant 16 : i32
    %0 = arith.muli %arg1, %c16_i32 : i32
    %1 = tpu.assume_multiple %0, 16 : i32
    %c1_i32 = arith.constant 1 : i32
    %2 = arith.subi %1, %c1_i32 : i32
    %c0_i32 = arith.constant 0 : i32
    %3 = arith.maxsi %2, %c0_i32 : i32
    %c16_i32_0 = arith.constant 16 : i32
    %4 = arith.addi %1, %c16_i32_0 : i32
    %c15_i32 = arith.constant 15 : i32
    %5 = arith.minsi %4, %c15_i32 : i32
    %c0 = arith.constant 0 : index
    %6 = arith.index_cast %3 : i32 to index
    %c0_1 = arith.constant 0 : index
    %c0_2 = arith.constant 0 : index
    %7 = vector.load %arg2[%c0, %6, %c0_1, %c0_2] : memref<1x16x16x4xf32, #tpu.memory_space<vmem>>, vector<1x1x16x4xf32>
    %8 = vector.shape_cast %7 : vector<1x1x16x4xf32> to vector<1x16x4xf32>
    %c0_3 = arith.constant 0 : index
    %9 = arith.index_cast %1 : i32 to index
    %c0_4 = arith.constant 0 : index
    %c0_5 = arith.constant 0 : index
    %10 = vector.load %arg2[%c0_3, %9, %c0_4, %c0_5] : memref<1x16x16x4xf32, #tpu.memory_space<vmem>>, vector<1x16x16x4xf32>
    %11 = vector.shape_cast %10 : vector<1x16x16x4xf32> to vector<16x16x4xf32>
    %c0_6 = arith.constant 0 : index
    %12 = arith.index_cast %5 : i32 to index
    %c0_7 = arith.constant 0 : index
    %c0_8 = arith.constant 0 : index
    %13 = vector.load %arg2[%c0_6, %12, %c0_7, %c0_8] : memref<1x16x16x4xf32, #tpu.memory_space<vmem>>, vector<1x1x16x4xf32>
    %14 = vector.shape_cast %13 : vector<1x1x16x4xf32> to vector<1x16x4xf32>
    %15 = tpu.concatenate %8, %11, %14 in 0 : vector<1x16x4xf32>, vector<16x16x4xf32>, vector<1x16x4xf32> -> vector<18x16x4xf32>
    %c0_9 = arith.constant 0 : index
    %c0_10 = arith.constant 0 : index
    %c0_11 = arith.constant 0 : index
    %c0_12 = arith.constant 0 : index
    %16 = vector.load %arg4[%c0_9, %c0_10, %c0_11, %c0_12] : memref<1x1x1x4xf32, #tpu.memory_space<vmem>>, vector<1x1x1x4xf32>
    %17 = vector.shape_cast %16 : vector<1x1x1x4xf32> to vector<1x1x4xf32>
    %c0_13 = arith.constant 0 : index
    %c0_14 = arith.constant 0 : index
    %c0_15 = arith.constant 0 : index
    %c0_16 = arith.constant 0 : index
    %18 = vector.load %arg5[%c0_13, %c0_14, %c0_15, %c0_16] : memref<1x1x1x4xf32, #tpu.memory_space<vmem>>, vector<1x1x1x4xf32>
    %19 = vector.shape_cast %18 : vector<1x1x1x4xf32> to vector<1x1x4xf32>
    %20 = vector.broadcast %17 : vector<1x1x4xf32> to vector<18x16x4xf32>
    %21 = arith.mulf %15, %20 : vector<18x16x4xf32>
    %22 = vector.broadcast %19 : vector<1x1x4xf32> to vector<18x16x4xf32>
    %23 = arith.addf %21, %22 : vector<18x16x4xf32>
    %cst = arith.constant 0.000000e+00 : f32
    %24 = vector.broadcast %cst : f32 to vector<18x16x4xf32>
    %25 = arith.maximumf %23, %24 : vector<18x16x4xf32>
    %26 = tpu.iota {dimensions = array<i32: 0>} : vector<18x1x1xi32>
    %c1_i32_17 = arith.constant 1 : i32
    %27 = arith.subi %1, %c1_i32_17 : i32
    %28 = vector.broadcast %27 : i32 to vector<18x1x1xi32>
    %29 = arith.addi %26, %28 : vector<18x1x1xi32>
    %c0_i32_18 = arith.constant 0 : i32
    %30 = vector.broadcast %c0_i32_18 : i32 to vector<18x1x1xi32>
    %31 = arith.cmpi sge, %29, %30 : vector<18x1x1xi32>
    %c16_i32_19 = arith.constant 16 : i32
    %32 = vector.broadcast %c16_i32_19 : i32 to vector<18x1x1xi32>
    %33 = arith.cmpi slt, %29, %32 : vector<18x1x1xi32>
    %34 = arith.andi %31, %33 : vector<18x1x1xi1>
    %cst_20 = arith.constant 0.000000e+00 : f32
    %35 = vector.shape_cast %34 : vector<18x1x1xi1> to vector<18x1x1xi1>
    %36 = vector.broadcast %35 : vector<18x1x1xi1> to vector<18x16x4xi1>
    %37 = vector.broadcast %cst_20 : f32 to vector<18x16x4xf32>
    %38 = arith.select %36, %25, %37 : vector<18x16x4xi1>, vector<18x16x4xf32>
    %cst_21 = arith.constant 0.000000e+00 : bf16
    %39 = vector.broadcast %cst_21 : bf16 to vector<18x1x4xbf16>
    %c0_22 = arith.constant 0 : index
    %c0_23 = arith.constant 0 : index
    %c0_24 = arith.constant 0 : index
    %40 = vector.load %arg7[%c0_22, %c0_23, %c0_24] : memref<18x24x4xbf16, #tpu.memory_space<vmem>>, vector<18x1x4xbf16>
    tpu.vector_store %arg7[%c0_22, %c0_23, %c0_24], %39 {strides = array<i32>} : memref<18x24x4xbf16, #tpu.memory_space<vmem>>, vector<18x1x4xbf16>,
    %cst_25 = arith.constant 0.000000e+00 : bf16
    %41 = vector.broadcast %cst_25 : bf16 to vector<18x7x4xbf16>
    %c0_26 = arith.constant 0 : index
    %c17 = arith.constant 17 : index
    %c0_27 = arith.constant 0 : index
    %42 = vector.load %arg7[%c0_26, %c17, %c0_27] : memref<18x24x4xbf16, #tpu.memory_space<vmem>>, vector<18x7x4xbf16>
    tpu.vector_store %arg7[%c0_26, %c17, %c0_27], %41 {strides = array<i32>} : memref<18x24x4xbf16, #tpu.memory_space<vmem>>, vector<18x7x4xbf16>,
    %43 = arith.truncf %38 : vector<18x16x4xf32> to vector<18x16x4xbf16>
    %c0_28 = arith.constant 0 : index
    %c1 = arith.constant 1 : index
    %c0_29 = arith.constant 0 : index
    %44 = vector.load %arg7[%c0_28, %c1, %c0_29] : memref<18x24x4xbf16, #tpu.memory_space<vmem>>, vector<18x16x4xbf16>
    tpu.vector_store %arg7[%c0_28, %c1, %c0_29], %43 {strides = array<i32>} : memref<18x24x4xbf16, #tpu.memory_space<vmem>>, vector<18x16x4xbf16>,
    %cst_30 = arith.constant 0.000000e+00 : f32
    %45 = vector.broadcast %cst_30 : f32 to vector<256x8xf32>
    %c0_31 = arith.constant 0 : index
    %c0_32 = arith.constant 0 : index
    %c0_33 = arith.constant 0 : index
    %46 = vector.load %arg7[%c0_31, %c0_32, %c0_33] : memref<18x24x4xbf16, #tpu.memory_space<vmem>>, vector<16x16x4xbf16>
    %47 = vector.shape_cast %46 : vector<16x16x4xbf16> to vector<256x4xbf16>
    %c0_34 = arith.constant 0 : index
    %c0_35 = arith.constant 0 : index
    %48 = vector.load %arg3[%c0_34, %c0_35] : memref<36x8xbf16, #tpu.memory_space<vmem>>, vector<4x8xbf16>
    %cst_36 = arith.constant dense<0.000000e+00> : vector<256x8xf32>
    %49 = tpu.matmul %47, %48, %cst_36 {dimension_numbers = #tpu.dot_dimension_numbers<[1], [0], [0], [1], [0, 0, 1, 1], [], []>} : vector<256x4xbf16>, vector<4x8xbf16>, vector<256x8xf32> -> vector<256x8xf32>
    %50 = arith.addf %45, %49 : vector<256x8xf32>
    %c0_37 = arith.constant 0 : index
    %c1_38 = arith.constant 1 : index
    %c0_39 = arith.constant 0 : index
    %51 = vector.load %arg7[%c0_37, %c1_38, %c0_39] : memref<18x24x4xbf16, #tpu.memory_space<vmem>>, vector<16x16x4xbf16>
    %52 = vector.shape_cast %51 : vector<16x16x4xbf16> to vector<256x4xbf16>
    %c4 = arith.constant 4 : index
    %c0_40 = arith.constant 0 : index
    %53 = vector.load %arg3[%c4, %c0_40] : memref<36x8xbf16, #tpu.memory_space<vmem>>, vector<4x8xbf16>
    %cst_41 = arith.constant dense<0.000000e+00> : vector<256x8xf32>
    %54 = tpu.matmul %52, %53, %cst_41 {dimension_numbers = #tpu.dot_dimension_numbers<[1], [0], [0], [1], [0, 0, 1, 1], [], []>} : vector<256x4xbf16>, vector<4x8xbf16>, vector<256x8xf32> -> vector<256x8xf32>
    %55 = arith.addf %50, %54 : vector<256x8xf32>
    %c0_42 = arith.constant 0 : index
    %c2 = arith.constant 2 : index
    %c0_43 = arith.constant 0 : index
    %56 = vector.load %arg7[%c0_42, %c2, %c0_43] : memref<18x24x4xbf16, #tpu.memory_space<vmem>>, vector<16x16x4xbf16>
    %57 = vector.shape_cast %56 : vector<16x16x4xbf16> to vector<256x4xbf16>
    %c8 = arith.constant 8 : index
    %c0_44 = arith.constant 0 : index
    %58 = vector.load %arg3[%c8, %c0_44] : memref<36x8xbf16, #tpu.memory_space<vmem>>, vector<4x8xbf16>
    %cst_45 = arith.constant dense<0.000000e+00> : vector<256x8xf32>
    %59 = tpu.matmul %57, %58, %cst_45 {dimension_numbers = #tpu.dot_dimension_numbers<[1], [0], [0], [1], [0, 0, 1, 1], [], []>} : vector<256x4xbf16>, vector<4x8xbf16>, vector<256x8xf32> -> vector<256x8xf32>
    %60 = arith.addf %55, %59 : vector<256x8xf32>
    %c1_46 = arith.constant 1 : index
    %c0_47 = arith.constant 0 : index
    %c0_48 = arith.constant 0 : index
    %61 = vector.load %arg7[%c1_46, %c0_47, %c0_48] : memref<18x24x4xbf16, #tpu.memory_space<vmem>>, vector<16x16x4xbf16>
    %62 = vector.shape_cast %61 : vector<16x16x4xbf16> to vector<256x4xbf16>
    %c12 = arith.constant 12 : index
    %c0_49 = arith.constant 0 : index
    %63 = vector.load %arg3[%c12, %c0_49] : memref<36x8xbf16, #tpu.memory_space<vmem>>, vector<4x8xbf16>
    %cst_50 = arith.constant dense<0.000000e+00> : vector<256x8xf32>
    %64 = tpu.matmul %62, %63, %cst_50 {dimension_numbers = #tpu.dot_dimension_numbers<[1], [0], [0], [1], [0, 0, 1, 1], [], []>} : vector<256x4xbf16>, vector<4x8xbf16>, vector<256x8xf32> -> vector<256x8xf32>
    %65 = arith.addf %60, %64 : vector<256x8xf32>
    %c1_51 = arith.constant 1 : index
    %c1_52 = arith.constant 1 : index
    %c0_53 = arith.constant 0 : index
    %66 = vector.load %arg7[%c1_51, %c1_52, %c0_53] : memref<18x24x4xbf16, #tpu.memory_space<vmem>>, vector<16x16x4xbf16>
    %67 = vector.shape_cast %66 : vector<16x16x4xbf16> to vector<256x4xbf16>
    %c16 = arith.constant 16 : index
    %c0_54 = arith.constant 0 : index
    %68 = vector.load %arg3[%c16, %c0_54] : memref<36x8xbf16, #tpu.memory_space<vmem>>, vector<4x8xbf16>
    %cst_55 = arith.constant dense<0.000000e+00> : vector<256x8xf32>
    %69 = tpu.matmul %67, %68, %cst_55 {dimension_numbers = #tpu.dot_dimension_numbers<[1], [0], [0], [1], [0, 0, 1, 1], [], []>} : vector<256x4xbf16>, vector<4x8xbf16>, vector<256x8xf32> -> vector<256x8xf32>
    %70 = arith.addf %65, %69 : vector<256x8xf32>
    %c1_56 = arith.constant 1 : index
    %c2_57 = arith.constant 2 : index
    %c0_58 = arith.constant 0 : index
    %71 = vector.load %arg7[%c1_56, %c2_57, %c0_58] : memref<18x24x4xbf16, #tpu.memory_space<vmem>>, vector<16x16x4xbf16>
    %72 = vector.shape_cast %71 : vector<16x16x4xbf16> to vector<256x4xbf16>
    %c20 = arith.constant 20 : index
    %c0_59 = arith.constant 0 : index
    %73 = vector.load %arg3[%c20, %c0_59] : memref<36x8xbf16, #tpu.memory_space<vmem>>, vector<4x8xbf16>
    %cst_60 = arith.constant dense<0.000000e+00> : vector<256x8xf32>
    %74 = tpu.matmul %72, %73, %cst_60 {dimension_numbers = #tpu.dot_dimension_numbers<[1], [0], [0], [1], [0, 0, 1, 1], [], []>} : vector<256x4xbf16>, vector<4x8xbf16>, vector<256x8xf32> -> vector<256x8xf32>
    %75 = arith.addf %70, %74 : vector<256x8xf32>
    %c2_61 = arith.constant 2 : index
    %c0_62 = arith.constant 0 : index
    %c0_63 = arith.constant 0 : index
    %76 = vector.load %arg7[%c2_61, %c0_62, %c0_63] : memref<18x24x4xbf16, #tpu.memory_space<vmem>>, vector<16x16x4xbf16>
    %77 = vector.shape_cast %76 : vector<16x16x4xbf16> to vector<256x4xbf16>
    %c24 = arith.constant 24 : index
    %c0_64 = arith.constant 0 : index
    %78 = vector.load %arg3[%c24, %c0_64] : memref<36x8xbf16, #tpu.memory_space<vmem>>, vector<4x8xbf16>
    %cst_65 = arith.constant dense<0.000000e+00> : vector<256x8xf32>
    %79 = tpu.matmul %77, %78, %cst_65 {dimension_numbers = #tpu.dot_dimension_numbers<[1], [0], [0], [1], [0, 0, 1, 1], [], []>} : vector<256x4xbf16>, vector<4x8xbf16>, vector<256x8xf32> -> vector<256x8xf32>
    %80 = arith.addf %75, %79 : vector<256x8xf32>
    %c2_66 = arith.constant 2 : index
    %c1_67 = arith.constant 1 : index
    %c0_68 = arith.constant 0 : index
    %81 = vector.load %arg7[%c2_66, %c1_67, %c0_68] : memref<18x24x4xbf16, #tpu.memory_space<vmem>>, vector<16x16x4xbf16>
    %82 = vector.shape_cast %81 : vector<16x16x4xbf16> to vector<256x4xbf16>
    %c28 = arith.constant 28 : index
    %c0_69 = arith.constant 0 : index
    %83 = vector.load %arg3[%c28, %c0_69] : memref<36x8xbf16, #tpu.memory_space<vmem>>, vector<4x8xbf16>
    %cst_70 = arith.constant dense<0.000000e+00> : vector<256x8xf32>
    %84 = tpu.matmul %82, %83, %cst_70 {dimension_numbers = #tpu.dot_dimension_numbers<[1], [0], [0], [1], [0, 0, 1, 1], [], []>} : vector<256x4xbf16>, vector<4x8xbf16>, vector<256x8xf32> -> vector<256x8xf32>
    %85 = arith.addf %80, %84 : vector<256x8xf32>
    %c2_71 = arith.constant 2 : index
    %c2_72 = arith.constant 2 : index
    %c0_73 = arith.constant 0 : index
    %86 = vector.load %arg7[%c2_71, %c2_72, %c0_73] : memref<18x24x4xbf16, #tpu.memory_space<vmem>>, vector<16x16x4xbf16>
    %87 = vector.shape_cast %86 : vector<16x16x4xbf16> to vector<256x4xbf16>
    %c32 = arith.constant 32 : index
    %c0_74 = arith.constant 0 : index
    %88 = vector.load %arg3[%c32, %c0_74] : memref<36x8xbf16, #tpu.memory_space<vmem>>, vector<4x8xbf16>
    %cst_75 = arith.constant dense<0.000000e+00> : vector<256x8xf32>
    %89 = tpu.matmul %87, %88, %cst_75 {dimension_numbers = #tpu.dot_dimension_numbers<[1], [0], [0], [1], [0, 0, 1, 1], [], []>} : vector<256x4xbf16>, vector<4x8xbf16>, vector<256x8xf32> -> vector<256x8xf32>
    %90 = arith.addf %85, %89 : vector<256x8xf32>
    %91 = vector.shape_cast %11 : vector<16x16x4xf32> to vector<1x16x16x4xf32>
    %92 = vector.shape_cast %90 : vector<256x8xf32> to vector<1x16x16x8xf32>
    %93 = tpu.concatenate %91, %92 in 3 : vector<1x16x16x4xf32>, vector<1x16x16x8xf32> -> vector<1x16x16x12xf32>
    %c0_76 = arith.constant 0 : index
    %c0_77 = arith.constant 0 : index
    %c0_78 = arith.constant 0 : index
    %c0_79 = arith.constant 0 : index
    %94 = vector.load %arg6[%c0_76, %c0_77, %c0_78, %c0_79] : memref<1x16x16x12xf32, #tpu.memory_space<vmem>>, vector<1x16x16x12xf32>
    tpu.vector_store %arg6[%c0_76, %c0_77, %c0_78, %c0_79], %93 {strides = array<i32>} : memref<1x16x16x12xf32, #tpu.memory_space<vmem>>, vector<1x16x16x12xf32>,
    return
  }
  func.func @transform_0(%arg0: i32, %arg1: i32) -> (i32, i32, i32, i32) {
    %c0_i32 = arith.constant 0 : i32
    %c0_i32_0 = arith.constant 0 : i32
    %c0_i32_1 = arith.constant 0 : i32
    %c0_i32_2 = arith.constant 0 : i32
    return %arg0, %c0_i32, %c0_i32_0, %c0_i32_1 : i32, i32, i32, i32
  }
  func.func @transform_1(%arg0: i32, %arg1: i32) -> (i32, i32) {
    %c0_i32 = arith.constant 0 : i32
    %c0_i32_0 = arith.constant 0 : i32
    %c0_i32_1 = arith.constant 0 : i32
    return %c0_i32, %c0_i32_0 : i32, i32
  }
  func.func @transform_2(%arg0: i32, %arg1: i32) -> (i32, i32, i32, i32) {
    %c0_i32 = arith.constant 0 : i32
    %c0_i32_0 = arith.constant 0 : i32
    %c0_i32_1 = arith.constant 0 : i32
    %c0_i32_2 = arith.constant 0 : i32
    %c0_i32_3 = arith.constant 0 : i32
    return %c0_i32, %c0_i32_0, %c0_i32_1, %c0_i32_2 : i32, i32, i32, i32
  }
  func.func @transform_3(%arg0: i32, %arg1: i32) -> (i32, i32, i32, i32) {
    %c0_i32 = arith.constant 0 : i32
    %c0_i32_0 = arith.constant 0 : i32
    %c0_i32_1 = arith.constant 0 : i32
    %c0_i32_2 = arith.constant 0 : i32
    %c0_i32_3 = arith.constant 0 : i32
    return %c0_i32, %c0_i32_0, %c0_i32_1, %c0_i32_2 : i32, i32, i32, i32
  }
  func.func @transform_4(%arg0: i32, %arg1: i32) -> (i32, i32, i32, i32) {
    %c0_i32 = arith.constant 0 : i32
    %c0_i32_0 = arith.constant 0 : i32
    %c0_i32_1 = arith.constant 0 : i32
    return %arg0, %arg1, %c0_i32, %c0_i32_0 : i32, i32, i32, i32
  }
}

</mosaic_0001>

<llo_original>
// kernel: dense_layer_forward.1
$region0: #{dense_layer_forward.1}
  #allocation0 [shape = 'u32[]', space=smem, size = 0x4, offset = 0x4, fixed_abs, tag = 'smem constant byte address 0x4 - core index']
  #allocation1 [shape = 'u32[144,128]{1,0:T(1,128)}', space=vmem, size = 0x12000, scoped, tag = 'internal scratch']
  #allocation2 [shape = 'bf16[18,24,4]{2,1,0:T(8,128)(2,1)}', space=vmem, size = 0x1b000, scoped, tag = 'scratch operand']
  %s0 = inlined_call_operand.vmem [shape: f32[2,16,16,4], index: 0, kind: input, shape index: {}]
  %s1 = inlined_call_operand.vmem [shape: bf16[36,8], index: 1, kind: input, shape index: {}]
  %s2 = inlined_call_operand.vmem [shape: f32[1,1,1,4], index: 2, kind: input, shape index: {}]
  %s3 = inlined_call_operand.vmem [shape: f32[1,1,1,4], index: 3, kind: input, shape index: {}]
  %s4 = inlined_call_operand.vmem [shape: f32[2,16,16,12], index: 4, kind: output, shape index: {}]
  %s5 = sld [smem:[#allocation0]]
  $region49: #{dense_layer_forward.1} parent=0
    _
  %s7 = ssub.s32 1, %s5
  %s8 = scalar_select 0, %s7, %s5
  loop: start=0, step=1, limit=4
  $region2: #{dense_layer_forward.1} parent=0 // loop_pre_header
    _
  $region3: #{dense_layer_forward.1} parent=0 // loop_header
    %s10 = sphi 0, %s14
    %p11 = scmp.ge.s32.totalorder %s10, 4
    %s17 = sphi 0, %s29
    %s18 = sphi 0, %s25
    %s19 = sphi 0, %s17
    %s20 = sphi 0, %s18
    %s21 = sphi 0, %s19
    %s22 = sphi 0, %s20
    %s32 = sphi 0, %s34
    %s35 = sphi 0, %s32
    %s36 = sphi 0, %s35
    %s52 = sphi 0, %s36
    %s56 = sphi 0, %s56
    %s58 = sphi 0, %s56
    %s59 = sphi 0, %s58
    %s73 = sphi 0, %s59
    %s77 = sphi 0, %s77
    %s79 = sphi 0, %s77
    %s80 = sphi 0, %s79
    %s94 = sphi 0, %s80
    %s98 = sphi 0, %s98
    %s100 = sphi 0, %s98
    %s101 = sphi 0, %s100
    %s115 = sphi 0, %s101
    %s123 = sphi 0, %s125
    %s126 = sphi 0, %s123
    %s127 = sphi 0, %s126
    %s143 = sphi 0, %s127
  $region4: #{dense_layer_forward.1} parent=0 // loop_header_branch
    %13 = sbr.rel (%p11) target = $region8
  $region5: #{dense_layer_forward.1} parent=0 // loop_body
    %s15 = ssub.s32 %s10, 1
    %s16 = ssub.s32 %s10, 2
    %s23 = sadd.s32 1, %s18
    %p24 = scmp.ge.s32.totalorder %s23, 1
    %s25 = scalar_select %p24, 0, %s23
    %s26 = sadd.s32 1, %s17
    %s27 = scalar_select %p24, %s26, %s17
    %p28 = scmp.ge.s32.totalorder %s27, 2
    %s29 = scalar_select %p28, 0, %s27
    %s30 = ssub.s32 %s17, %s29
    %p31 = scmp.eq.s32.totalorder %s30, 0
    %s33 = sadd.s32 %s32, 1
    %s34 = scalar_select %p31, %s32, %s33
    %p37 = pneg %p31
    %p38 = scmp.eq.s32.totalorder %s10, 1
    %p39 = por %p37, %p38
    %p40 = scmp.ne.s32.totalorder %s32, %s35
    %p41 = scmp.eq.s32.totalorder %s10, 0
    %p42 = por %p40, %p41
    %p43 = scmp.ne.s32.totalorder %s32, %s35
    %p44 = scmp.eq.s32.totalorder %s15, 1
    %p45 = por %p43, %p44
    %p46 = scmp.ne.s32.totalorder %s35, %s36
    %p47 = scmp.eq.s32.totalorder %s15, 0
    %p48 = por %p46, %p47
    %p49 = scmp.ne.s32.totalorder %s35, %s36
    %p50 = scmp.eq.s32.totalorder %s16, 1
    %p51 = por %p49, %p50
    %p53 = scmp.ne.s32.totalorder %s36, %s52
    %p54 = scmp.eq.s32.totalorder %s16, 0
    %p55 = por %p53, %p54
    %s57 = sadd.s32 %s56, 1
    %p60 = scmp.eq.s32.totalorder %s10, 1
    %p61 = scmp.ne.s32.totalorder %s56, %s58
    %p62 = scmp.eq.s32.totalorder %s10, 0
    %p63 = por %p61, %p62
    %p64 = scmp.ne.s32.totalorder %s56, %s58
    %p65 = scmp.eq.s32.totalorder %s15, 1
    %p66 = por %p64, %p65
    %p67 = scmp.ne.s32.totalorder %s58, %s59
    %p68 = scmp.eq.s32.totalorder %s15, 0
    %p69 = por %p67, %p68
    %p70 = scmp.ne.s32.totalorder %s58, %s59
    %p71 = scmp.eq.s32.totalorder %s16, 1
    %p72 = por %p70, %p71
    %p74 = scmp.ne.s32.totalorder %s59, %s73
    %p75 = scmp.eq.s32.totalorder %s16, 0
    %p76 = por %p74, %p75
    %s78 = sadd.s32 %s77, 1
    %p81 = scmp.eq.s32.totalorder %s10, 1
    %p82 = scmp.ne.s32.totalorder %s77, %s79
    %p83 = scmp.eq.s32.totalorder %s10, 0
    %p84 = por %p82, %p83
    %p85 = scmp.ne.s32.totalorder %s77, %s79
    %p86 = scmp.eq.s32.totalorder %s15, 1
    %p87 = por %p85, %p86
    %p88 = scmp.ne.s32.totalorder %s79, %s80
    %p89 = scmp.eq.s32.totalorder %s15, 0
    %p90 = por %p88, %p89
    %p91 = scmp.ne.s32.totalorder %s79, %s80
    %p92 = scmp.eq.s32.totalorder %s16, 1
    %p93 = por %p91, %p92
    %p95 = scmp.ne.s32.totalorder %s80, %s94
    %p96 = scmp.eq.s32.totalorder %s16, 0
    %p97 = por %p95, %p96
    %s99 = sadd.s32 %s98, 1
    %p102 = scmp.eq.s32.totalorder %s10, 1
    %p103 = scmp.ne.s32.totalorder %s98, %s100
    %p104 = scmp.eq.s32.totalorder %s10, 0
    %p105 = por %p103, %p104
    %p106 = scmp.ne.s32.totalorder %s98, %s100
    %p107 = scmp.eq.s32.totalorder %s15, 1
    %p108 = por %p106, %p107
    %p109 = scmp.ne.s32.totalorder %s100, %s101
    %p110 = scmp.eq.s32.totalorder %s15, 0
    %p111 = por %p109, %p110
    %p112 = scmp.ne.s32.totalorder %s100, %s101
    %p113 = scmp.eq.s32.totalorder %s16, 1
    %p114 = por %p112, %p113
    %p116 = scmp.ne.s32.totalorder %s101, %s115
    %p117 = scmp.eq.s32.totalorder %s16, 0
    %p118 = por %p116, %p117
    %s119 = ssub.s32 %s17, %s29
    %s120 = ssub.s32 %s18, %s25
    %s121 = sor.u32 %s119, %s120
    %p122 = scmp.eq.s32.totalorder %s121, 0
    %s124 = sadd.s32 %s123, 1
    %s125 = scalar_select %p122, %s123, %s124
    %p128 = pneg %p122
    %p129 = scmp.eq.s32.totalorder %s10, 1
    %p130 = por %p128, %p129
    %p131 = scmp.ne.s32.totalorder %s123, %s126
    %p132 = scmp.eq.s32.totalorder %s10, 0
    %p133 = por %p131, %p132
    %p134 = scmp.ne.s32.totalorder %s123, %s126
    %p135 = scmp.eq.s32.totalorder %s15, 1
    %p136 = por %p134, %p135
    %p137 = scmp.ne.s32.totalorder %s126, %s127
    %p138 = scmp.eq.s32.totalorder %s15, 0
    %p139 = por %p137, %p138
    %p140 = scmp.ne.s32.totalorder %s126, %s127
    %p141 = scmp.eq.s32.totalorder %s16, 1
    %p142 = por %p140, %p141
    %p144 = scmp.ne.s32.totalorder %s127, %s143
    %p145 = scmp.eq.s32.totalorder %s16, 0
    %p146 = por %p144, %p145
    %p147 = scmp.le.s32.totalorder 1, %s10
    %p148 = scmp.lt.s32.totalorder %s10, 3
    %p149 = pnand %p147, %p148
    %p150 = pneg %p149
    // Predicated region
    $region9: #{dense_layer_forward.1} parent=5 // pred_check
      _
    $region10: #{dense_layer_forward.1} parent=5 // pred_check_branch
      %152 = sbr.rel (%p149) target = $region12
    $region11: #{dense_layer_forward.1} parent=5 // pred_region
      %s153 = ssub.s32 %s10, 1
      // Predicated region
      $region13: #{dense_layer_forward.1} parent=11 // pred_check
        %p154 = pneg %p69
      $region14: #{dense_layer_forward.1} parent=11 // pred_check_branch
        %156 = sbr.rel (%p154) target = $region16
      $region15: #{dense_layer_forward.1} parent=11 // pred_region
        _
      $region16: #{dense_layer_forward.1} parent=11 // pred_fallthru
        _
      // Predicated region
      $region17: #{dense_layer_forward.1} parent=11 // pred_check
        %p157 = pneg %p90
      $region18: #{dense_layer_forward.1} parent=11 // pred_check_branch
        %159 = sbr.rel (%p157) target = $region20
      $region19: #{dense_layer_forward.1} parent=11 // pred_region
        _
      $region20: #{dense_layer_forward.1} parent=11 // pred_fallthru
        _
      // Predicated region
      $region21: #{dense_layer_forward.1} parent=11 // pred_check
        %p160 = pneg %p111
      $region22: #{dense_layer_forward.1} parent=11 // pred_check_branch
        %162 = sbr.rel (%p160) target = $region24
      $region23: #{dense_layer_forward.1} parent=11 // pred_region
        _
      $region24: #{dense_layer_forward.1} parent=11 // pred_fallthru
        _
    $region12: #{dense_layer_forward.1} parent=5 // pred_fallthru
      _
    %p163 = scmp.lt.s32.totalorder %s10, 2
    // Predicated region
    $region25: #{dense_layer_forward.1} parent=5 // pred_check
      %p164 = pneg %p163
    $region26: #{dense_layer_forward.1} parent=5 // pred_check_branch
      %166 = sbr.rel (%p164) target = $region28
    $region27: #{dense_layer_forward.1} parent=5 // pred_region
      // Predicated region
      $region29: #{dense_layer_forward.1} parent=27 // pred_check
        %p167 = pneg %p42
      $region30: #{dense_layer_forward.1} parent=27 // pred_check_branch
        %169 = sbr.rel (%p167) target = $region32
      $region31: #{dense_layer_forward.1} parent=27 // pred_region
        %p170 = scmp.lt.s32.totalorder %s17, 1
        %s171 = scalar_select %p170, %s17, 1
        %s172 = smul.addr %s171, 32
        %s173 = smul.addr %s172, 8
        %s174 = scalar_lea.vmem %s0, %s173
      $region32: #{dense_layer_forward.1} parent=27 // pred_fallthru
        _
    $region28: #{dense_layer_forward.1} parent=5 // pred_fallthru
      _
    %p175 = scmp.le.s32.totalorder 1, %s10
    %p176 = scmp.lt.s32.totalorder %s10, 3
    %p177 = pnand %p175, %p176
    %p178 = pneg %p177
    // Predicated region
    $region33: #{dense_layer_forward.1} parent=5 // pred_check
      _
    $region34: #{dense_layer_forward.1} parent=5 // pred_check_branch
      %180 = sbr.rel (%p177) target = $region36
    $region35: #{dense_layer_forward.1} parent=5 // pred_region
      %s181 = ssub.s32 %s10, 1
      %p182 = scmp.lt.s32.totalorder %s19, 1
      %s183 = scalar_select %p182, %s19, 1
      %s184 = smul.addr %s183, 32
      %s185 = smul.addr %s184, 8
      %s186 = scalar_lea.vmem %s0, %s185
      %p187 = pneg %p48
      %p188 = pneg %p45
      %p189 = pneg %p69
      %p190 = pneg %p66
      %p191 = pneg %p90
      %p192 = pneg %p87
      %p193 = pneg %p111
      %p194 = pneg %p108
      %p195 = pneg %p139
      %p196 = pneg %p136
      %s197 = smul.u32 16, %s20
      %p198 = scmp.lt.s32.totalorder %s19, 1
      %s199 = scalar_select %p198, %s19, 1
      %p200 = scmp.lt.s32.totalorder %s197, 15
      %s201 = scalar_select %p200, %s197, 15
      %s202 = smul.addr %s201, 2
      %s203 = smul.addr %s199, 32
      %s204 = sadd.s32 %s202, %s203
      %s205 = smul.addr %s204, 8
      %s206 = scalar_lea.vmem %s4, %s205
      %p207 = scmp.lt.s32.totalorder %s19, 1
      %s208 = scalar_select %p207, %s19, 1
      %s209 = smul.addr %s208, 32
      %s210 = smul.addr %s209, 8
      %s211 = scalar_lea.vmem %s0, %s210
      %s212 = smul.u32 16, %s20
      %p213 = scmp.lt.s32.totalorder %s19, 1
      %s214 = scalar_select %p213, %s19, 1
      %p215 = scmp.lt.s32.totalorder %s212, 15
      %s216 = scalar_select %p215, %s212, 15
      %s217 = smul.addr %s216, 2
      %s218 = smul.addr %s214, 32
      %s219 = sadd.s32 %s217, %s218
      %s220 = smul.addr %s219, 8
      %s221 = scalar_lea.vmem %s4, %s220
      %s222 = smul.u32 16, %s20
      %s224 = smul.u32 %s20, 16
      %s225 = ssub.s32 %s224, 1
      %p226 = scmp.gt.s32.totalorder %s225, 0
      %s227 = scalar_select %p226, %s225, 0
      %s228 = sadd.s32 %s224, 16
      %p229 = scmp.lt.s32.totalorder %s228, 15
      %s230 = scalar_select %p229, %s228, 15
      %s231 = smul.u32 %s227, 16
      %s232 = scalar_lea.vmem %s211, %s231
      %v233 = vld [vmem:[%s232] sm:$0xff]
      %v234 = vld [vmem:[%s232 + $0x8] sm:$0xff]
      %s235 = smul.u32 %s224, 16
      %s236 = scalar_lea.vmem %s211, %s235
      %v237 = vld [vmem:[%s236] sm:$0xff]
      %v238 = vld [vmem:[%s236 + $0x8] sm:$0xff]
      %v239 = vld [vmem:[%s236 + $0x10] sm:$0xff]
      %v240 = vld [vmem:[%s236 + $0x18] sm:$0xff]
      %v241 = vld [vmem:[%s236 + $0x20] sm:$0xff]
      %v242 = vld [vmem:[%s236 + $0x28] sm:$0xff]
      %v243 = vld [vmem:[%s236 + $0x30] sm:$0xff]
      %v244 = vld [vmem:[%s236 + $0x38] sm:$0xff]
      %v245 = vld [vmem:[%s236 + $0x40] sm:$0xff]
      %v246 = vld [vmem:[%s236 + $0x48] sm:$0xff]
      %v247 = vld [vmem:[%s236 + $0x50] sm:$0xff]
      %v248 = vld [vmem:[%s236 + $0x58] sm:$0xff]
      %v249 = vld [vmem:[%s236 + $0x60] sm:$0xff]
      %v250 = vld [vmem:[%s236 + $0x68] sm:$0xff]
      %v251 = vld [vmem:[%s236 + $0x70] sm:$0xff]
      %v252 = vld [vmem:[%s236 + $0x78] sm:$0xff]
      %v253 = vld [vmem:[%s236 + $0x80] sm:$0xff]
      %v254 = vld [vmem:[%s236 + $0x88] sm:$0xff]
      %v255 = vld [vmem:[%s236 + $0x90] sm:$0xff]
      %v256 = vld [vmem:[%s236 + $0x98] sm:$0xff]
      %v257 = vld [vmem:[%s236 + $0xa0] sm:$0xff]
      %v258 = vld [vmem:[%s236 + $0xa8] sm:$0xff]
      %v259 = vld [vmem:[%s236 + $0xb0] sm:$0xff]
      %v260 = vld [vmem:[%s236 + $0xb8] sm:$0xff]
      %v261 = vld [vmem:[%s236 + $0xc0] sm:$0xff]
      %v262 = vld [vmem:[%s236 + $0xc8] sm:$0xff]
      %v263 = vld [vmem:[%s236 + $0xd0] sm:$0xff]
      %v264 = vld [vmem:[%s236 + $0xd8] sm:$0xff]
      %v265 = vld [vmem:[%s236 + $0xe0] sm:$0xff]
      %v266 = vld [vmem:[%s236 + $0xe8] sm:$0xff]
      %v267 = vld [vmem:[%s236 + $0xf0] sm:$0xff]
      %v268 = vld [vmem:[%s236 + $0xf8] sm:$0xff]
      %s269 = smul.u32 %s230, 16
      %s270 = scalar_lea.vmem %s211, %s269
      %v271 = vld [vmem:[%s270] sm:$0xff]
      %v272 = vld [vmem:[%s270 + $0x8] sm:$0xff]
      %v273 = vld [vmem:[%s2] sm:$0x1]
      %v274 = vld [vmem:[%s3] sm:$0x1]
      %v276 = vlaneseq
      %v277 = vshrl.u32 %v276, 7
      %v278 = vsub.s32 0, %v277
      %v279 = vrot.slane %v273, %v278
      %v281 = vmul.f32 %v233, %v279
      %v282 = vmul.f32 %v234, %v279
      %v283 = vmul.f32 %v237, %v279
      %v284 = vmul.f32 %v238, %v279
      %v285 = vmul.f32 %v239, %v279
      %v286 = vmul.f32 %v240, %v279
      %v287 = vmul.f32 %v241, %v279
      %v288 = vmul.f32 %v242, %v279
      %v289 = vmul.f32 %v243, %v279
      %v290 = vmul.f32 %v244, %v279
      %v291 = vmul.f32 %v245, %v279
      %v292 = vmul.f32 %v246, %v279
      %v293 = vmul.f32 %v247, %v279
      %v294 = vmul.f32 %v248, %v279
      %v295 = vmul.f32 %v249, %v279
      %v296 = vmul.f32 %v250, %v279
      %v297 = vmul.f32 %v251, %v279
      %v298 = vmul.f32 %v252, %v279
      %v299 = vmul.f32 %v253, %v279
      %v300 = vmul.f32 %v254, %v279
      %v301 = vmul.f32 %v255, %v279
      %v302 = vmul.f32 %v256, %v279
      %v303 = vmul.f32 %v257, %v279
      %v304 = vmul.f32 %v258, %v279
      %v305 = vmul.f32 %v259, %v279
      %v306 = vmul.f32 %v260, %v279
      %v307 = vmul.f32 %v261, %v279
      %v308 = vmul.f32 %v262, %v279
      %v309 = vmul.f32 %v263, %v279
      %v310 = vmul.f32 %v264, %v279
      %v311 = vmul.f32 %v265, %v279
      %v312 = vmul.f32 %v266, %v279
      %v313 = vmul.f32 %v267, %v279
      %v314 = vmul.f32 %v268, %v279
      %v315 = vmul.f32 %v271, %v279
      %v316 = vmul.f32 %v272, %v279
      %v318 = vlaneseq
      %v319 = vshrl.u32 %v318, 7
      %v320 = vsub.s32 0, %v319
      %v321 = vrot.slane %v274, %v320
      %v323 = vadd.f32 %v281, %v321
      %v324 = vadd.f32 %v282, %v321
      %v325 = vadd.f32 %v283, %v321
      %v326 = vadd.f32 %v284, %v321
      %v327 = vadd.f32 %v285, %v321
      %v328 = vadd.f32 %v286, %v321
      %v329 = vadd.f32 %v287, %v321
      %v330 = vadd.f32 %v288, %v321
      %v331 = vadd.f32 %v289, %v321
      %v332 = vadd.f32 %v290, %v321
      %v333 = vadd.f32 %v291, %v321
      %v334 = vadd.f32 %v292, %v321
      %v335 = vadd.f32 %v293, %v321
      %v336 = vadd.f32 %v294, %v321
      %v337 = vadd.f32 %v295, %v321
      %v338 = vadd.f32 %v296, %v321
      %v339 = vadd.f32 %v297, %v321
      %v340 = vadd.f32 %v298, %v321
      %v341 = vadd.f32 %v299, %v321
      %v342 = vadd.f32 %v300, %v321
      %v343 = vadd.f32 %v301, %v321
      %v344 = vadd.f32 %v302, %v321
      %v345 = vadd.f32 %v303, %v321
      %v346 = vadd.f32 %v304, %v321
      %v347 = vadd.f32 %v305, %v321
      %v348 = vadd.f32 %v306, %v321
      %v349 = vadd.f32 %v307, %v321
      %v350 = vadd.f32 %v308, %v321
      %v351 = vadd.f32 %v309, %v321
      %v352 = vadd.f32 %v310, %v321
      %v353 = vadd.f32 %v311, %v321
      %v354 = vadd.f32 %v312, %v321
      %v355 = vadd.f32 %v313, %v321
      %v356 = vadd.f32 %v314, %v321
      %v357 = vadd.f32 %v315, %v321
      %v358 = vadd.f32 %v316, %v321
      %v359 = vmax.f32 %v323, 0.0
      %v360 = vmax.f32 %v324, 0.0
      %v361 = vmax.f32 %v325, 0.0
      %v362 = vmax.f32 %v326, 0.0
      %v363 = vmax.f32 %v327, 0.0
      %v364 = vmax.f32 %v328, 0.0
      %v365 = vmax.f32 %v329, 0.0
      %v366 = vmax.f32 %v330, 0.0
      %v367 = vmax.f32 %v331, 0.0
      %v368 = vmax.f32 %v332, 0.0
      %v369 = vmax.f32 %v333, 0.0
      %v370 = vmax.f32 %v334, 0.0
      %v371 = vmax.f32 %v335, 0.0
      %v372 = vmax.f32 %v336, 0.0
      %v373 = vmax.f32 %v337, 0.0
      %v374 = vmax.f32 %v338, 0.0
      %v375 = vmax.f32 %v339, 0.0
      %v376 = vmax.f32 %v340, 0.0
      %v377 = vmax.f32 %v341, 0.0
      %v378 = vmax.f32 %v342, 0.0
      %v379 = vmax.f32 %v343, 0.0
      %v380 = vmax.f32 %v344, 0.0
      %v381 = vmax.f32 %v345, 0.0
      %v382 = vmax.f32 %v346, 0.0
      %v383 = vmax.f32 %v347, 0.0
      %v384 = vmax.f32 %v348, 0.0
      %v385 = vmax.f32 %v349, 0.0
      %v386 = vmax.f32 %v350, 0.0
      %v387 = vmax.f32 %v351, 0.0
      %v388 = vmax.f32 %v352, 0.0
      %v389 = vmax.f32 %v353, 0.0
      %v390 = vmax.f32 %v354, 0.0
      %v391 = vmax.f32 %v355, 0.0
      %v392 = vmax.f32 %v356, 0.0
      %v393 = vmax.f32 %v357, 0.0
      %v394 = vmax.f32 %v358, 0.0
      %v395 = vstv %s225
      %v396 = vadd.s32 %v395, 1
      %v397 = vadd.s32 %v395, 2
      %v398 = vadd.s32 %v395, 3
      %v399 = vadd.s32 %v395, 4
      %v400 = vadd.s32 %v395, 5
      %v401 = vadd.s32 %v395, 6
      %v402 = vadd.s32 %v395, 7
      %v403 = vadd.s32 %v395, 8
      %v404 = vadd.s32 %v395, 9
      %v405 = vadd.s32 %v395, 10
      %v406 = vadd.s32 %v395, 11
      %v407 = vadd.s32 %v395, 12
      %v408 = vadd.s32 %v395, 13
      %v409 = vadd.s32 %v395, 14
      %v410 = vadd.s32 %v395, 15
      %v411 = vadd.s32 %v395, 16
      %v412 = vadd.s32 %v395, 17
      %vm413 = vcmp.ge.s32.totalorder %v395, 0
      %vm414 = vcmp.ge.s32.totalorder %v396, 0
      %vm415 = vcmp.ge.s32.totalorder %v397, 0
      %vm416 = vcmp.ge.s32.totalorder %v398, 0
      %vm417 = vcmp.ge.s32.totalorder %v399, 0
      %vm418 = vcmp.ge.s32.totalorder %v400, 0
      %vm419 = vcmp.ge.s32.totalorder %v401, 0
      %vm420 = vcmp.ge.s32.totalorder %v402, 0
      %vm421 = vcmp.ge.s32.totalorder %v403, 0
      %vm422 = vcmp.ge.s32.totalorder %v404, 0
      %vm423 = vcmp.ge.s32.totalorder %v405, 0
      %vm424 = vcmp.ge.s32.totalorder %v406, 0
      %vm425 = vcmp.ge.s32.totalorder %v407, 0
      %vm426 = vcmp.ge.s32.totalorder %v408, 0
      %vm427 = vcmp.ge.s32.totalorder %v409, 0
      %vm428 = vcmp.ge.s32.totalorder %v410, 0
      %vm429 = vcmp.ge.s32.totalorder %v411, 0
      %vm430 = vcmp.ge.s32.totalorder %v412, 0
      %vm431 = vcmp.lt.s32.totalorder %v395, 16
      %vm432 = vcmp.lt.s32.totalorder %v396, 16
      %vm433 = vcmp.lt.s32.totalorder %v397, 16
      %vm434 = vcmp.lt.s32.totalorder %v398, 16
      %vm435 = vcmp.lt.s32.totalorder %v399, 16
      %vm436 = vcmp.lt.s32.totalorder %v400, 16
      %vm437 = vcmp.lt.s32.totalorder %v401, 16
      %vm438 = vcmp.lt.s32.totalorder %v402, 16
      %vm439 = vcmp.lt.s32.totalorder %v403, 16
      %vm440 = vcmp.lt.s32.totalorder %v404, 16
      %vm441 = vcmp.lt.s32.totalorder %v405, 16
      %vm442 = vcmp.lt.s32.totalorder %v406, 16
      %vm443 = vcmp.lt.s32.totalorder %v407, 16
      %vm444 = vcmp.lt.s32.totalorder %v408, 16
      %vm445 = vcmp.lt.s32.totalorder %v409, 16
      %vm446 = vcmp.lt.s32.totalorder %v410, 16
      %vm447 = vcmp.lt.s32.totalorder %v411, 16
      %vm448 = vcmp.lt.s32.totalorder %v412, 16
      %vm449 = vmand %vm413, %vm431
      %vm450 = vmand %vm414, %vm432
      %vm451 = vmand %vm415, %vm433
      %vm452 = vmand %vm416, %vm434
      %vm453 = vmand %vm417, %vm435
      %vm454 = vmand %vm418, %vm436
      %vm455 = vmand %vm419, %vm437
      %vm456 = vmand %vm420, %vm438
      %vm457 = vmand %vm421, %vm439
      %vm458 = vmand %vm422, %vm440
      %vm459 = vmand %vm423, %vm441
      %vm460 = vmand %vm424, %vm442
      %vm461 = vmand %vm425, %vm443
      %vm462 = vmand %vm426, %vm444
      %vm463 = vmand %vm427, %vm445
      %vm464 = vmand %vm428, %vm446
      %vm465 = vmand %vm429, %vm447
      %vm466 = vmand %vm430, %vm448
      %v467 = vsel %vm449, 1, 0
      %v468 = vsel %vm450, 1, 0
      %v469 = vsel %vm451, 1, 0
      %v470 = vsel %vm452, 1, 0
      %v471 = vsel %vm453, 1, 0
      %v472 = vsel %vm454, 1, 0
      %v473 = vsel %vm455, 1, 0
      %v474 = vsel %vm456, 1, 0
      %v475 = vsel %vm457, 1, 0
      %v476 = vsel %vm458, 1, 0
      %v477 = vsel %vm459, 1, 0
      %v478 = vsel %vm460, 1, 0
      %v479 = vsel %vm461, 1, 0
      %v480 = vsel %vm462, 1, 0
      %v481 = vsel %vm463, 1, 0
      %v482 = vsel %vm464, 1, 0
      %v483 = vsel %vm465, 1, 0
      %v484 = vsel %vm466, 1, 0
      %vm485 = vcmp.eq.s32.totalorder %v467, 1
      %vm486 = vcmp.eq.s32.totalorder %v468, 1
      %vm487 = vcmp.eq.s32.totalorder %v469, 1
      %vm488 = vcmp.eq.s32.totalorder %v470, 1
      %vm489 = vcmp.eq.s32.totalorder %v471, 1
      %vm490 = vcmp.eq.s32.totalorder %v472, 1
      %vm491 = vcmp.eq.s32.totalorder %v473, 1
      %vm492 = vcmp.eq.s32.totalorder %v474, 1
      %vm493 = vcmp.eq.s32.totalorder %v475, 1
      %vm494 = vcmp.eq.s32.totalorder %v476, 1
      %vm495 = vcmp.eq.s32.totalorder %v477, 1
      %vm496 = vcmp.eq.s32.totalorder %v478, 1
      %vm497 = vcmp.eq.s32.totalorder %v479, 1
      %vm498 = vcmp.eq.s32.totalorder %v480, 1
      %vm499 = vcmp.eq.s32.totalorder %v481, 1
      %vm500 = vcmp.eq.s32.totalorder %v482, 1
      %vm501 = vcmp.eq.s32.totalorder %v483, 1
      %vm502 = vcmp.eq.s32.totalorder %v484, 1
      %v503 = vsel %vm485, %v359, 0.0
      %v504 = vsel %vm485, %v360, 0.0
      %v505 = vsel %vm486, %v361, 0.0
      %v506 = vsel %vm486, %v362, 0.0
      %v507 = vsel %vm487, %v363, 0.0
      %v508 = vsel %vm487, %v364, 0.0
      %v509 = vsel %vm488, %v365, 0.0
      %v510 = vsel %vm488, %v366, 0.0
      %v511 = vsel %vm489, %v367, 0.0
      %v512 = vsel %vm489, %v368, 0.0
      %v513 = vsel %vm490, %v369, 0.0
      %v514 = vsel %vm490, %v370, 0.0
      %v515 = vsel %vm491, %v371, 0.0
      %v516 = vsel %vm491, %v372, 0.0
      %v517 = vsel %vm492, %v373, 0.0
      %v518 = vsel %vm492, %v374, 0.0
      %v519 = vsel %vm493, %v375, 0.0
      %v520 = vsel %vm493, %v376, 0.0
      %v521 = vsel %vm494, %v377, 0.0
      %v522 = vsel %vm494, %v378, 0.0
      %v523 = vsel %vm495, %v379, 0.0
      %v524 = vsel %vm495, %v380, 0.0
      %v525 = vsel %vm496, %v381, 0.0
      %v526 = vsel %vm496, %v382, 0.0
      %v527 = vsel %vm497, %v383, 0.0
      %v528 = vsel %vm497, %v384, 0.0
      %v529 = vsel %vm498, %v385, 0.0
      %v530 = vsel %vm498, %v386, 0.0
      %v531 = vsel %vm499, %v387, 0.0
      %v532 = vsel %vm499, %v388, 0.0
      %v533 = vsel %vm500, %v389, 0.0
      %v534 = vsel %vm500, %v390, 0.0
      %v535 = vsel %vm501, %v391, 0.0
      %v536 = vsel %vm501, %v392, 0.0
      %v537 = vsel %vm502, %v393, 0.0
      %v538 = vsel %vm502, %v394, 0.0
      %vm539 = vcmask 24576
      %vm540 = vsmask.f32 256
      %vm541 = vmand %vm539, %vm540
      %v542 = vld [vmem:[#allocation2] sm:$0x1]
      %v543 = vsel %vm541, 0, %v542
      %544 = vst [vmem:[#allocation2] sm:$0x1] %v543
      %v545 = vld [vmem:[#allocation2 + $0xc] sm:$0x1]
      %v546 = vsel %vm541, 0, %v545
      %547 = vst [vmem:[#allocation2 + $0xc] sm:$0x1] %v546
      %v548 = vld [vmem:[#allocation2 + $0x18] sm:$0x1]
      %v549 = vsel %vm541, 0, %v548
      %550 = vst [vmem:[#allocation2 + $0x18] sm:$0x1] %v549
      %v551 = vld [vmem:[#allocation2 + $0x24] sm:$0x1]
      %v552 = vsel %vm541, 0, %v551
      %553 = vst [vmem:[#allocation2 + $0x24] sm:$0x1] %v552
      %v554 = vld [vmem:[#allocation2 + $0x30] sm:$0x1]
      %v555 = vsel %vm541, 0, %v554
      %556 = vst [vmem:[#allocation2 + $0x30] sm:$0x1] %v555
      %v557 = vld [vmem:[#allocation2 + $0x3c] sm:$0x1]
      %v558 = vsel %vm541, 0, %v557
      %559 = vst [vmem:[#allocation2 + $0x3c] sm:$0x1] %v558
      %v560 = vld [vmem:[#allocation2 + $0x48] sm:$0x1]
      %v561 = vsel %vm541, 0, %v560
      %562 = vst [vmem:[#allocation2 + $0x48] sm:$0x1] %v561
      %v563 = vld [vmem:[#allocation2 + $0x54] sm:$0x1]
      %v564 = vsel %vm541, 0, %v563
      %565 = vst [vmem:[#allocation2 + $0x54] sm:$0x1] %v564
      %v566 = vld [vmem:[#allocation2 + $0x60] sm:$0x1]
      %v567 = vsel %vm541, 0, %v566
      %568 = vst [vmem:[#allocation2 + $0x60] sm:$0x1] %v567
      %v569 = vld [vmem:[#allocation2 + $0x6c] sm:$0x1]
      %v570 = vsel %vm541, 0, %v569
      %571 = vst [vmem:[#allocation2 + $0x6c] sm:$0x1] %v570
      %v572 = vld [vmem:[#allocation2 + $0x78] sm:$0x1]
      %v573 = vsel %vm541, 0, %v572
      %574 = vst [vmem:[#allocation2 + $0x78] sm:$0x1] %v573
      %v575 = vld [vmem:[#allocation2 + $0x84] sm:$0x1]
      %v576 = vsel %vm541, 0, %v575
      %577 = vst [vmem:[#allocation2 + $0x84] sm:$0x1] %v576
      %v578 = vld [vmem:[#allocation2 + $0x90] sm:$0x1]
      %v579 = vsel %vm541, 0, %v578
      %580 = vst [vmem:[#allocation2 + $0x90] sm:$0x1] %v579
      %v581 = vld [vmem:[#allocation2 + $0x9c] sm:$0x1]
      %v582 = vsel %vm541, 0, %v581
      %583 = vst [vmem:[#allocation2 + $0x9c] sm:$0x1] %v582
      %v584 = vld [vmem:[#allocation2 + $0xa8] sm:$0x1]
      %v585 = vsel %vm541, 0, %v584
      %586 = vst [vmem:[#allocation2 + $0xa8] sm:$0x1] %v585
      %v587 = vld [vmem:[#allocation2 + $0xb4] sm:$0x1]
      %v588 = vsel %vm541, 0, %v587
      %589 = vst [vmem:[#allocation2 + $0xb4] sm:$0x1] %v588
      %v590 = vld [vmem:[#allocation2 + $0xc0] sm:$0x1]
      %v591 = vsel %vm541, 0, %v590
      %592 = vst [vmem:[#allocation2 + $0xc0] sm:$0x1] %v591
      %v593 = vld [vmem:[#allocation2 + $0xcc] sm:$0x1]
      %v594 = vsel %vm541, 0, %v593
      %595 = vst [vmem:[#allocation2 + $0xcc] sm:$0x1] %v594
      %vm596 = vcmask 27648
      %vm597 = vsmask.f32 7938
      %vm598 = vmand %vm596, %vm597
      %v599 = vld [vmem:[#allocation2 + $0x8] sm:$0xf]
      %v600 = vsel %vm598, 0, %v599
      %601 = vst [vmem:[#allocation2 + $0x8] sm:$0xf] %v600
      %v602 = vld [vmem:[#allocation2 + $0x14] sm:$0xf]
      %v603 = vsel %vm598, 0, %v602
      %604 = vst [vmem:[#allocation2 + $0x14] sm:$0xf] %v603
      %v605 = vld [vmem:[#allocation2 + $0x20] sm:$0xf]
      %v606 = vsel %vm598, 0, %v605
      %607 = vst [vmem:[#allocation2 + $0x20] sm:$0xf] %v606
      %v608 = vld [vmem:[#allocation2 + $0x2c] sm:$0xf]
      %v609 = vsel %vm598, 0, %v608
      %610 = vst [vmem:[#allocation2 + $0x2c] sm:$0xf] %v609
      %v611 = vld [vmem:[#allocation2 + $0x38] sm:$0xf]
      %v612 = vsel %vm598, 0, %v611
      %613 = vst [vmem:[#allocation2 + $0x38] sm:$0xf] %v612
      %v614 = vld [vmem:[#allocation2 + $0x44] sm:$0xf]
      %v615 = vsel %vm598, 0, %v614
      %616 = vst [vmem:[#allocation2 + $0x44] sm:$0xf] %v615
      %v617 = vld [vmem:[#allocation2 + $0x50] sm:$0xf]
      %v618 = vsel %vm598, 0, %v617
      %619 = vst [vmem:[#allocation2 + $0x50] sm:$0xf] %v618
      %v620 = vld [vmem:[#allocation2 + $0x5c] sm:$0xf]
      %v621 = vsel %vm598, 0, %v620
      %622 = vst [vmem:[#allocation2 + $0x5c] sm:$0xf] %v621
      %v623 = vld [vmem:[#allocation2 + $0x68] sm:$0xf]
      %v624 = vsel %vm598, 0, %v623
      %625 = vst [vmem:[#allocation2 + $0x68] sm:$0xf] %v624
      %v626 = vld [vmem:[#allocation2 + $0x74] sm:$0xf]
      %v627 = vsel %vm598, 0, %v626
      %628 = vst [vmem:[#allocation2 + $0x74] sm:$0xf] %v627
      %v629 = vld [vmem:[#allocation2 + $0x80] sm:$0xf]
      %v630 = vsel %vm598, 0, %v629
      %631 = vst [vmem:[#allocation2 + $0x80] sm:$0xf] %v630
      %v632 = vld [vmem:[#allocation2 + $0x8c] sm:$0xf]
      %v633 = vsel %vm598, 0, %v632
      %634 = vst [vmem:[#allocation2 + $0x8c] sm:$0xf] %v633
      %v635 = vld [vmem:[#allocation2 + $0x98] sm:$0xf]
      %v636 = vsel %vm598, 0, %v635
      %637 = vst [vmem:[#allocation2 + $0x98] sm:$0xf] %v636
      %v638 = vld [vmem:[#allocation2 + $0xa4] sm:$0xf]
      %v639 = vsel %vm598, 0, %v638
      %640 = vst [vmem:[#allocation2 + $0xa4] sm:$0xf] %v639
      %v641 = vld [vmem:[#allocation2 + $0xb0] sm:$0xf]
      %v642 = vsel %vm598, 0, %v641
      %643 = vst [vmem:[#allocation2 + $0xb0] sm:$0xf] %v642
      %v644 = vld [vmem:[#allocation2 + $0xbc] sm:$0xf]
      %v645 = vsel %vm598, 0, %v644
      %646 = vst [vmem:[#allocation2 + $0xbc] sm:$0xf] %v645
      %v647 = vld [vmem:[#allocation2 + $0xc8] sm:$0xf]
      %v648 = vsel %vm598, 0, %v647
      %649 = vst [vmem:[#allocation2 + $0xc8] sm:$0xf] %v648
      %v650 = vld [vmem:[#allocation2 + $0xd4] sm:$0xf]
      %v651 = vsel %vm598, 0, %v650
      %652 = vst [vmem:[#allocation2 + $0xd4] sm:$0xf] %v651
      %v653 = vpack.c.bf16 %v504, %v503
      %v654 = vpack.c.bf16 %v506, %v505
      %v655 = vpack.c.bf16 %v508, %v507
      %v656 = vpack.c.bf16 %v510, %v509
      %v657 = vpack.c.bf16 %v512, %v511
      %v658 = vpack.c.bf16 %v514, %v513
      %v659 = vpack.c.bf16 %v516, %v515
      %v660 = vpack.c.bf16 %v518, %v517
      %v661 = vpack.c.bf16 %v520, %v519
      %v662 = vpack.c.bf16 %v522, %v521
      %v663 = vpack.c.bf16 %v524, %v523
      %v664 = vpack.c.bf16 %v526, %v525
      %v665 = vpack.c.bf16 %v528, %v527
      %v666 = vpack.c.bf16 %v530, %v529
      %v667 = vpack.c.bf16 %v532, %v531
      %v668 = vpack.c.bf16 %v534, %v533
      %v669 = vpack.c.bf16 %v536, %v535
      %v670 = vpack.c.bf16 %v538, %v537
      %v689 = vunpack.c.l.b16 %v653
      %v690 = vunpack.c.h.b16 %v653
      %v691 = vunpack.c.l.b16 %v654
      %v692 = vunpack.c.h.b16 %v654
      %v693 = vunpack.c.l.b16 %v655
      %v694 = vunpack.c.h.b16 %v655
      %v695 = vunpack.c.l.b16 %v656
      %v696 = vunpack.c.h.b16 %v656
      %v697 = vunpack.c.l.b16 %v657
      %v698 = vunpack.c.h.b16 %v657
      %v699 = vunpack.c.l.b16 %v658
      %v700 = vunpack.c.h.b16 %v658
      %v701 = vunpack.c.l.b16 %v659
      %v702 = vunpack.c.h.b16 %v659
      %v703 = vunpack.c.l.b16 %v660
      %v704 = vunpack.c.h.b16 %v660
      %v705 = vunpack.c.l.b16 %v661
      %v706 = vunpack.c.h.b16 %v661
      %v707 = vunpack.c.l.b16 %v662
      %v708 = vunpack.c.h.b16 %v662
      %v709 = vunpack.c.l.b16 %v663
      %v710 = vunpack.c.h.b16 %v663
      %v711 = vunpack.c.l.b16 %v664
      %v712 = vunpack.c.h.b16 %v664
      %v713 = vunpack.c.l.b16 %v665
      %v714 = vunpack.c.h.b16 %v665
      %v715 = vunpack.c.l.b16 %v666
      %v716 = vunpack.c.h.b16 %v666
      %v717 = vunpack.c.l.b16 %v667
      %v718 = vunpack.c.h.b16 %v667
      %v719 = vunpack.c.l.b16 %v668
      %v720 = vunpack.c.h.b16 %v668
      %v721 = vunpack.c.l.b16 %v669
      %v722 = vunpack.c.h.b16 %v669
      %v723 = vunpack.c.l.b16 %v670
      %v724 = vunpack.c.h.b16 %v670
      %v725 = vpack.c.b16 %v689, %v689
      %v726 = vpack.c.b16 %v690, %v690
      %v727 = vpack.c.b16 %v691, %v691
      %v728 = vpack.c.b16 %v692, %v692
      %v729 = vpack.c.b16 %v693, %v693
      %v730 = vpack.c.b16 %v694, %v694
      %v731 = vpack.c.b16 %v695, %v695
      %v732 = vpack.c.b16 %v696, %v696
      %v733 = vpack.c.b16 %v697, %v697
      %v734 = vpack.c.b16 %v698, %v698
      %v735 = vpack.c.b16 %v699, %v699
      %v736 = vpack.c.b16 %v700, %v700
      %v737 = vpack.c.b16 %v701, %v701
      %v738 = vpack.c.b16 %v702, %v702
      %v739 = vpack.c.b16 %v703, %v703
      %v740 = vpack.c.b16 %v704, %v704
      %v741 = vpack.c.b16 %v705, %v705
      %v742 = vpack.c.b16 %v706, %v706
      %v743 = vpack.c.b16 %v707, %v707
      %v744 = vpack.c.b16 %v708, %v708
      %v745 = vpack.c.b16 %v709, %v709
      %v746 = vpack.c.b16 %v710, %v710
      %v747 = vpack.c.b16 %v711, %v711
      %v748 = vpack.c.b16 %v712, %v712
      %v749 = vpack.c.b16 %v713, %v713
      %v750 = vpack.c.b16 %v714, %v714
      %v751 = vpack.c.b16 %v715, %v715
      %v752 = vpack.c.b16 %v716, %v716
      %v753 = vpack.c.b16 %v717, %v717
      %v754 = vpack.c.b16 %v718, %v718
      %v755 = vpack.c.b16 %v719, %v719
      %v756 = vpack.c.b16 %v720, %v720
      %v757 = vpack.c.b16 %v721, %v721
      %v758 = vpack.c.b16 %v722, %v722
      %v759 = vpack.c.b16 %v723, %v723
      %v760 = vpack.c.b16 %v724, %v724
      %vm761 = vsmask.f32 4368
      %vm762 = vmor %vm540, %vm761
      %v764 = vshrl.u32 %v725, 16
      %v766 = vrot.slane %v764, 7
      %v767 = vshll.u32 %v725, 16
      %v769 = vor.u32 %v766, %v767
      %v770 = vrot.slane %v766, 4
      %v772 = vshrl.u32 %v726, 16
      %v774 = vrot.slane %v772, 7
      %v775 = vshll.u32 %v726, 16
      %v777 = vor.u32 %v774, %v775
      %v778 = vsel %vm762, %v770, %v777
      %v779 = vrot.slane %v774, 4
      %v781 = vshrl.u32 %v727, 16
      %v783 = vrot.slane %v781, 7
      %v784 = vshll.u32 %v727, 16
      %v786 = vor.u32 %v783, %v784
      %v787 = vrot.slane %v783, 4
      %v789 = vshrl.u32 %v728, 16
      %v791 = vrot.slane %v789, 7
      %v792 = vshll.u32 %v728, 16
      %v794 = vor.u32 %v791, %v792
      %v795 = vsel %vm762, %v787, %v794
      %v796 = vrot.slane %v791, 4
      %v798 = vshrl.u32 %v729, 16
      %v800 = vrot.slane %v798, 7
      %v801 = vshll.u32 %v729, 16
      %v803 = vor.u32 %v800, %v801
      %v804 = vrot.slane %v800, 4
      %v806 = vshrl.u32 %v730, 16
      %v808 = vrot.slane %v806, 7
      %v809 = vshll.u32 %v730, 16
      %v811 = vor.u32 %v808, %v809
      %v812 = vsel %vm762, %v804, %v811
      %v813 = vrot.slane %v808, 4
      %v815 = vshrl.u32 %v731, 16
      %v817 = vrot.slane %v815, 7
      %v818 = vshll.u32 %v731, 16
      %v820 = vor.u32 %v817, %v818
      %v821 = vrot.slane %v817, 4
      %v823 = vshrl.u32 %v732, 16
      %v825 = vrot.slane %v823, 7
      %v826 = vshll.u32 %v732, 16
      %v828 = vor.u32 %v825, %v826
      %v829 = vsel %vm762, %v821, %v828
      %v830 = vrot.slane %v825, 4
      %v832 = vshrl.u32 %v733, 16
      %v834 = vrot.slane %v832, 7
      %v835 = vshll.u32 %v733, 16
      %v837 = vor.u32 %v834, %v835
      %v838 = vrot.slane %v834, 4
      %v840 = vshrl.u32 %v734, 16
      %v842 = vrot.slane %v840, 7
      %v843 = vshll.u32 %v734, 16
      %v845 = vor.u32 %v842, %v843
      %v846 = vsel %vm762, %v838, %v845
      %v847 = vrot.slane %v842, 4
      %v849 = vshrl.u32 %v735, 16
      %v851 = vrot.slane %v849, 7
      %v852 = vshll.u32 %v735, 16
      %v854 = vor.u32 %v851, %v852
      %v855 = vrot.slane %v851, 4
      %v857 = vshrl.u32 %v736, 16
      %v859 = vrot.slane %v857, 7
      %v860 = vshll.u32 %v736, 16
      %v862 = vor.u32 %v859, %v860
      %v863 = vsel %vm762, %v855, %v862
      %v864 = vrot.slane %v859, 4
      %v866 = vshrl.u32 %v737, 16
      %v868 = vrot.slane %v866, 7
      %v869 = vshll.u32 %v737, 16
      %v871 = vor.u32 %v868, %v869
      %v872 = vrot.slane %v868, 4
      %v874 = vshrl.u32 %v738, 16
      %v876 = vrot.slane %v874, 7
      %v877 = vshll.u32 %v738, 16
      %v879 = vor.u32 %v876, %v877
      %v880 = vsel %vm762, %v872, %v879
      %v881 = vrot.slane %v876, 4
      %v883 = vshrl.u32 %v739, 16
      %v885 = vrot.slane %v883, 7
      %v886 = vshll.u32 %v739, 16
      %v888 = vor.u32 %v885, %v886
      %v889 = vrot.slane %v885, 4
      %v891 = vshrl.u32 %v740, 16
      %v893 = vrot.slane %v891, 7
      %v894 = vshll.u32 %v740, 16
      %v896 = vor.u32 %v893, %v894
      %v897 = vsel %vm762, %v889, %v896
      %v898 = vrot.slane %v893, 4
      %v900 = vshrl.u32 %v741, 16
      %v902 = vrot.slane %v900, 7
      %v903 = vshll.u32 %v741, 16
      %v905 = vor.u32 %v902, %v903
      %v906 = vrot.slane %v902, 4
      %v908 = vshrl.u32 %v742, 16
      %v910 = vrot.slane %v908, 7
      %v911 = vshll.u32 %v742, 16
      %v913 = vor.u32 %v910, %v911
      %v914 = vsel %vm762, %v906, %v913
      %v915 = vrot.slane %v910, 4
      %v917 = vshrl.u32 %v743, 16
      %v919 = vrot.slane %v917, 7
      %v920 = vshll.u32 %v743, 16
      %v922 = vor.u32 %v919, %v920
      %v923 = vrot.slane %v919, 4
      %v925 = vshrl.u32 %v744, 16
      %v927 = vrot.slane %v925, 7
      %v928 = vshll.u32 %v744, 16
      %v930 = vor.u32 %v927, %v928
      %v931 = vsel %vm762, %v923, %v930
      %v932 = vrot.slane %v927, 4
      %v934 = vshrl.u32 %v745, 16
      %v936 = vrot.slane %v934, 7
      %v937 = vshll.u32 %v745, 16
      %v939 = vor.u32 %v936, %v937
      %v940 = vrot.slane %v936, 4
      %v942 = vshrl.u32 %v746, 16
      %v944 = vrot.slane %v942, 7
      %v945 = vshll.u32 %v746, 16
      %v947 = vor.u32 %v944, %v945
      %v948 = vsel %vm762, %v940, %v947
      %v949 = vrot.slane %v944, 4
      %v951 = vshrl.u32 %v747, 16
      %v953 = vrot.slane %v951, 7
      %v954 = vshll.u32 %v747, 16
      %v956 = vor.u32 %v953, %v954
      %v957 = vrot.slane %v953, 4
      %v959 = vshrl.u32 %v748, 16
      %v961 = vrot.slane %v959, 7
      %v962 = vshll.u32 %v748, 16
      %v964 = vor.u32 %v961, %v962
      %v965 = vsel %vm762, %v957, %v964
      %v966 = vrot.slane %v961, 4
      %v968 = vshrl.u32 %v749, 16
      %v970 = vrot.slane %v968, 7
      %v971 = vshll.u32 %v749, 16
      %v973 = vor.u32 %v970, %v971
      %v974 = vrot.slane %v970, 4
      %v976 = vshrl.u32 %v750, 16
      %v978 = vrot.slane %v976, 7
      %v979 = vshll.u32 %v750, 16
      %v981 = vor.u32 %v978, %v979
      %v982 = vsel %vm762, %v974, %v981
      %v983 = vrot.slane %v978, 4
      %v985 = vshrl.u32 %v751, 16
      %v987 = vrot.slane %v985, 7
      %v988 = vshll.u32 %v751, 16
      %v990 = vor.u32 %v987, %v988
      %v991 = vrot.slane %v987, 4
      %v993 = vshrl.u32 %v752, 16
      %v995 = vrot.slane %v993, 7
      %v996 = vshll.u32 %v752, 16
      %v998 = vor.u32 %v995, %v996
      %v999 = vsel %vm762, %v991, %v998
      %v1000 = vrot.slane %v995, 4
      %v1002 = vshrl.u32 %v753, 16
      %v1004 = vrot.slane %v1002, 7
      %v1005 = vshll.u32 %v753, 16
      %v1007 = vor.u32 %v1004, %v1005
      %v1008 = vrot.slane %v1004, 4
      %v1010 = vshrl.u32 %v754, 16
      %v1012 = vrot.slane %v1010, 7
      %v1013 = vshll.u32 %v754, 16
      %v1015 = vor.u32 %v1012, %v1013
      %v1016 = vsel %vm762, %v1008, %v1015
      %v1017 = vrot.slane %v1012, 4
      %v1019 = vshrl.u32 %v755, 16
      %v1021 = vrot.slane %v1019, 7
      %v1022 = vshll.u32 %v755, 16
      %v1024 = vor.u32 %v1021, %v1022
      %v1025 = vrot.slane %v1021, 4
      %v1027 = vshrl.u32 %v756, 16
      %v1029 = vrot.slane %v1027, 7
      %v1030 = vshll.u32 %v756, 16
      %v1032 = vor.u32 %v1029, %v1030
      %v1033 = vsel %vm762, %v1025, %v1032
      %v1034 = vrot.slane %v1029, 4
      %v1036 = vshrl.u32 %v757, 16
      %v1038 = vrot.slane %v1036, 7
      %v1039 = vshll.u32 %v757, 16
      %v1041 = vor.u32 %v1038, %v1039
      %v1042 = vrot.slane %v1038, 4
      %v1044 = vshrl.u32 %v758, 16
      %v1046 = vrot.slane %v1044, 7
      %v1047 = vshll.u32 %v758, 16
      %v1049 = vor.u32 %v1046, %v1047
      %v1050 = vsel %vm762, %v1042, %v1049
      %v1051 = vrot.slane %v1046, 4
      %v1053 = vshrl.u32 %v759, 16
      %v1055 = vrot.slane %v1053, 7
      %v1056 = vshll.u32 %v759, 16
      %v1058 = vor.u32 %v1055, %v1056
      %v1059 = vrot.slane %v1055, 4
      %v1061 = vshrl.u32 %v760, 16
      %v1063 = vrot.slane %v1061, 7
      %v1064 = vshll.u32 %v760, 16
      %v1066 = vor.u32 %v1063, %v1064
      %v1067 = vsel %vm762, %v1059, %v1066
      %v1068 = vrot.slane %v1063, 4
      %v1123 = vld [vmem:[#allocation2] sm:$0xf]
      %v1124 = vsel %vm598, %v769, %v1123
      %1125 = vst [vmem:[#allocation2] sm:$0xf] %v1124
      %vm1126 = vcmask 27648
      %1127 = vst.msk [vmem:[#allocation2 + $0x4] sm:$0xf] %vm1126, %v778
      %v1128 = vld [vmem:[#allocation2 + $0x8] sm:$0x1]
      %v1129 = vsel %vm541, %v779, %v1128
      %1130 = vst [vmem:[#allocation2 + $0x8] sm:$0x1] %v1129
      %v1131 = vld [vmem:[#allocation2 + $0xc] sm:$0xf]
      %v1132 = vsel %vm598, %v786, %v1131
      %1133 = vst [vmem:[#allocation2 + $0xc] sm:$0xf] %v1132
      %1134 = vst.msk [vmem:[#allocation2 + $0x10] sm:$0xf] %vm1126, %v795
      %v1135 = vld [vmem:[#allocation2 + $0x14] sm:$0x1]
      %v1136 = vsel %vm541, %v796, %v1135
      %1137 = vst [vmem:[#allocation2 + $0x14] sm:$0x1] %v1136
      %v1138 = vld [vmem:[#allocation2 + $0x18] sm:$0xf]
      %v1139 = vsel %vm598, %v803, %v1138
      %1140 = vst [vmem:[#allocation2 + $0x18] sm:$0xf] %v1139
      %1141 = vst.msk [vmem:[#allocation2 + $0x1c] sm:$0xf] %vm1126, %v812
      %v1142 = vld [vmem:[#allocation2 + $0x20] sm:$0x1]
      %v1143 = vsel %vm541, %v813, %v1142
      %1144 = vst [vmem:[#allocation2 + $0x20] sm:$0x1] %v1143
      %v1145 = vld [vmem:[#allocation2 + $0x24] sm:$0xf]
      %v1146 = vsel %vm598, %v820, %v1145
      %1147 = vst [vmem:[#allocation2 + $0x24] sm:$0xf] %v1146
      %1148 = vst.msk [vmem:[#allocation2 + $0x28] sm:$0xf] %vm1126, %v829
      %v1149 = vld [vmem:[#allocation2 + $0x2c] sm:$0x1]
      %v1150 = vsel %vm541, %v830, %v1149
      %1151 = vst [vmem:[#allocation2 + $0x2c] sm:$0x1] %v1150
      %v1152 = vld [vmem:[#allocation2 + $0x30] sm:$0xf]
      %v1153 = vsel %vm598, %v837, %v1152
      %1154 = vst [vmem:[#allocation2 + $0x30] sm:$0xf] %v1153
      %1155 = vst.msk [vmem:[#allocation2 + $0x34] sm:$0xf] %vm1126, %v846
      %v1156 = vld [vmem:[#allocation2 + $0x38] sm:$0x1]
      %v1157 = vsel %vm541, %v847, %v1156
      %1158 = vst [vmem:[#allocation2 + $0x38] sm:$0x1] %v1157
      %v1159 = vld [vmem:[#allocation2 + $0x3c] sm:$0xf]
      %v1160 = vsel %vm598, %v854, %v1159
      %1161 = vst [vmem:[#allocation2 + $0x3c] sm:$0xf] %v1160
      %1162 = vst.msk [vmem:[#allocation2 + $0x40] sm:$0xf] %vm1126, %v863
      %v1163 = vld [vmem:[#allocation2 + $0x44] sm:$0x1]
      %v1164 = vsel %vm541, %v864, %v1163
      %1165 = vst [vmem:[#allocation2 + $0x44] sm:$0x1] %v1164
      %v1166 = vld [vmem:[#allocation2 + $0x48] sm:$0xf]
      %v1167 = vsel %vm598, %v871, %v1166
      %1168 = vst [vmem:[#allocation2 + $0x48] sm:$0xf] %v1167
      %1169 = vst.msk [vmem:[#allocation2 + $0x4c] sm:$0xf] %vm1126, %v880
      %v1170 = vld [vmem:[#allocation2 + $0x50] sm:$0x1]
      %v1171 = vsel %vm541, %v881, %v1170
      %1172 = vst [vmem:[#allocation2 + $0x50] sm:$0x1] %v1171
      %v1173 = vld [vmem:[#allocation2 + $0x54] sm:$0xf]
      %v1174 = vsel %vm598, %v888, %v1173
      %1175 = vst [vmem:[#allocation2 + $0x54] sm:$0xf] %v1174
      %1176 = vst.msk [vmem:[#allocation2 + $0x58] sm:$0xf] %vm1126, %v897
      %v1177 = vld [vmem:[#allocation2 + $0x5c] sm:$0x1]
      %v1178 = vsel %vm541, %v898, %v1177
      %1179 = vst [vmem:[#allocation2 + $0x5c] sm:$0x1] %v1178
      %v1180 = vld [vmem:[#allocation2 + $0x60] sm:$0xf]
      %v1181 = vsel %vm598, %v905, %v1180
      %1182 = vst [vmem:[#allocation2 + $0x60] sm:$0xf] %v1181
      %1183 = vst.msk [vmem:[#allocation2 + $0x64] sm:$0xf] %vm1126, %v914
      %v1184 = vld [vmem:[#allocation2 + $0x68] sm:$0x1]
      %v1185 = vsel %vm541, %v915, %v1184
      %1186 = vst [vmem:[#allocation2 + $0x68] sm:$0x1] %v1185
      %v1187 = vld [vmem:[#allocation2 + $0x6c] sm:$0xf]
      %v1188 = vsel %vm598, %v922, %v1187
      %1189 = vst [vmem:[#allocation2 + $0x6c] sm:$0xf] %v1188
      %1190 = vst.msk [vmem:[#allocation2 + $0x70] sm:$0xf] %vm1126, %v931
      %v1191 = vld [vmem:[#allocation2 + $0x74] sm:$0x1]
      %v1192 = vsel %vm541, %v932, %v1191
      %1193 = vst [vmem:[#allocation2 + $0x74] sm:$0x1] %v1192
      %v1194 = vld [vmem:[#allocation2 + $0x78] sm:$0xf]
      %v1195 = vsel %vm598, %v939, %v1194
      %1196 = vst [vmem:[#allocation2 + $0x78] sm:$0xf] %v1195
      %1197 = vst.msk [vmem:[#allocation2 + $0x7c] sm:$0xf] %vm1126, %v948
      %v1198 = vld [vmem:[#allocation2 + $0x80] sm:$0x1]
      %v1199 = vsel %vm541, %v949, %v1198
      %1200 = vst [vmem:[#allocation2 + $0x80] sm:$0x1] %v1199
      %v1201 = vld [vmem:[#allocation2 + $0x84] sm:$0xf]
      %v1202 = vsel %vm598, %v956, %v1201
      %1203 = vst [vmem:[#allocation2 + $0x84] sm:$0xf] %v1202
      %1204 = vst.msk [vmem:[#allocation2 + $0x88] sm:$0xf] %vm1126, %v965
      %v1205 = vld [vmem:[#allocation2 + $0x8c] sm:$0x1]
      %v1206 = vsel %vm541, %v966, %v1205
      %1207 = vst [vmem:[#allocation2 + $0x8c] sm:$0x1] %v1206
      %v1208 = vld [vmem:[#allocation2 + $0x90] sm:$0xf]
      %v1209 = vsel %vm598, %v973, %v1208
      %1210 = vst [vmem:[#allocation2 + $0x90] sm:$0xf] %v1209
      %1211 = vst.msk [vmem:[#allocation2 + $0x94] sm:$0xf] %vm1126, %v982
      %v1212 = vld [vmem:[#allocation2 + $0x98] sm:$0x1]
      %v1213 = vsel %vm541, %v983, %v1212
      %1214 = vst [vmem:[#allocation2 + $0x98] sm:$0x1] %v1213
      %v1215 = vld [vmem:[#allocation2 + $0x9c] sm:$0xf]
      %v1216 = vsel %vm598, %v990, %v1215
      %1217 = vst [vmem:[#allocation2 + $0x9c] sm:$0xf] %v1216
      %1218 = vst.msk [vmem:[#allocation2 + $0xa0] sm:$0xf] %vm1126, %v999
      %v1219 = vld [vmem:[#allocation2 + $0xa4] sm:$0x1]
      %v1220 = vsel %vm541, %v1000, %v1219
      %1221 = vst [vmem:[#allocation2 + $0xa4] sm:$0x1] %v1220
      %v1222 = vld [vmem:[#allocation2 + $0xa8] sm:$0xf]
      %v1223 = vsel %vm598, %v1007, %v1222
      %1224 = vst [vmem:[#allocation2 + $0xa8] sm:$0xf] %v1223
      %1225 = vst.msk [vmem:[#allocation2 + $0xac] sm:$0xf] %vm1126, %v1016
      %v1226 = vld [vmem:[#allocation2 + $0xb0] sm:$0x1]
      %v1227 = vsel %vm541, %v1017, %v1226
      %1228 = vst [vmem:[#allocation2 + $0xb0] sm:$0x1] %v1227
      %v1229 = vld [vmem:[#allocation2 + $0xb4] sm:$0xf]
      %v1230 = vsel %vm598, %v1024, %v1229
      %1231 = vst [vmem:[#allocation2 + $0xb4] sm:$0xf] %v1230
      %1232 = vst.msk [vmem:[#allocation2 + $0xb8] sm:$0xf] %vm1126, %v1033
      %v1233 = vld [vmem:[#allocation2 + $0xbc] sm:$0x1]
      %v1234 = vsel %vm541, %v1034, %v1233
      %1235 = vst [vmem:[#allocation2 + $0xbc] sm:$0x1] %v1234
      %v1236 = vld [vmem:[#allocation2 + $0xc0] sm:$0xf]
      %v1237 = vsel %vm598, %v1041, %v1236
      %1238 = vst [vmem:[#allocation2 + $0xc0] sm:$0xf] %v1237
      %1239 = vst.msk [vmem:[#allocation2 + $0xc4] sm:$0xf] %vm1126, %v1050
      %v1240 = vld [vmem:[#allocation2 + $0xc8] sm:$0x1]
      %v1241 = vsel %vm541, %v1051, %v1240
      %1242 = vst [vmem:[#allocation2 + $0xc8] sm:$0x1] %v1241
      %v1243 = vld [vmem:[#allocation2 + $0xcc] sm:$0xf]
      %v1244 = vsel %vm598, %v1058, %v1243
      %1245 = vst [vmem:[#allocation2 + $0xcc] sm:$0xf] %v1244
      %1246 = vst.msk [vmem:[#allocation2 + $0xd0] sm:$0xf] %vm1126, %v1067
      %v1247 = vld [vmem:[#allocation2 + $0xd4] sm:$0x1]
      %v1248 = vsel %vm541, %v1068, %v1247
      %1249 = vst [vmem:[#allocation2 + $0xd4] sm:$0x1] %v1248
      %v1250 = vld [vmem:[#allocation2] sm:$0xf]
      %v1251 = vld [vmem:[#allocation2 + $0x4] sm:$0xf]
      %v1252 = vld [vmem:[#allocation2 + $0xc] sm:$0xf]
      %v1253 = vld [vmem:[#allocation2 + $0x10] sm:$0xf]
      %v1254 = vld [vmem:[#allocation2 + $0x18] sm:$0xf]
      %v1255 = vld [vmem:[#allocation2 + $0x1c] sm:$0xf]
      %v1256 = vld [vmem:[#allocation2 + $0x24] sm:$0xf]
      %v1257 = vld [vmem:[#allocation2 + $0x28] sm:$0xf]
      %v1258 = vld [vmem:[#allocation2 + $0x30] sm:$0xf]
      %v1259 = vld [vmem:[#allocation2 + $0x34] sm:$0xf]
      %v1260 = vld [vmem:[#allocation2 + $0x3c] sm:$0xf]
      %v1261 = vld [vmem:[#allocation2 + $0x40] sm:$0xf]
      %v1262 = vld [vmem:[#allocation2 + $0x48] sm:$0xf]
      %v1263 = vld [vmem:[#allocation2 + $0x4c] sm:$0xf]
      %v1264 = vld [vmem:[#allocation2 + $0x54] sm:$0xf]
      %v1265 = vld [vmem:[#allocation2 + $0x58] sm:$0xf]
      %v1266 = vld [vmem:[#allocation2 + $0x60] sm:$0xf]
      %v1267 = vld [vmem:[#allocation2 + $0x64] sm:$0xf]
      %v1268 = vld [vmem:[#allocation2 + $0x6c] sm:$0xf]
      %v1269 = vld [vmem:[#allocation2 + $0x70] sm:$0xf]
      %v1270 = vld [vmem:[#allocation2 + $0x78] sm:$0xf]
      %v1271 = vld [vmem:[#allocation2 + $0x7c] sm:$0xf]
      %v1272 = vld [vmem:[#allocation2 + $0x84] sm:$0xf]
      %v1273 = vld [vmem:[#allocation2 + $0x88] sm:$0xf]
      %v1274 = vld [vmem:[#allocation2 + $0x90] sm:$0xf]
      %v1275 = vld [vmem:[#allocation2 + $0x94] sm:$0xf]
      %v1276 = vld [vmem:[#allocation2 + $0x9c] sm:$0xf]
      %v1277 = vld [vmem:[#allocation2 + $0xa0] sm:$0xf]
      %v1278 = vld [vmem:[#allocation2 + $0xa8] sm:$0xf]
      %v1279 = vld [vmem:[#allocation2 + $0xac] sm:$0xf]
      %v1280 = vld [vmem:[#allocation2 + $0xb4] sm:$0xf]
      %v1281 = vld [vmem:[#allocation2 + $0xb8] sm:$0xf]
      %v1282 = vld [vmem:[%s1] sm:$0x3]
      %v1283 = vld [vmem:[#allocation2 + $0x8] sm:$0x1]
      %v1284 = vld [vmem:[#allocation2 + $0x14] sm:$0x1]
      %v1285 = vld [vmem:[#allocation2 + $0x20] sm:$0x1]
      %v1286 = vld [vmem:[#allocation2 + $0x2c] sm:$0x1]
      %v1287 = vld [vmem:[#allocation2 + $0x38] sm:$0x1]
      %v1288 = vld [vmem:[#allocation2 + $0x44] sm:$0x1]
      %v1289 = vld [vmem:[#allocation2 + $0x50] sm:$0x1]
      %v1290 = vld [vmem:[#allocation2 + $0x5c] sm:$0x1]
      %v1291 = vld [vmem:[#allocation2 + $0x68] sm:$0x1]
      %v1292 = vld [vmem:[#allocation2 + $0x74] sm:$0x1]
      %v1293 = vld [vmem:[#allocation2 + $0x80] sm:$0x1]
      %v1294 = vld [vmem:[#allocation2 + $0x8c] sm:$0x1]
      %v1295 = vld [vmem:[#allocation2 + $0x98] sm:$0x1]
      %v1296 = vld [vmem:[#allocation2 + $0xa4] sm:$0x1]
      %v1297 = vld [vmem:[#allocation2 + $0xb0] sm:$0x1]
      %v1298 = vld [vmem:[#allocation2 + $0xbc] sm:$0x1]
      %vm1299 = vsmask.f32 3328
      %vm1300 = vsmask.f32 7440
      %vm1301 = vmor %vm1299, %vm1300
      %v1303 = vshrl.u32 %v1250, 16
      %v1305 = vrot.slane %v1303, 4
      %v1306 = vshll.u32 %v1250, 16
      %v1308 = vrot.slane %v1306, 5
      %v1309 = vor.u32 %v1305, %v1308
      %v1310 = vrot.slane %v1309, 4
      %v1312 = vshll.u32 %v1251, 16
      %v1314 = vrot.slane %v1312, 5
      %v1315 = vsel %vm1301, %v1310, %v1314
      %v1316 = vshrl.u32 %v1251, 16
      %v1318 = vrot.slane %v1316, 4
      %v1319 = vor.u32 %v1318, %v1314
      %v1320 = vrot.slane %v1319, 4
      %v1322 = vshll.u32 %v1283, 16
      %v1324 = vrot.slane %v1322, 5
      %v1325 = vsel %vm1301, %v1320, %v1324
      %v1327 = vshrl.u32 %v1252, 16
      %v1329 = vrot.slane %v1327, 4
      %v1330 = vshll.u32 %v1252, 16
      %v1332 = vrot.slane %v1330, 5
      %v1333 = vor.u32 %v1329, %v1332
      %v1334 = vrot.slane %v1333, 4
      %v1336 = vshll.u32 %v1253, 16
      %v1338 = vrot.slane %v1336, 5
      %v1339 = vsel %vm1301, %v1334, %v1338
      %v1340 = vshrl.u32 %v1253, 16
      %v1342 = vrot.slane %v1340, 4
      %v1343 = vor.u32 %v1342, %v1338
      %v1344 = vrot.slane %v1343, 4
      %v1346 = vshll.u32 %v1284, 16
      %v1348 = vrot.slane %v1346, 5
      %v1349 = vsel %vm1301, %v1344, %v1348
      %v1351 = vshrl.u32 %v1254, 16
      %v1353 = vrot.slane %v1351, 4
      %v1354 = vshll.u32 %v1254, 16
      %v1356 = vrot.slane %v1354, 5
      %v1357 = vor.u32 %v1353, %v1356
      %v1358 = vrot.slane %v1357, 4
      %v1360 = vshll.u32 %v1255, 16
      %v1362 = vrot.slane %v1360, 5
      %v1363 = vsel %vm1301, %v1358, %v1362
      %v1364 = vshrl.u32 %v1255, 16
      %v1366 = vrot.slane %v1364, 4
      %v1367 = vor.u32 %v1366, %v1362
      %v1368 = vrot.slane %v1367, 4
      %v1370 = vshll.u32 %v1285, 16
      %v1372 = vrot.slane %v1370, 5
      %v1373 = vsel %vm1301, %v1368, %v1372
      %v1375 = vshrl.u32 %v1256, 16
      %v1377 = vrot.slane %v1375, 4
      %v1378 = vshll.u32 %v1256, 16
      %v1380 = vrot.slane %v1378, 5
      %v1381 = vor.u32 %v1377, %v1380
      %v1382 = vrot.slane %v1381, 4
      %v1384 = vshll.u32 %v1257, 16
      %v1386 = vrot.slane %v1384, 5
      %v1387 = vsel %vm1301, %v1382, %v1386
      %v1388 = vshrl.u32 %v1257, 16
      %v1390 = vrot.slane %v1388, 4
      %v1391 = vor.u32 %v1390, %v1386
      %v1392 = vrot.slane %v1391, 4
      %v1394 = vshll.u32 %v1286, 16
      %v1396 = vrot.slane %v1394, 5
      %v1397 = vsel %vm1301, %v1392, %v1396
      %v1399 = vshrl.u32 %v1258, 16
      %v1401 = vrot.slane %v1399, 4
      %v1402 = vshll.u32 %v1258, 16
      %v1404 = vrot.slane %v1402, 5
      %v1405 = vor.u32 %v1401, %v1404
      %v1406 = vrot.slane %v1405, 4
      %v1408 = vshll.u32 %v1259, 16
      %v1410 = vrot.slane %v1408, 5
      %v1411 = vsel %vm1301, %v1406, %v1410
      %v1412 = vshrl.u32 %v1259, 16
      %v1414 = vrot.slane %v1412, 4
      %v1415 = vor.u32 %v1414, %v1410
      %v1416 = vrot.slane %v1415, 4
      %v1418 = vshll.u32 %v1287, 16
      %v1420 = vrot.slane %v1418, 5
      %v1421 = vsel %vm1301, %v1416, %v1420
      %v1423 = vshrl.u32 %v1260, 16
      %v1425 = vrot.slane %v1423, 4
      %v1426 = vshll.u32 %v1260, 16
      %v1428 = vrot.slane %v1426, 5
      %v1429 = vor.u32 %v1425, %v1428
      %v1430 = vrot.slane %v1429, 4
      %v1432 = vshll.u32 %v1261, 16
      %v1434 = vrot.slane %v1432, 5
      %v1435 = vsel %vm1301, %v1430, %v1434
      %v1436 = vshrl.u32 %v1261, 16
      %v1438 = vrot.slane %v1436, 4
      %v1439 = vor.u32 %v1438, %v1434
      %v1440 = vrot.slane %v1439, 4
      %v1442 = vshll.u32 %v1288, 16
      %v1444 = vrot.slane %v1442, 5
      %v1445 = vsel %vm1301, %v1440, %v1444
      %v1447 = vshrl.u32 %v1262, 16
      %v1449 = vrot.slane %v1447, 4
      %v1450 = vshll.u32 %v1262, 16
      %v1452 = vrot.slane %v1450, 5
      %v1453 = vor.u32 %v1449, %v1452
      %v1454 = vrot.slane %v1453, 4
      %v1456 = vshll.u32 %v1263, 16
      %v1458 = vrot.slane %v1456, 5
      %v1459 = vsel %vm1301, %v1454, %v1458
      %v1460 = vshrl.u32 %v1263, 16
      %v1462 = vrot.slane %v1460, 4
      %v1463 = vor.u32 %v1462, %v1458
      %v1464 = vrot.slane %v1463, 4
      %v1466 = vshll.u32 %v1289, 16
      %v1468 = vrot.slane %v1466, 5
      %v1469 = vsel %vm1301, %v1464, %v1468
      %v1471 = vshrl.u32 %v1264, 16
      %v1473 = vrot.slane %v1471, 4
      %v1474 = vshll.u32 %v1264, 16
      %v1476 = vrot.slane %v1474, 5
      %v1477 = vor.u32 %v1473, %v1476
      %v1478 = vrot.slane %v1477, 4
      %v1480 = vshll.u32 %v1265, 16
      %v1482 = vrot.slane %v1480, 5
      %v1483 = vsel %vm1301, %v1478, %v1482
      %v1484 = vshrl.u32 %v1265, 16
      %v1486 = vrot.slane %v1484, 4
      %v1487 = vor.u32 %v1486, %v1482
      %v1488 = vrot.slane %v1487, 4
      %v1490 = vshll.u32 %v1290, 16
      %v1492 = vrot.slane %v1490, 5
      %v1493 = vsel %vm1301, %v1488, %v1492
      %v1495 = vshrl.u32 %v1266, 16
      %v1497 = vrot.slane %v1495, 4
      %v1498 = vshll.u32 %v1266, 16
      %v1500 = vrot.slane %v1498, 5
      %v1501 = vor.u32 %v1497, %v1500
      %v1502 = vrot.slane %v1501, 4
      %v1504 = vshll.u32 %v1267, 16
      %v1506 = vrot.slane %v1504, 5
      %v1507 = vsel %vm1301, %v1502, %v1506
      %v1508 = vshrl.u32 %v1267, 16
      %v1510 = vrot.slane %v1508, 4
      %v1511 = vor.u32 %v1510, %v1506
      %v1512 = vrot.slane %v1511, 4
      %v1514 = vshll.u32 %v1291, 16
      %v1516 = vrot.slane %v1514, 5
      %v1517 = vsel %vm1301, %v1512, %v1516
      %v1519 = vshrl.u32 %v1268, 16
      %v1521 = vrot.slane %v1519, 4
      %v1522 = vshll.u32 %v1268, 16
      %v1524 = vrot.slane %v1522, 5
      %v1525 = vor.u32 %v1521, %v1524
      %v1526 = vrot.slane %v1525, 4
      %v1528 = vshll.u32 %v1269, 16
      %v1530 = vrot.slane %v1528, 5
      %v1531 = vsel %vm1301, %v1526, %v1530
      %v1532 = vshrl.u32 %v1269, 16
      %v1534 = vrot.slane %v1532, 4
      %v1535 = vor.u32 %v1534, %v1530
      %v1536 = vrot.slane %v1535, 4
      %v1538 = vshll.u32 %v1292, 16
      %v1540 = vrot.slane %v1538, 5
      %v1541 = vsel %vm1301, %v1536, %v1540
      %v1543 = vshrl.u32 %v1270, 16
      %v1545 = vrot.slane %v1543, 4
      %v1546 = vshll.u32 %v1270, 16
      %v1548 = vrot.slane %v1546, 5
      %v1549 = vor.u32 %v1545, %v1548
      %v1550 = vrot.slane %v1549, 4
      %v1552 = vshll.u32 %v1271, 16
      %v1554 = vrot.slane %v1552, 5
      %v1555 = vsel %vm1301, %v1550, %v1554
      %v1556 = vshrl.u32 %v1271, 16
      %v1558 = vrot.slane %v1556, 4
      %v1559 = vor.u32 %v1558, %v1554
      %v1560 = vrot.slane %v1559, 4
      %v1562 = vshll.u32 %v1293, 16
      %v1564 = vrot.slane %v1562, 5
      %v1565 = vsel %vm1301, %v1560, %v1564
      %v1567 = vshrl.u32 %v1272, 16
      %v1569 = vrot.slane %v1567, 4
      %v1570 = vshll.u32 %v1272, 16
      %v1572 = vrot.slane %v1570, 5
      %v1573 = vor.u32 %v1569, %v1572
      %v1574 = vrot.slane %v1573, 4
      %v1576 = vshll.u32 %v1273, 16
      %v1578 = vrot.slane %v1576, 5
      %v1579 = vsel %vm1301, %v1574, %v1578
      %v1580 = vshrl.u32 %v1273, 16
      %v1582 = vrot.slane %v1580, 4
      %v1583 = vor.u32 %v1582, %v1578
      %v1584 = vrot.slane %v1583, 4
      %v1586 = vshll.u32 %v1294, 16
      %v1588 = vrot.slane %v1586, 5
      %v1589 = vsel %vm1301, %v1584, %v1588
      %v1591 = vshrl.u32 %v1274, 16
      %v1593 = vrot.slane %v1591, 4
      %v1594 = vshll.u32 %v1274, 16
      %v1596 = vrot.slane %v1594, 5
      %v1597 = vor.u32 %v1593, %v1596
      %v1598 = vrot.slane %v1597, 4
      %v1600 = vshll.u32 %v1275, 16
      %v1602 = vrot.slane %v1600, 5
      %v1603 = vsel %vm1301, %v1598, %v1602
      %v1604 = vshrl.u32 %v1275, 16
      %v1606 = vrot.slane %v1604, 4
      %v1607 = vor.u32 %v1606, %v1602
      %v1608 = vrot.slane %v1607, 4
      %v1610 = vshll.u32 %v1295, 16
      %v1612 = vrot.slane %v1610, 5
      %v1613 = vsel %vm1301, %v1608, %v1612
      %v1615 = vshrl.u32 %v1276, 16
      %v1617 = vrot.slane %v1615, 4
      %v1618 = vshll.u32 %v1276, 16
      %v1620 = vrot.slane %v1618, 5
      %v1621 = vor.u32 %v1617, %v1620
      %v1622 = vrot.slane %v1621, 4
      %v1624 = vshll.u32 %v1277, 16
      %v1626 = vrot.slane %v1624, 5
      %v1627 = vsel %vm1301, %v1622, %v1626
      %v1628 = vshrl.u32 %v1277, 16
      %v1630 = vrot.slane %v1628, 4
      %v1631 = vor.u32 %v1630, %v1626
      %v1632 = vrot.slane %v1631, 4
      %v1634 = vshll.u32 %v1296, 16
      %v1636 = vrot.slane %v1634, 5
      %v1637 = vsel %vm1301, %v1632, %v1636
      %v1639 = vshrl.u32 %v1278, 16
      %v1641 = vrot.slane %v1639, 4
      %v1642 = vshll.u32 %v1278, 16
      %v1644 = vrot.slane %v1642, 5
      %v1645 = vor.u32 %v1641, %v1644
      %v1646 = vrot.slane %v1645, 4
      %v1648 = vshll.u32 %v1279, 16
      %v1650 = vrot.slane %v1648, 5
      %v1651 = vsel %vm1301, %v1646, %v1650
      %v1652 = vshrl.u32 %v1279, 16
      %v1654 = vrot.slane %v1652, 4
      %v1655 = vor.u32 %v1654, %v1650
      %v1656 = vrot.slane %v1655, 4
      %v1658 = vshll.u32 %v1297, 16
      %v1660 = vrot.slane %v1658, 5
      %v1661 = vsel %vm1301, %v1656, %v1660
      %v1663 = vshrl.u32 %v1280, 16
      %v1665 = vrot.slane %v1663, 4
      %v1666 = vshll.u32 %v1280, 16
      %v1668 = vrot.slane %v1666, 5
      %v1669 = vor.u32 %v1665, %v1668
      %v1670 = vrot.slane %v1669, 4
      %v1672 = vshll.u32 %v1281, 16
      %v1674 = vrot.slane %v1672, 5
      %v1675 = vsel %vm1301, %v1670, %v1674
      %v1676 = vshrl.u32 %v1281, 16
      %v1678 = vrot.slane %v1676, 4
      %v1679 = vor.u32 %v1678, %v1674
      %v1680 = vrot.slane %v1679, 4
      %v1682 = vshll.u32 %v1298, 16
      %v1684 = vrot.slane %v1682, 5
      %v1685 = vsel %vm1301, %v1680, %v1684
      %v1686 = vld [vmem:[%s1] sm:$0xc]
      %v1687 = vunpack.c.l.b16 %v1315
      %v1688 = vunpack.c.l.b16 %v1325
      %v1689 = vunpack.c.l.b16 %v1339
      %v1690 = vunpack.c.l.b16 %v1349
      %v1691 = vunpack.c.l.b16 %v1363
      %v1692 = vunpack.c.l.b16 %v1373
      %v1693 = vunpack.c.l.b16 %v1387
      %v1694 = vunpack.c.l.b16 %v1397
      %v1695 = vunpack.c.l.b16 %v1411
      %v1696 = vunpack.c.l.b16 %v1421
      %v1697 = vunpack.c.l.b16 %v1435
      %v1698 = vunpack.c.l.b16 %v1445
      %v1699 = vunpack.c.l.b16 %v1459
      %v1700 = vunpack.c.l.b16 %v1469
      %v1701 = vunpack.c.l.b16 %v1483
      %v1702 = vunpack.c.l.b16 %v1493
      %v1703 = vunpack.c.l.b16 %v1507
      %v1704 = vunpack.c.l.b16 %v1517
      %v1705 = vunpack.c.l.b16 %v1531
      %v1706 = vunpack.c.l.b16 %v1541
      %v1707 = vunpack.c.l.b16 %v1555
      %v1708 = vunpack.c.l.b16 %v1565
      %v1709 = vunpack.c.l.b16 %v1579
      %v1710 = vunpack.c.l.b16 %v1589
      %v1711 = vunpack.c.l.b16 %v1603
      %v1712 = vunpack.c.l.b16 %v1613
      %v1713 = vunpack.c.l.b16 %v1627
      %v1714 = vunpack.c.l.b16 %v1637
      %v1715 = vunpack.c.l.b16 %v1651
      %v1716 = vunpack.c.l.b16 %v1661
      %v1717 = vunpack.c.l.b16 %v1675
      %v1718 = vunpack.c.l.b16 %v1685
      %v1719 = vpack.c.b16 %v1688, %v1687
      %v1720 = vpack.c.b16 %v1690, %v1689
      %v1721 = vpack.c.b16 %v1692, %v1691
      %v1722 = vpack.c.b16 %v1694, %v1693
      %v1723 = vpack.c.b16 %v1696, %v1695
      %v1724 = vpack.c.b16 %v1698, %v1697
      %v1725 = vpack.c.b16 %v1700, %v1699
      %v1726 = vpack.c.b16 %v1702, %v1701
      %v1727 = vpack.c.b16 %v1704, %v1703
      %v1728 = vpack.c.b16 %v1706, %v1705
      %v1729 = vpack.c.b16 %v1708, %v1707
      %v1730 = vpack.c.b16 %v1710, %v1709
      %v1731 = vpack.c.b16 %v1712, %v1711
      %v1732 = vpack.c.b16 %v1714, %v1713
      %v1733 = vpack.c.b16 %v1716, %v1715
      %v1734 = vpack.c.b16 %v1718, %v1717
      %v1736 = vunpack.c.l.b16 %v1686
      %v1737 = vpack.c.b16 %v1736, %v1736
      %v1738 = vrot.slane %v1737, 2
      %vm1739 = vcmask 31744
      %v1741 = vsel %vm1739, %v1719, 0
      %v1744 = vsel %vm1739, %v1720, 0
      %v1747 = vsel %vm1739, %v1721, 0
      %v1750 = vsel %vm1739, %v1722, 0
      %v1753 = vsel %vm1739, %v1723, 0
      %v1756 = vsel %vm1739, %v1724, 0
      %v1759 = vsel %vm1739, %v1725, 0
      %v1762 = vsel %vm1739, %v1726, 0
      %v1765 = vsel %vm1739, %v1727, 0
      %v1768 = vsel %vm1739, %v1728, 0
      %v1771 = vsel %vm1739, %v1729, 0
      %v1774 = vsel %vm1739, %v1730, 0
      %v1777 = vsel %vm1739, %v1731, 0
      %v1780 = vsel %vm1739, %v1732, 0
      %v1783 = vsel %vm1739, %v1733, 0
      %v1786 = vsel %vm1739, %v1734, 0
      %vm1788 = vcmask 1041408
      %v1790 = vsel %vm1788, %v1738, 0
      %1792 = vmatprep.subr.bf16.mxu0 0
      %1793 = vmatpush1.bf16.msra.mxu0 0
      %1794 = vmatprep.subr.bf16.mxu0 0
      %1795 = vmatpush1.bf16.msra.mxu0 0
      %1796 = vmatprep.subr.bf16.mxu0 0
      %1797 = vmatpush1.bf16.msra.mxu0 0
      %1798 = vmatprep.subr.bf16.mxu0 0
      %1799 = vmatpush1.bf16.msra.mxu0 0
      %1800 = vmatprep.subr.bf16.mxu0 0
      %1801 = vmatpush1.bf16.msra.mxu0 0
      %1802 = vmatprep.subr.bf16.mxu0 0
      %1803 = vmatpush1.bf16.msra.mxu0 0
      %1804 = vmatprep.subr.bf16.mxu0 0
      %1805 = vmatpush1.bf16.msra.mxu0 0
      %1806 = vmatprep.subr.bf16.mxu0 0
      %1807 = vmatpush1.bf16.msra.mxu0 %v1790
      %1808 = vmatprep.subr.bf16.mxu0 0
      %1809 = vmatpush2.bf16.msra.mxu0 0
      %1810 = vmatprep.subr.bf16.mxu0 0
      %1811 = vmatpush2.bf16.msra.mxu0 0
      %1812 = vmatprep.subr.bf16.mxu0 0
      %1813 = vmatpush2.bf16.msra.mxu0 0
      %1814 = vmatprep.subr.bf16.mxu0 0
      %1815 = vmatpush2.bf16.msra.mxu0 0
      %1816 = vmatprep.subr.bf16.mxu0 0
      %1817 = vmatpush2.bf16.msra.mxu0 0
      %1818 = vmatprep.subr.bf16.mxu0 0
      %1819 = vmatpush2.bf16.msra.mxu0 0
      %1820 = vmatprep.subr.bf16.mxu0 0
      %1821 = vmatpush2.bf16.msra.mxu0 0
      %1822 = vmatprep.subr.bf16.mxu0 0
      %1823 = vmatpush2.bf16.msra.mxu0 0
      %1824 = vmatprep.mubr.bf16.mxu0 0
      %1825 = vmatmul.mubr.bf16.gmra.mxu0 %v1741
      %v1826 = vpop.f32.mrf.mxu0
      %v1827 = vadd.f32 0.0, %v1826
      %v1828 = vpop.f32.mrf.mxu0
      %v1829 = vpop.f32.mrf.mxu0
      %v1830 = vadd.f32 0.0, %v1829
      %v1831 = vpop.f32.mrf.mxu0
      %1832 = vmatprep.mubr.bf16.mxu0 0
      %1833 = vmatmul.mubr.bf16.gmra.mxu0 %v1744
      %v1834 = vpop.f32.mrf.mxu0
      %v1835 = vadd.f32 0.0, %v1834
      %v1836 = vpop.f32.mrf.mxu0
      %v1837 = vpop.f32.mrf.mxu0
      %v1838 = vadd.f32 0.0, %v1837
      %v1839 = vpop.f32.mrf.mxu0
      %1840 = vmatprep.mubr.bf16.mxu0 0
      %1841 = vmatmul.mubr.bf16.gmra.mxu0 %v1747
      %v1842 = vpop.f32.mrf.mxu0
      %v1843 = vadd.f32 0.0, %v1842
      %v1844 = vpop.f32.mrf.mxu0
      %v1845 = vpop.f32.mrf.mxu0
      %v1846 = vadd.f32 0.0, %v1845
      %v1847 = vpop.f32.mrf.mxu0
      %1848 = vmatprep.mubr.bf16.mxu0 0
      %1849 = vmatmul.mubr.bf16.gmra.mxu0 %v1750
      %v1850 = vpop.f32.mrf.mxu0
      %v1851 = vadd.f32 0.0, %v1850
      %v1852 = vpop.f32.mrf.mxu0
      %v1853 = vpop.f32.mrf.mxu0
      %v1854 = vadd.f32 0.0, %v1853
      %v1855 = vpop.f32.mrf.mxu0
      %1856 = vmatprep.mubr.bf16.mxu0 0
      %1857 = vmatmul.mubr.bf16.gmra.mxu0 %v1753
      %v1858 = vpop.f32.mrf.mxu0
      %v1859 = vadd.f32 0.0, %v1858
      %v1860 = vpop.f32.mrf.mxu0
      %v1861 = vpop.f32.mrf.mxu0
      %v1862 = vadd.f32 0.0, %v1861
      %v1863 = vpop.f32.mrf.mxu0
      %1864 = vmatprep.mubr.bf16.mxu0 0
      %1865 = vmatmul.mubr.bf16.gmra.mxu0 %v1756
      %v1866 = vpop.f32.mrf.mxu0
      %v1867 = vadd.f32 0.0, %v1866
      %v1868 = vpop.f32.mrf.mxu0
      %v1869 = vpop.f32.mrf.mxu0
      %v1870 = vadd.f32 0.0, %v1869
      %v1871 = vpop.f32.mrf.mxu0
      %1872 = vmatprep.mubr.bf16.mxu0 0
      %1873 = vmatmul.mubr.bf16.gmra.mxu0 %v1759
      %v1874 = vpop.f32.mrf.mxu0
      %v1875 = vadd.f32 0.0, %v1874
      %v1876 = vpop.f32.mrf.mxu0
      %v1877 = vpop.f32.mrf.mxu0
      %v1878 = vadd.f32 0.0, %v1877
      %v1879 = vpop.f32.mrf.mxu0
      %1880 = vmatprep.mubr.bf16.mxu0 0
      %1881 = vmatmul.mubr.bf16.gmra.mxu0 %v1762
      %v1882 = vpop.f32.mrf.mxu0
      %v1883 = vadd.f32 0.0, %v1882
      %v1884 = vpop.f32.mrf.mxu0
      %v1885 = vpop.f32.mrf.mxu0
      %v1886 = vadd.f32 0.0, %v1885
      %v1887 = vpop.f32.mrf.mxu0
      %1888 = vmatprep.mubr.bf16.mxu0 0
      %1889 = vmatmul.mubr.bf16.gmra.mxu0 %v1765
      %v1890 = vpop.f32.mrf.mxu0
      %v1891 = vadd.f32 0.0, %v1890
      %v1892 = vpop.f32.mrf.mxu0
      %v1893 = vpop.f32.mrf.mxu0
      %v1894 = vadd.f32 0.0, %v1893
      %v1895 = vpop.f32.mrf.mxu0
      %1896 = vmatprep.mubr.bf16.mxu0 0
      %1897 = vmatmul.mubr.bf16.gmra.mxu0 %v1768
      %v1898 = vpop.f32.mrf.mxu0
      %v1899 = vadd.f32 0.0, %v1898
      %v1900 = vpop.f32.mrf.mxu0
      %v1901 = vpop.f32.mrf.mxu0
      %v1902 = vadd.f32 0.0, %v1901
      %v1903 = vpop.f32.mrf.mxu0
      %1904 = vmatprep.mubr.bf16.mxu0 0
      %1905 = vmatmul.mubr.bf16.gmra.mxu0 %v1771
      %v1906 = vpop.f32.mrf.mxu0
      %v1907 = vadd.f32 0.0, %v1906
      %v1908 = vpop.f32.mrf.mxu0
      %v1909 = vpop.f32.mrf.mxu0
      %v1910 = vadd.f32 0.0, %v1909
      %v1911 = vpop.f32.mrf.mxu0
      %1912 = vmatprep.mubr.bf16.mxu0 0
      %1913 = vmatmul.mubr.bf16.gmra.mxu0 %v1774
      %v1914 = vpop.f32.mrf.mxu0
      %v1915 = vadd.f32 0.0, %v1914
      %v1916 = vpop.f32.mrf.mxu0
      %v1917 = vpop.f32.mrf.mxu0
      %v1918 = vadd.f32 0.0, %v1917
      %v1919 = vpop.f32.mrf.mxu0
      %1920 = vmatprep.mubr.bf16.mxu0 0
      %1921 = vmatmul.mubr.bf16.gmra.mxu0 %v1777
      %v1922 = vpop.f32.mrf.mxu0
      %v1923 = vadd.f32 0.0, %v1922
      %v1924 = vpop.f32.mrf.mxu0
      %v1925 = vpop.f32.mrf.mxu0
      %v1926 = vadd.f32 0.0, %v1925
      %v1927 = vpop.f32.mrf.mxu0
      %1928 = vmatprep.mubr.bf16.mxu0 0
      %1929 = vmatmul.mubr.bf16.gmra.mxu0 %v1780
      %v1930 = vpop.f32.mrf.mxu0
      %v1931 = vadd.f32 0.0, %v1930
      %v1932 = vpop.f32.mrf.mxu0
      %v1933 = vpop.f32.mrf.mxu0
      %v1934 = vadd.f32 0.0, %v1933
      %v1935 = vpop.f32.mrf.mxu0
      %1936 = vmatprep.mubr.bf16.mxu0 0
      %1937 = vmatmul.mubr.bf16.gmra.mxu0 %v1783
      %v1938 = vpop.f32.mrf.mxu0
      %v1939 = vadd.f32 0.0, %v1938
      %v1940 = vpop.f32.mrf.mxu0
      %v1941 = vpop.f32.mrf.mxu0
      %v1942 = vadd.f32 0.0, %v1941
      %v1943 = vpop.f32.mrf.mxu0
      %1944 = vmatprep.mubr.bf16.mxu0 0
      %1945 = vmatmul.mubr.bf16.gmra.mxu0 %v1786
      %v1946 = vpop.f32.mrf.mxu0
      %v1947 = vadd.f32 0.0, %v1946
      %v1948 = vpop.f32.mrf.mxu0
      %v1949 = vpop.f32.mrf.mxu0
      %v1950 = vadd.f32 0.0, %v1949
      %v1951 = vpop.f32.mrf.mxu0
      %1952 = vdwg.mxu0
      %v1985 = vunpack.c.l.b16 %v1250
      %v1986 = vunpack.c.l.b16 %v1251
      %v1987 = vunpack.c.l.b16 %v1252
      %v1988 = vunpack.c.l.b16 %v1253
      %v1989 = vunpack.c.l.b16 %v1254
      %v1990 = vunpack.c.l.b16 %v1255
      %v1991 = vunpack.c.l.b16 %v1256
      %v1992 = vunpack.c.l.b16 %v1257
      %v1993 = vunpack.c.l.b16 %v1258
      %v1994 = vunpack.c.l.b16 %v1259
      %v1995 = vunpack.c.l.b16 %v1260
      %v1996 = vunpack.c.l.b16 %v1261
      %v1997 = vunpack.c.l.b16 %v1262
      %v1998 = vunpack.c.l.b16 %v1263
      %v1999 = vunpack.c.l.b16 %v1264
      %v2000 = vunpack.c.l.b16 %v1265
      %v2001 = vunpack.c.l.b16 %v1266
      %v2002 = vunpack.c.l.b16 %v1267
      %v2003 = vunpack.c.l.b16 %v1268
      %v2004 = vunpack.c.l.b16 %v1269
      %v2005 = vunpack.c.l.b16 %v1270
      %v2006 = vunpack.c.l.b16 %v1271
      %v2007 = vunpack.c.l.b16 %v1272
      %v2008 = vunpack.c.l.b16 %v1273
      %v2009 = vunpack.c.l.b16 %v1274
      %v2010 = vunpack.c.l.b16 %v1275
      %v2011 = vunpack.c.l.b16 %v1276
      %v2012 = vunpack.c.l.b16 %v1277
      %v2013 = vunpack.c.l.b16 %v1278
      %v2014 = vunpack.c.l.b16 %v1279
      %v2015 = vunpack.c.l.b16 %v1280
      %v2016 = vunpack.c.l.b16 %v1281
      %v2017 = vpack.c.b16 %v1986, %v1985
      %v2018 = vpack.c.b16 %v1988, %v1987
      %v2019 = vpack.c.b16 %v1990, %v1989
      %v2020 = vpack.c.b16 %v1992, %v1991
      %v2021 = vpack.c.b16 %v1994, %v1993
      %v2022 = vpack.c.b16 %v1996, %v1995
      %v2023 = vpack.c.b16 %v1998, %v1997
      %v2024 = vpack.c.b16 %v2000, %v1999
      %v2025 = vpack.c.b16 %v2002, %v2001
      %v2026 = vpack.c.b16 %v2004, %v2003
      %v2027 = vpack.c.b16 %v2006, %v2005
      %v2028 = vpack.c.b16 %v2008, %v2007
      %v2029 = vpack.c.b16 %v2010, %v2009
      %v2030 = vpack.c.b16 %v2012, %v2011
      %v2031 = vpack.c.b16 %v2014, %v2013
      %v2032 = vpack.c.b16 %v2016, %v2015
      %v2034 = vsel %vm1739, %v2017, 0
      %v2037 = vsel %vm1739, %v2018, 0
      %v2040 = vsel %vm1739, %v2019, 0
      %v2043 = vsel %vm1739, %v2020, 0
      %v2046 = vsel %vm1739, %v2021, 0
      %v2049 = vsel %vm1739, %v2022, 0
      %v2052 = vsel %vm1739, %v2023, 0
      %v2055 = vsel %vm1739, %v2024, 0
      %v2058 = vsel %vm1739, %v2025, 0
      %v2061 = vsel %vm1739, %v2026, 0
      %v2064 = vsel %vm1739, %v2027, 0
      %v2067 = vsel %vm1739, %v2028, 0
      %v2070 = vsel %vm1739, %v2029, 0
      %v2073 = vsel %vm1739, %v2030, 0
      %v2076 = vsel %vm1739, %v2031, 0
      %v2079 = vsel %vm1739, %v2032, 0
      %v2082 = vsel %vm1788, %v1282, 0
      %2084 = vmatprep.subr.bf16.mxu0 0
      %2085 = vmatpush1.bf16.msra.mxu0 0
      %2086 = vmatprep.subr.bf16.mxu0 0
      %2087 = vmatpush1.bf16.msra.mxu0 0
      %2088 = vmatprep.subr.bf16.mxu0 0
      %2089 = vmatpush1.bf16.msra.mxu0 0
      %2090 = vmatprep.subr.bf16.mxu0 0
      %2091 = vmatpush1.bf16.msra.mxu0 0
      %2092 = vmatprep.subr.bf16.mxu0 0
      %2093 = vmatpush1.bf16.msra.mxu0 0
      %2094 = vmatprep.subr.bf16.mxu0 0
      %2095 = vmatpush1.bf16.msra.mxu0 0
      %2096 = vmatprep.subr.bf16.mxu0 0
      %2097 = vmatpush1.bf16.msra.mxu0 0
      %2098 = vmatprep.subr.bf16.mxu0 0
      %2099 = vmatpush1.bf16.msra.mxu0 %v2082
      %2100 = vmatprep.subr.bf16.mxu0 0
      %2101 = vmatpush2.bf16.msra.mxu0 0
      %2102 = vmatprep.subr.bf16.mxu0 0
      %2103 = vmatpush2.bf16.msra.mxu0 0
      %2104 = vmatprep.subr.bf16.mxu0 0
      %2105 = vmatpush2.bf16.msra.mxu0 0
      %2106 = vmatprep.subr.bf16.mxu0 0
      %2107 = vmatpush2.bf16.msra.mxu0 0
      %2108 = vmatprep.subr.bf16.mxu0 0
      %2109 = vmatpush2.bf16.msra.mxu0 0
      %2110 = vmatprep.subr.bf16.mxu0 0
      %2111 = vmatpush2.bf16.msra.mxu0 0
      %2112 = vmatprep.subr.bf16.mxu0 0
      %2113 = vmatpush2.bf16.msra.mxu0 0
      %2114 = vmatprep.subr.bf16.mxu0 0
      %2115 = vmatpush2.bf16.msra.mxu0 0
      %2116 = vmatprep.mubr.bf16.mxu0 0
      %2117 = vmatmul.mubr.bf16.gmra.mxu0 %v2034
      %v2118 = vpop.f32.mrf.mxu0
      %v2119 = vadd.f32 %v1827, %v2118
      %v2120 = vpop.f32.mrf.mxu0
      %v2121 = vpop.f32.mrf.mxu0
      %v2122 = vadd.f32 %v1830, %v2121
      %v2123 = vpop.f32.mrf.mxu0
      %2124 = vmatprep.mubr.bf16.mxu0 0
      %2125 = vmatmul.mubr.bf16.gmra.mxu0 %v2037
      %v2126 = vpop.f32.mrf.mxu0
      %v2127 = vadd.f32 %v1835, %v2126
      %v2128 = vpop.f32.mrf.mxu0
      %v2129 = vpop.f32.mrf.mxu0
      %v2130 = vadd.f32 %v1838, %v2129
      %v2131 = vpop.f32.mrf.mxu0
      %2132 = vmatprep.mubr.bf16.mxu0 0
      %2133 = vmatmul.mubr.bf16.gmra.mxu0 %v2040
      %v2134 = vpop.f32.mrf.mxu0
      %v2135 = vadd.f32 %v1843, %v2134
      %v2136 = vpop.f32.mrf.mxu0
      %v2137 = vpop.f32.mrf.mxu0
      %v2138 = vadd.f32 %v1846, %v2137
      %v2139 = vpop.f32.mrf.mxu0
      %2140 = vmatprep.mubr.bf16.mxu0 0
      %2141 = vmatmul.mubr.bf16.gmra.mxu0 %v2043
      %v2142 = vpop.f32.mrf.mxu0
      %v2143 = vadd.f32 %v1851, %v2142
      %v2144 = vpop.f32.mrf.mxu0
      %v2145 = vpop.f32.mrf.mxu0
      %v2146 = vadd.f32 %v1854, %v2145
      %v2147 = vpop.f32.mrf.mxu0
      %2148 = vmatprep.mubr.bf16.mxu0 0
      %2149 = vmatmul.mubr.bf16.gmra.mxu0 %v2046
      %v2150 = vpop.f32.mrf.mxu0
      %v2151 = vadd.f32 %v1859, %v2150
      %v2152 = vpop.f32.mrf.mxu0
      %v2153 = vpop.f32.mrf.mxu0
      %v2154 = vadd.f32 %v1862, %v2153
      %v2155 = vpop.f32.mrf.mxu0
      %2156 = vmatprep.mubr.bf16.mxu0 0
      %2157 = vmatmul.mubr.bf16.gmra.mxu0 %v2049
      %v2158 = vpop.f32.mrf.mxu0
      %v2159 = vadd.f32 %v1867, %v2158
      %v2160 = vpop.f32.mrf.mxu0
      %v2161 = vpop.f32.mrf.mxu0
      %v2162 = vadd.f32 %v1870, %v2161
      %v2163 = vpop.f32.mrf.mxu0
      %2164 = vmatprep.mubr.bf16.mxu0 0
      %2165 = vmatmul.mubr.bf16.gmra.mxu0 %v2052
      %v2166 = vpop.f32.mrf.mxu0
      %v2167 = vadd.f32 %v1875, %v2166
      %v2168 = vpop.f32.mrf.mxu0
      %v2169 = vpop.f32.mrf.mxu0
      %v2170 = vadd.f32 %v1878, %v2169
      %v2171 = vpop.f32.mrf.mxu0
      %2172 = vmatprep.mubr.bf16.mxu0 0
      %2173 = vmatmul.mubr.bf16.gmra.mxu0 %v2055
      %v2174 = vpop.f32.mrf.mxu0
      %v2175 = vadd.f32 %v1883, %v2174
      %v2176 = vpop.f32.mrf.mxu0
      %v2177 = vpop.f32.mrf.mxu0
      %v2178 = vadd.f32 %v1886, %v2177
      %v2179 = vpop.f32.mrf.mxu0
      %2180 = vmatprep.mubr.bf16.mxu0 0
      %2181 = vmatmul.mubr.bf16.gmra.mxu0 %v2058
      %v2182 = vpop.f32.mrf.mxu0
      %v2183 = vadd.f32 %v1891, %v2182
      %v2184 = vpop.f32.mrf.mxu0
      %v2185 = vpop.f32.mrf.mxu0
      %v2186 = vadd.f32 %v1894, %v2185
      %v2187 = vpop.f32.mrf.mxu0
      %2188 = vmatprep.mubr.bf16.mxu0 0
      %2189 = vmatmul.mubr.bf16.gmra.mxu0 %v2061
      %v2190 = vpop.f32.mrf.mxu0
      %v2191 = vadd.f32 %v1899, %v2190
      %v2192 = vpop.f32.mrf.mxu0
      %v2193 = vpop.f32.mrf.mxu0
      %v2194 = vadd.f32 %v1902, %v2193
      %v2195 = vpop.f32.mrf.mxu0
      %2196 = vmatprep.mubr.bf16.mxu0 0
      %2197 = vmatmul.mubr.bf16.gmra.mxu0 %v2064
      %v2198 = vpop.f32.mrf.mxu0
      %v2199 = vadd.f32 %v1907, %v2198
      %v2200 = vpop.f32.mrf.mxu0
      %v2201 = vpop.f32.mrf.mxu0
      %v2202 = vadd.f32 %v1910, %v2201
      %v2203 = vpop.f32.mrf.mxu0
      %2204 = vmatprep.mubr.bf16.mxu0 0
      %2205 = vmatmul.mubr.bf16.gmra.mxu0 %v2067
      %v2206 = vpop.f32.mrf.mxu0
      %v2207 = vadd.f32 %v1915, %v2206
      %v2208 = vpop.f32.mrf.mxu0
      %v2209 = vpop.f32.mrf.mxu0
      %v2210 = vadd.f32 %v1918, %v2209
      %v2211 = vpop.f32.mrf.mxu0
      %2212 = vmatprep.mubr.bf16.mxu0 0
      %2213 = vmatmul.mubr.bf16.gmra.mxu0 %v2070
      %v2214 = vpop.f32.mrf.mxu0
      %v2215 = vadd.f32 %v1923, %v2214
      %v2216 = vpop.f32.mrf.mxu0
      %v2217 = vpop.f32.mrf.mxu0
      %v2218 = vadd.f32 %v1926, %v2217
      %v2219 = vpop.f32.mrf.mxu0
      %2220 = vmatprep.mubr.bf16.mxu0 0
      %2221 = vmatmul.mubr.bf16.gmra.mxu0 %v2073
      %v2222 = vpop.f32.mrf.mxu0
      %v2223 = vadd.f32 %v1931, %v2222
      %v2224 = vpop.f32.mrf.mxu0
      %v2225 = vpop.f32.mrf.mxu0
      %v2226 = vadd.f32 %v1934, %v2225
      %v2227 = vpop.f32.mrf.mxu0
      %2228 = vmatprep.mubr.bf16.mxu0 0
      %2229 = vmatmul.mubr.bf16.gmra.mxu0 %v2076
      %v2230 = vpop.f32.mrf.mxu0
      %v2231 = vadd.f32 %v1939, %v2230
      %v2232 = vpop.f32.mrf.mxu0
      %v2233 = vpop.f32.mrf.mxu0
      %v2234 = vadd.f32 %v1942, %v2233
      %v2235 = vpop.f32.mrf.mxu0
      %2236 = vmatprep.mubr.bf16.mxu0 0
      %2237 = vmatmul.mubr.bf16.gmra.mxu0 %v2079
      %v2238 = vpop.f32.mrf.mxu0
      %v2239 = vadd.f32 %v1947, %v2238
      %v2240 = vpop.f32.mrf.mxu0
      %v2241 = vpop.f32.mrf.mxu0
      %v2242 = vadd.f32 %v1950, %v2241
      %v2243 = vpop.f32.mrf.mxu0
      %2244 = vdwg.mxu0
      %v2245 = vld [vmem:[#allocation2] sm:$0xe]
      %v2246 = vld [vmem:[#allocation2 + $0xc] sm:$0xe]
      %v2247 = vld [vmem:[#allocation2 + $0x18] sm:$0xe]
      %v2248 = vld [vmem:[#allocation2 + $0x24] sm:$0xe]
      %v2249 = vld [vmem:[#allocation2 + $0x30] sm:$0xe]
      %v2250 = vld [vmem:[#allocation2 + $0x3c] sm:$0xe]
      %v2251 = vld [vmem:[#allocation2 + $0x48] sm:$0xe]
      %v2252 = vld [vmem:[#allocation2 + $0x54] sm:$0xe]
      %v2253 = vld [vmem:[#allocation2 + $0x60] sm:$0xe]
      %v2254 = vld [vmem:[#allocation2 + $0x6c] sm:$0xe]
      %v2255 = vld [vmem:[#allocation2 + $0x78] sm:$0xe]
      %v2256 = vld [vmem:[#allocation2 + $0x84] sm:$0xe]
      %v2257 = vld [vmem:[#allocation2 + $0x90] sm:$0xe]
      %v2258 = vld [vmem:[#allocation2 + $0x9c] sm:$0xe]
      %v2259 = vld [vmem:[#allocation2 + $0xa8] sm:$0xe]
      %v2260 = vld [vmem:[#allocation2 + $0xb4] sm:$0xe]
      %vm2293 = vcmask 1042432
      %vm2294 = vcmask 1046532
      %vm2295 = vmor %vm2293, %vm2294
      %v2296 = vrot.slane %v2245, 5
      %v2297 = vrot.slane %v2296, 4
      %v2298 = vrot.slane %v1251, 5
      %v2299 = vsel %vm2295, %v2297, %v2298
      %v2300 = vrot.slane %v2298, 4
      %v2301 = vrot.slane %v1283, 5
      %v2302 = vsel %vm2295, %v2300, %v2301
      %v2303 = vrot.slane %v2246, 5
      %v2304 = vrot.slane %v2303, 4
      %v2305 = vrot.slane %v1253, 5
      %v2306 = vsel %vm2295, %v2304, %v2305
      %v2307 = vrot.slane %v2305, 4
      %v2308 = vrot.slane %v1284, 5
      %v2309 = vsel %vm2295, %v2307, %v2308
      %v2310 = vrot.slane %v2247, 5
      %v2311 = vrot.slane %v2310, 4
      %v2312 = vrot.slane %v1255, 5
      %v2313 = vsel %vm2295, %v2311, %v2312
      %v2314 = vrot.slane %v2312, 4
      %v2315 = vrot.slane %v1285, 5
      %v2316 = vsel %vm2295, %v2314, %v2315
      %v2317 = vrot.slane %v2248, 5
      %v2318 = vrot.slane %v2317, 4
      %v2319 = vrot.slane %v1257, 5
      %v2320 = vsel %vm2295, %v2318, %v2319
      %v2321 = vrot.slane %v2319, 4
      %v2322 = vrot.slane %v1286, 5
      %v2323 = vsel %vm2295, %v2321, %v2322
      %v2324 = vrot.slane %v2249, 5
      %v2325 = vrot.slane %v2324, 4
      %v2326 = vrot.slane %v1259, 5
      %v2327 = vsel %vm2295, %v2325, %v2326
      %v2328 = vrot.slane %v2326, 4
      %v2329 = vrot.slane %v1287, 5
      %v2330 = vsel %vm2295, %v2328, %v2329
      %v2331 = vrot.slane %v2250, 5
      %v2332 = vrot.slane %v2331, 4
      %v2333 = vrot.slane %v1261, 5
      %v2334 = vsel %vm2295, %v2332, %v2333
      %v2335 = vrot.slane %v2333, 4
      %v2336 = vrot.slane %v1288, 5
      %v2337 = vsel %vm2295, %v2335, %v2336
      %v2338 = vrot.slane %v2251, 5
      %v2339 = vrot.slane %v2338, 4
      %v2340 = vrot.slane %v1263, 5
      %v2341 = vsel %vm2295, %v2339, %v2340
      %v2342 = vrot.slane %v2340, 4
      %v2343 = vrot.slane %v1289, 5
      %v2344 = vsel %vm2295, %v2342, %v2343
      %v2345 = vrot.slane %v2252, 5
      %v2346 = vrot.slane %v2345, 4
      %v2347 = vrot.slane %v1265, 5
      %v2348 = vsel %vm2295, %v2346, %v2347
      %v2349 = vrot.slane %v2347, 4
      %v2350 = vrot.slane %v1290, 5
      %v2351 = vsel %vm2295, %v2349, %v2350
      %v2352 = vrot.slane %v2253, 5
      %v2353 = vrot.slane %v2352, 4
      %v2354 = vrot.slane %v1267, 5
      %v2355 = vsel %vm2295, %v2353, %v2354
      %v2356 = vrot.slane %v2354, 4
      %v2357 = vrot.slane %v1291, 5
      %v2358 = vsel %vm2295, %v2356, %v2357
      %v2359 = vrot.slane %v2254, 5
      %v2360 = vrot.slane %v2359, 4
      %v2361 = vrot.slane %v1269, 5
      %v2362 = vsel %vm2295, %v2360, %v2361
      %v2363 = vrot.slane %v2361, 4
      %v2364 = vrot.slane %v1292, 5
      %v2365 = vsel %vm2295, %v2363, %v2364
      %v2366 = vrot.slane %v2255, 5
      %v2367 = vrot.slane %v2366, 4
      %v2368 = vrot.slane %v1271, 5
      %v2369 = vsel %vm2295, %v2367, %v2368
      %v2370 = vrot.slane %v2368, 4
      %v2371 = vrot.slane %v1293, 5
      %v2372 = vsel %vm2295, %v2370, %v2371
      %v2373 = vrot.slane %v2256, 5
      %v2374 = vrot.slane %v2373, 4
      %v2375 = vrot.slane %v1273, 5
      %v2376 = vsel %vm2295, %v2374, %v2375
      %v2377 = vrot.slane %v2375, 4
      %v2378 = vrot.slane %v1294, 5
      %v2379 = vsel %vm2295, %v2377, %v2378
      %v2380 = vrot.slane %v2257, 5
      %v2381 = vrot.slane %v2380, 4
      %v2382 = vrot.slane %v1275, 5
      %v2383 = vsel %vm2295, %v2381, %v2382
      %v2384 = vrot.slane %v2382, 4
      %v2385 = vrot.slane %v1295, 5
      %v2386 = vsel %vm2295, %v2384, %v2385
      %v2387 = vrot.slane %v2258, 5
      %v2388 = vrot.slane %v2387, 4
      %v2389 = vrot.slane %v1277, 5
      %v2390 = vsel %vm2295, %v2388, %v2389
      %v2391 = vrot.slane %v2389, 4
      %v2392 = vrot.slane %v1296, 5
      %v2393 = vsel %vm2295, %v2391, %v2392
      %v2394 = vrot.slane %v2259, 5
      %v2395 = vrot.slane %v2394, 4
      %v2396 = vrot.slane %v1279, 5
      %v2397 = vsel %vm2295, %v2395, %v2396
      %v2398 = vrot.slane %v2396, 4
      %v2399 = vrot.slane %v1297, 5
      %v2400 = vsel %vm2295, %v2398, %v2399
      %v2401 = vrot.slane %v2260, 5
      %v2402 = vrot.slane %v2401, 4
      %v2403 = vrot.slane %v1281, 5
      %v2404 = vsel %vm2295, %v2402, %v2403
      %v2405 = vrot.slane %v2403, 4
      %v2406 = vrot.slane %v1298, 5
      %v2407 = vsel %vm2295, %v2405, %v2406
      %v2408 = vld [vmem:[%s1 + $0x4] sm:$0x3]
      %v2409 = vunpack.c.l.b16 %v2299
      %v2410 = vunpack.c.l.b16 %v2302
      %v2411 = vunpack.c.l.b16 %v2306
      %v2412 = vunpack.c.l.b16 %v2309
      %v2413 = vunpack.c.l.b16 %v2313
      %v2414 = vunpack.c.l.b16 %v2316
      %v2415 = vunpack.c.l.b16 %v2320
      %v2416 = vunpack.c.l.b16 %v2323
      %v2417 = vunpack.c.l.b16 %v2327
      %v2418 = vunpack.c.l.b16 %v2330
      %v2419 = vunpack.c.l.b16 %v2334
      %v2420 = vunpack.c.l.b16 %v2337
      %v2421 = vunpack.c.l.b16 %v2341
      %v2422 = vunpack.c.l.b16 %v2344
      %v2423 = vunpack.c.l.b16 %v2348
      %v2424 = vunpack.c.l.b16 %v2351
      %v2425 = vunpack.c.l.b16 %v2355
      %v2426 = vunpack.c.l.b16 %v2358
      %v2427 = vunpack.c.l.b16 %v2362
      %v2428 = vunpack.c.l.b16 %v2365
      %v2429 = vunpack.c.l.b16 %v2369
      %v2430 = vunpack.c.l.b16 %v2372
      %v2431 = vunpack.c.l.b16 %v2376
      %v2432 = vunpack.c.l.b16 %v2379
      %v2433 = vunpack.c.l.b16 %v2383
      %v2434 = vunpack.c.l.b16 %v2386
      %v2435 = vunpack.c.l.b16 %v2390
      %v2436 = vunpack.c.l.b16 %v2393
      %v2437 = vunpack.c.l.b16 %v2397
      %v2438 = vunpack.c.l.b16 %v2400
      %v2439 = vunpack.c.l.b16 %v2404
      %v2440 = vunpack.c.l.b16 %v2407
      %v2441 = vpack.c.b16 %v2410, %v2409
      %v2442 = vpack.c.b16 %v2412, %v2411
      %v2443 = vpack.c.b16 %v2414, %v2413
      %v2444 = vpack.c.b16 %v2416, %v2415
      %v2445 = vpack.c.b16 %v2418, %v2417
      %v2446 = vpack.c.b16 %v2420, %v2419
      %v2447 = vpack.c.b16 %v2422, %v2421
      %v2448 = vpack.c.b16 %v2424, %v2423
      %v2449 = vpack.c.b16 %v2426, %v2425
      %v2450 = vpack.c.b16 %v2428, %v2427
      %v2451 = vpack.c.b16 %v2430, %v2429
      %v2452 = vpack.c.b16 %v2432, %v2431
      %v2453 = vpack.c.b16 %v2434, %v2433
      %v2454 = vpack.c.b16 %v2436, %v2435
      %v2455 = vpack.c.b16 %v2438, %v2437
      %v2456 = vpack.c.b16 %v2440, %v2439
      %v2458 = vsel %vm1739, %v2441, 0
      %v2461 = vsel %vm1739, %v2442, 0
      %v2464 = vsel %vm1739, %v2443, 0
      %v2467 = vsel %vm1739, %v2444, 0
      %v2470 = vsel %vm1739, %v2445, 0
      %v2473 = vsel %vm1739, %v2446, 0
      %v2476 = vsel %vm1739, %v2447, 0
      %v2479 = vsel %vm1739, %v2448, 0
      %v2482 = vsel %vm1739, %v2449, 0
      %v2485 = vsel %vm1739, %v2450, 0
      %v2488 = vsel %vm1739, %v2451, 0
      %v2491 = vsel %vm1739, %v2452, 0
      %v2494 = vsel %vm1739, %v2453, 0
      %v2497 = vsel %vm1739, %v2454, 0
      %v2500 = vsel %vm1739, %v2455, 0
      %v2503 = vsel %vm1739, %v2456, 0
      %v2506 = vsel %vm1788, %v2408, 0
      %2508 = vmatprep.subr.bf16.mxu0 0
      %2509 = vmatpush1.bf16.msra.mxu0 0
      %2510 = vmatprep.subr.bf16.mxu0 0
      %2511 = vmatpush1.bf16.msra.mxu0 0
      %2512 = vmatprep.subr.bf16.mxu0 0
      %2513 = vmatpush1.bf16.msra.mxu0 0
      %2514 = vmatprep.subr.bf16.mxu0 0
      %2515 = vmatpush1.bf16.msra.mxu0 0
      %2516 = vmatprep.subr.bf16.mxu0 0
      %2517 = vmatpush1.bf16.msra.mxu0 0
      %2518 = vmatprep.subr.bf16.mxu0 0
      %2519 = vmatpush1.bf16.msra.mxu0 0
      %2520 = vmatprep.subr.bf16.mxu0 0
      %2521 = vmatpush1.bf16.msra.mxu0 0
      %2522 = vmatprep.subr.bf16.mxu0 0
      %2523 = vmatpush1.bf16.msra.mxu0 %v2506
      %2524 = vmatprep.subr.bf16.mxu0 0
      %2525 = vmatpush2.bf16.msra.mxu0 0
      %2526 = vmatprep.subr.bf16.mxu0 0
      %2527 = vmatpush2.bf16.msra.mxu0 0
      %2528 = vmatprep.subr.bf16.mxu0 0
      %2529 = vmatpush2.bf16.msra.mxu0 0
      %2530 = vmatprep.subr.bf16.mxu0 0
      %2531 = vmatpush2.bf16.msra.mxu0 0
      %2532 = vmatprep.subr.bf16.mxu0 0
      %2533 = vmatpush2.bf16.msra.mxu0 0
      %2534 = vmatprep.subr.bf16.mxu0 0
      %2535 = vmatpush2.bf16.msra.mxu0 0
      %2536 = vmatprep.subr.bf16.mxu0 0
      %2537 = vmatpush2.bf16.msra.mxu0 0
      %2538 = vmatprep.subr.bf16.mxu0 0
      %2539 = vmatpush2.bf16.msra.mxu0 0
      %2540 = vmatprep.mubr.bf16.mxu0 0
      %2541 = vmatmul.mubr.bf16.gmra.mxu0 %v2458
      %v2542 = vpop.f32.mrf.mxu0
      %v2543 = vadd.f32 0.0, %v2542
      %v2544 = vpop.f32.mrf.mxu0
      %v2545 = vpop.f32.mrf.mxu0
      %v2546 = vadd.f32 0.0, %v2545
      %v2547 = vpop.f32.mrf.mxu0
      %2548 = vmatprep.mubr.bf16.mxu0 0
      %2549 = vmatmul.mubr.bf16.gmra.mxu0 %v2461
      %v2550 = vpop.f32.mrf.mxu0
      %v2551 = vadd.f32 0.0, %v2550
      %v2552 = vpop.f32.mrf.mxu0
      %v2553 = vpop.f32.mrf.mxu0
      %v2554 = vadd.f32 0.0, %v2553
      %v2555 = vpop.f32.mrf.mxu0
      %2556 = vmatprep.mubr.bf16.mxu0 0
      %2557 = vmatmul.mubr.bf16.gmra.mxu0 %v2464
      %v2558 = vpop.f32.mrf.mxu0
      %v2559 = vadd.f32 0.0, %v2558
      %v2560 = vpop.f32.mrf.mxu0
      %v2561 = vpop.f32.mrf.mxu0
      %v2562 = vadd.f32 0.0, %v2561
      %v2563 = vpop.f32.mrf.mxu0
      %2564 = vmatprep.mubr.bf16.mxu0 0
      %2565 = vmatmul.mubr.bf16.gmra.mxu0 %v2467
      %v2566 = vpop.f32.mrf.mxu0
      %v2567 = vadd.f32 0.0, %v2566
      %v2568 = vpop.f32.mrf.mxu0
      %v2569 = vpop.f32.mrf.mxu0
      %v2570 = vadd.f32 0.0, %v2569
      %v2571 = vpop.f32.mrf.mxu0
      %2572 = vmatprep.mubr.bf16.mxu0 0
      %2573 = vmatmul.mubr.bf16.gmra.mxu0 %v2470
      %v2574 = vpop.f32.mrf.mxu0
      %v2575 = vadd.f32 0.0, %v2574
      %v2576 = vpop.f32.mrf.mxu0
      %v2577 = vpop.f32.mrf.mxu0
      %v2578 = vadd.f32 0.0, %v2577
      %v2579 = vpop.f32.mrf.mxu0
      %2580 = vmatprep.mubr.bf16.mxu0 0
      %2581 = vmatmul.mubr.bf16.gmra.mxu0 %v2473
      %v2582 = vpop.f32.mrf.mxu0
      %v2583 = vadd.f32 0.0, %v2582
      %v2584 = vpop.f32.mrf.mxu0
      %v2585 = vpop.f32.mrf.mxu0
      %v2586 = vadd.f32 0.0, %v2585
      %v2587 = vpop.f32.mrf.mxu0
      %2588 = vmatprep.mubr.bf16.mxu0 0
      %2589 = vmatmul.mubr.bf16.gmra.mxu0 %v2476
      %v2590 = vpop.f32.mrf.mxu0
      %v2591 = vadd.f32 0.0, %v2590
      %v2592 = vpop.f32.mrf.mxu0
      %v2593 = vpop.f32.mrf.mxu0
      %v2594 = vadd.f32 0.0, %v2593
      %v2595 = vpop.f32.mrf.mxu0
      %2596 = vmatprep.mubr.bf16.mxu0 0
      %2597 = vmatmul.mubr.bf16.gmra.mxu0 %v2479
      %v2598 = vpop.f32.mrf.mxu0
      %v2599 = vadd.f32 0.0, %v2598
      %v2600 = vpop.f32.mrf.mxu0
      %v2601 = vpop.f32.mrf.mxu0
      %v2602 = vadd.f32 0.0, %v2601
      %v2603 = vpop.f32.mrf.mxu0
      %2604 = vmatprep.mubr.bf16.mxu0 0
      %2605 = vmatmul.mubr.bf16.gmra.mxu0 %v2482
      %v2606 = vpop.f32.mrf.mxu0
      %v2607 = vadd.f32 0.0, %v2606
      %v2608 = vpop.f32.mrf.mxu0
      %v2609 = vpop.f32.mrf.mxu0
      %v2610 = vadd.f32 0.0, %v2609
      %v2611 = vpop.f32.mrf.mxu0
      %2612 = vmatprep.mubr.bf16.mxu0 0
      %2613 = vmatmul.mubr.bf16.gmra.mxu0 %v2485
      %v2614 = vpop.f32.mrf.mxu0
      %v2615 = vadd.f32 0.0, %v2614
      %v2616 = vpop.f32.mrf.mxu0
      %v2617 = vpop.f32.mrf.mxu0
      %v2618 = vadd.f32 0.0, %v2617
      %v2619 = vpop.f32.mrf.mxu0
      %2620 = vmatprep.mubr.bf16.mxu0 0
      %2621 = vmatmul.mubr.bf16.gmra.mxu0 %v2488
      %v2622 = vpop.f32.mrf.mxu0
      %v2623 = vadd.f32 0.0, %v2622
      %v2624 = vpop.f32.mrf.mxu0
      %v2625 = vpop.f32.mrf.mxu0
      %v2626 = vadd.f32 0.0, %v2625
      %v2627 = vpop.f32.mrf.mxu0
      %2628 = vmatprep.mubr.bf16.mxu0 0
      %2629 = vmatmul.mubr.bf16.gmra.mxu0 %v2491
      %v2630 = vpop.f32.mrf.mxu0
      %v2631 = vadd.f32 0.0, %v2630
      %v2632 = vpop.f32.mrf.mxu0
      %v2633 = vpop.f32.mrf.mxu0
      %v2634 = vadd.f32 0.0, %v2633
      %v2635 = vpop.f32.mrf.mxu0
      %2636 = vmatprep.mubr.bf16.mxu0 0
      %2637 = vmatmul.mubr.bf16.gmra.mxu0 %v2494
      %v2638 = vpop.f32.mrf.mxu0
      %v2639 = vadd.f32 0.0, %v2638
      %v2640 = vpop.f32.mrf.mxu0
      %v2641 = vpop.f32.mrf.mxu0
      %v2642 = vadd.f32 0.0, %v2641
      %v2643 = vpop.f32.mrf.mxu0
      %2644 = vmatprep.mubr.bf16.mxu0 0
      %2645 = vmatmul.mubr.bf16.gmra.mxu0 %v2497
      %v2646 = vpop.f32.mrf.mxu0
      %v2647 = vadd.f32 0.0, %v2646
      %v2648 = vpop.f32.mrf.mxu0
      %v2649 = vpop.f32.mrf.mxu0
      %v2650 = vadd.f32 0.0, %v2649
      %v2651 = vpop.f32.mrf.mxu0
      %2652 = vmatprep.mubr.bf16.mxu0 0
      %2653 = vmatmul.mubr.bf16.gmra.mxu0 %v2500
      %v2654 = vpop.f32.mrf.mxu0
      %v2655 = vadd.f32 0.0, %v2654
      %v2656 = vpop.f32.mrf.mxu0
      %v2657 = vpop.f32.mrf.mxu0
      %v2658 = vadd.f32 0.0, %v2657
      %v2659 = vpop.f32.mrf.mxu0
      %2660 = vmatprep.mubr.bf16.mxu0 0
      %2661 = vmatmul.mubr.bf16.gmra.mxu0 %v2503
      %v2662 = vpop.f32.mrf.mxu0
      %v2663 = vadd.f32 0.0, %v2662
      %v2664 = vpop.f32.mrf.mxu0
      %v2665 = vpop.f32.mrf.mxu0
      %v2666 = vadd.f32 0.0, %v2665
      %v2667 = vpop.f32.mrf.mxu0
      %2668 = vdwg.mxu0
      %v2669 = vadd.f32 %v2119, %v2543
      %v2670 = vadd.f32 %v2122, %v2546
      %v2671 = vadd.f32 %v2127, %v2551
      %v2672 = vadd.f32 %v2130, %v2554
      %v2673 = vadd.f32 %v2135, %v2559
      %v2674 = vadd.f32 %v2138, %v2562
      %v2675 = vadd.f32 %v2143, %v2567
      %v2676 = vadd.f32 %v2146, %v2570
      %v2677 = vadd.f32 %v2151, %v2575
      %v2678 = vadd.f32 %v2154, %v2578
      %v2679 = vadd.f32 %v2159, %v2583
      %v2680 = vadd.f32 %v2162, %v2586
      %v2681 = vadd.f32 %v2167, %v2591
      %v2682 = vadd.f32 %v2170, %v2594
      %v2683 = vadd.f32 %v2175, %v2599
      %v2684 = vadd.f32 %v2178, %v2602
      %v2685 = vadd.f32 %v2183, %v2607
      %v2686 = vadd.f32 %v2186, %v2610
      %v2687 = vadd.f32 %v2191, %v2615
      %v2688 = vadd.f32 %v2194, %v2618
      %v2689 = vadd.f32 %v2199, %v2623
      %v2690 = vadd.f32 %v2202, %v2626
      %v2691 = vadd.f32 %v2207, %v2631
      %v2692 = vadd.f32 %v2210, %v2634
      %v2693 = vadd.f32 %v2215, %v2639
      %v2694 = vadd.f32 %v2218, %v2642
      %v2695 = vadd.f32 %v2223, %v2647
      %v2696 = vadd.f32 %v2226, %v2650
      %v2697 = vadd.f32 %v2231, %v2655
      %v2698 = vadd.f32 %v2234, %v2658
      %v2699 = vadd.f32 %v2239, %v2663
      %v2700 = vadd.f32 %v2242, %v2666
      %s2701 = scalar_lea.vmem [#allocation2], 12
      %v2702 = vld [vmem:[%s2701] sm:$0xf]
      %v2703 = vld [vmem:[%s2701 + $0x4] sm:$0xf]
      %v2704 = vld [vmem:[%s2701 + $0xc] sm:$0xf]
      %v2705 = vld [vmem:[%s2701 + $0x10] sm:$0xf]
      %v2706 = vld [vmem:[%s2701 + $0x18] sm:$0xf]
      %v2707 = vld [vmem:[%s2701 + $0x1c] sm:$0xf]
      %v2708 = vld [vmem:[%s2701 + $0x24] sm:$0xf]
      %v2709 = vld [vmem:[%s2701 + $0x28] sm:$0xf]
      %v2710 = vld [vmem:[%s2701 + $0x30] sm:$0xf]
      %v2711 = vld [vmem:[%s2701 + $0x34] sm:$0xf]
      %v2712 = vld [vmem:[%s2701 + $0x3c] sm:$0xf]
      %v2713 = vld [vmem:[%s2701 + $0x40] sm:$0xf]
      %v2714 = vld [vmem:[%s2701 + $0x48] sm:$0xf]
      %v2715 = vld [vmem:[%s2701 + $0x4c] sm:$0xf]
      %v2716 = vld [vmem:[%s2701 + $0x54] sm:$0xf]
      %v2717 = vld [vmem:[%s2701 + $0x58] sm:$0xf]
      %v2718 = vld [vmem:[%s2701 + $0x60] sm:$0xf]
      %v2719 = vld [vmem:[%s2701 + $0x64] sm:$0xf]
      %v2720 = vld [vmem:[%s2701 + $0x6c] sm:$0xf]
      %v2721 = vld [vmem:[%s2701 + $0x70] sm:$0xf]
      %v2722 = vld [vmem:[%s2701 + $0x78] sm:$0xf]
      %v2723 = vld [vmem:[%s2701 + $0x7c] sm:$0xf]
      %v2724 = vld [vmem:[%s2701 + $0x84] sm:$0xf]
      %v2725 = vld [vmem:[%s2701 + $0x88] sm:$0xf]
      %v2726 = vld [vmem:[%s2701 + $0x90] sm:$0xf]
      %v2727 = vld [vmem:[%s2701 + $0x94] sm:$0xf]
      %v2728 = vld [vmem:[%s2701 + $0x9c] sm:$0xf]
      %v2729 = vld [vmem:[%s2701 + $0xa0] sm:$0xf]
      %v2730 = vld [vmem:[%s2701 + $0xa8] sm:$0xf]
      %v2731 = vld [vmem:[%s2701 + $0xac] sm:$0xf]
      %v2732 = vld [vmem:[%s2701 + $0xb4] sm:$0xf]
      %v2733 = vld [vmem:[%s2701 + $0xb8] sm:$0xf]
      %v2734 = vld [vmem:[%s1 + $0x4] sm:$0xc]
      %v2767 = vunpack.c.l.b16 %v2702
      %v2768 = vunpack.c.l.b16 %v2703
      %v2769 = vunpack.c.l.b16 %v2704
      %v2770 = vunpack.c.l.b16 %v2705
      %v2771 = vunpack.c.l.b16 %v2706
      %v2772 = vunpack.c.l.b16 %v2707
      %v2773 = vunpack.c.l.b16 %v2708
      %v2774 = vunpack.c.l.b16 %v2709
      %v2775 = vunpack.c.l.b16 %v2710
      %v2776 = vunpack.c.l.b16 %v2711
      %v2777 = vunpack.c.l.b16 %v2712
      %v2778 = vunpack.c.l.b16 %v2713
      %v2779 = vunpack.c.l.b16 %v2714
      %v2780 = vunpack.c.l.b16 %v2715
      %v2781 = vunpack.c.l.b16 %v2716
      %v2782 = vunpack.c.l.b16 %v2717
      %v2783 = vunpack.c.l.b16 %v2718
      %v2784 = vunpack.c.l.b16 %v2719
      %v2785 = vunpack.c.l.b16 %v2720
      %v2786 = vunpack.c.l.b16 %v2721
      %v2787 = vunpack.c.l.b16 %v2722
      %v2788 = vunpack.c.l.b16 %v2723
      %v2789 = vunpack.c.l.b16 %v2724
      %v2790 = vunpack.c.l.b16 %v2725
      %v2791 = vunpack.c.l.b16 %v2726
      %v2792 = vunpack.c.l.b16 %v2727
      %v2793 = vunpack.c.l.b16 %v2728
      %v2794 = vunpack.c.l.b16 %v2729
      %v2795 = vunpack.c.l.b16 %v2730
      %v2796 = vunpack.c.l.b16 %v2731
      %v2797 = vunpack.c.l.b16 %v2732
      %v2798 = vunpack.c.l.b16 %v2733
      %v2799 = vpack.c.b16 %v2768, %v2767
      %v2800 = vpack.c.b16 %v2770, %v2769
      %v2801 = vpack.c.b16 %v2772, %v2771
      %v2802 = vpack.c.b16 %v2774, %v2773
      %v2803 = vpack.c.b16 %v2776, %v2775
      %v2804 = vpack.c.b16 %v2778, %v2777
      %v2805 = vpack.c.b16 %v2780, %v2779
      %v2806 = vpack.c.b16 %v2782, %v2781
      %v2807 = vpack.c.b16 %v2784, %v2783
      %v2808 = vpack.c.b16 %v2786, %v2785
      %v2809 = vpack.c.b16 %v2788, %v2787
      %v2810 = vpack.c.b16 %v2790, %v2789
      %v2811 = vpack.c.b16 %v2792, %v2791
      %v2812 = vpack.c.b16 %v2794, %v2793
      %v2813 = vpack.c.b16 %v2796, %v2795
      %v2814 = vpack.c.b16 %v2798, %v2797
      %v2816 = vunpack.c.l.b16 %v2734
      %v2817 = vpack.c.b16 %v2816, %v2816
      %v2818 = vrot.slane %v2817, 2
      %v2820 = vsel %vm1739, %v2799, 0
      %v2823 = vsel %vm1739, %v2800, 0
      %v2826 = vsel %vm1739, %v2801, 0
      %v2829 = vsel %vm1739, %v2802, 0
      %v2832 = vsel %vm1739, %v2803, 0
      %v2835 = vsel %vm1739, %v2804, 0
      %v2838 = vsel %vm1739, %v2805, 0
      %v2841 = vsel %vm1739, %v2806, 0
      %v2844 = vsel %vm1739, %v2807, 0
      %v2847 = vsel %vm1739, %v2808, 0
      %v2850 = vsel %vm1739, %v2809, 0
      %v2853 = vsel %vm1739, %v2810, 0
      %v2856 = vsel %vm1739, %v2811, 0
      %v2859 = vsel %vm1739, %v2812, 0
      %v2862 = vsel %vm1739, %v2813, 0
      %v2865 = vsel %vm1739, %v2814, 0
      %v2868 = vsel %vm1788, %v2818, 0
      %2870 = vmatprep.subr.bf16.mxu0 0
      %2871 = vmatpush1.bf16.msra.mxu0 0
      %2872 = vmatprep.subr.bf16.mxu0 0
      %2873 = vmatpush1.bf16.msra.mxu0 0
      %2874 = vmatprep.subr.bf16.mxu0 0
      %2875 = vmatpush1.bf16.msra.mxu0 0
      %2876 = vmatprep.subr.bf16.mxu0 0
      %2877 = vmatpush1.bf16.msra.mxu0 0
      %2878 = vmatprep.subr.bf16.mxu0 0
      %2879 = vmatpush1.bf16.msra.mxu0 0
      %2880 = vmatprep.subr.bf16.mxu0 0
      %2881 = vmatpush1.bf16.msra.mxu0 0
      %2882 = vmatprep.subr.bf16.mxu0 0
      %2883 = vmatpush1.bf16.msra.mxu0 0
      %2884 = vmatprep.subr.bf16.mxu0 0
      %2885 = vmatpush1.bf16.msra.mxu0 %v2868
      %2886 = vmatprep.subr.bf16.mxu0 0
      %2887 = vmatpush2.bf16.msra.mxu0 0
      %2888 = vmatprep.subr.bf16.mxu0 0
      %2889 = vmatpush2.bf16.msra.mxu0 0
      %2890 = vmatprep.subr.bf16.mxu0 0
      %2891 = vmatpush2.bf16.msra.mxu0 0
      %2892 = vmatprep.subr.bf16.mxu0 0
      %2893 = vmatpush2.bf16.msra.mxu0 0
      %2894 = vmatprep.subr.bf16.mxu0 0
      %2895 = vmatpush2.bf16.msra.mxu0 0
      %2896 = vmatprep.subr.bf16.mxu0 0
      %2897 = vmatpush2.bf16.msra.mxu0 0
      %2898 = vmatprep.subr.bf16.mxu0 0
      %2899 = vmatpush2.bf16.msra.mxu0 0
      %2900 = vmatprep.subr.bf16.mxu0 0
      %2901 = vmatpush2.bf16.msra.mxu0 0
      %2902 = vmatprep.mubr.bf16.mxu0 0
      %2903 = vmatmul.mubr.bf16.gmra.mxu0 %v2820
      %v2904 = vpop.f32.mrf.mxu0
      %v2905 = vadd.f32 0.0, %v2904
      %v2906 = vpop.f32.mrf.mxu0
      %v2907 = vpop.f32.mrf.mxu0
      %v2908 = vadd.f32 0.0, %v2907
      %v2909 = vpop.f32.mrf.mxu0
      %2910 = vmatprep.mubr.bf16.mxu0 0
      %2911 = vmatmul.mubr.bf16.gmra.mxu0 %v2823
      %v2912 = vpop.f32.mrf.mxu0
      %v2913 = vadd.f32 0.0, %v2912
      %v2914 = vpop.f32.mrf.mxu0
      %v2915 = vpop.f32.mrf.mxu0
      %v2916 = vadd.f32 0.0, %v2915
      %v2917 = vpop.f32.mrf.mxu0
      %2918 = vmatprep.mubr.bf16.mxu0 0
      %2919 = vmatmul.mubr.bf16.gmra.mxu0 %v2826
      %v2920 = vpop.f32.mrf.mxu0
      %v2921 = vadd.f32 0.0, %v2920
      %v2922 = vpop.f32.mrf.mxu0
      %v2923 = vpop.f32.mrf.mxu0
      %v2924 = vadd.f32 0.0, %v2923
      %v2925 = vpop.f32.mrf.mxu0
      %2926 = vmatprep.mubr.bf16.mxu0 0
      %2927 = vmatmul.mubr.bf16.gmra.mxu0 %v2829
      %v2928 = vpop.f32.mrf.mxu0
      %v2929 = vadd.f32 0.0, %v2928
      %v2930 = vpop.f32.mrf.mxu0
      %v2931 = vpop.f32.mrf.mxu0
      %v2932 = vadd.f32 0.0, %v2931
      %v2933 = vpop.f32.mrf.mxu0
      %2934 = vmatprep.mubr.bf16.mxu0 0
      %2935 = vmatmul.mubr.bf16.gmra.mxu0 %v2832
      %v2936 = vpop.f32.mrf.mxu0
      %v2937 = vadd.f32 0.0, %v2936
      %v2938 = vpop.f32.mrf.mxu0
      %v2939 = vpop.f32.mrf.mxu0
      %v2940 = vadd.f32 0.0, %v2939
      %v2941 = vpop.f32.mrf.mxu0
      %2942 = vmatprep.mubr.bf16.mxu0 0
      %2943 = vmatmul.mubr.bf16.gmra.mxu0 %v2835
      %v2944 = vpop.f32.mrf.mxu0
      %v2945 = vadd.f32 0.0, %v2944
      %v2946 = vpop.f32.mrf.mxu0
      %v2947 = vpop.f32.mrf.mxu0
      %v2948 = vadd.f32 0.0, %v2947
      %v2949 = vpop.f32.mrf.mxu0
      %2950 = vmatprep.mubr.bf16.mxu0 0
      %2951 = vmatmul.mubr.bf16.gmra.mxu0 %v2838
      %v2952 = vpop.f32.mrf.mxu0
      %v2953 = vadd.f32 0.0, %v2952
      %v2954 = vpop.f32.mrf.mxu0
      %v2955 = vpop.f32.mrf.mxu0
      %v2956 = vadd.f32 0.0, %v2955
      %v2957 = vpop.f32.mrf.mxu0
      %2958 = vmatprep.mubr.bf16.mxu0 0
      %2959 = vmatmul.mubr.bf16.gmra.mxu0 %v2841
      %v2960 = vpop.f32.mrf.mxu0
      %v2961 = vadd.f32 0.0, %v2960
      %v2962 = vpop.f32.mrf.mxu0
      %v2963 = vpop.f32.mrf.mxu0
      %v2964 = vadd.f32 0.0, %v2963
      %v2965 = vpop.f32.mrf.mxu0
      %2966 = vmatprep.mubr.bf16.mxu0 0
      %2967 = vmatmul.mubr.bf16.gmra.mxu0 %v2844
      %v2968 = vpop.f32.mrf.mxu0
      %v2969 = vadd.f32 0.0, %v2968
      %v2970 = vpop.f32.mrf.mxu0
      %v2971 = vpop.f32.mrf.mxu0
      %v2972 = vadd.f32 0.0, %v2971
      %v2973 = vpop.f32.mrf.mxu0
      %2974 = vmatprep.mubr.bf16.mxu0 0
      %2975 = vmatmul.mubr.bf16.gmra.mxu0 %v2847
      %v2976 = vpop.f32.mrf.mxu0
      %v2977 = vadd.f32 0.0, %v2976
      %v2978 = vpop.f32.mrf.mxu0
      %v2979 = vpop.f32.mrf.mxu0
      %v2980 = vadd.f32 0.0, %v2979
      %v2981 = vpop.f32.mrf.mxu0
      %2982 = vmatprep.mubr.bf16.mxu0 0
      %2983 = vmatmul.mubr.bf16.gmra.mxu0 %v2850
      %v2984 = vpop.f32.mrf.mxu0
      %v2985 = vadd.f32 0.0, %v2984
      %v2986 = vpop.f32.mrf.mxu0
      %v2987 = vpop.f32.mrf.mxu0
      %v2988 = vadd.f32 0.0, %v2987
      %v2989 = vpop.f32.mrf.mxu0
      %2990 = vmatprep.mubr.bf16.mxu0 0
      %2991 = vmatmul.mubr.bf16.gmra.mxu0 %v2853
      %v2992 = vpop.f32.mrf.mxu0
      %v2993 = vadd.f32 0.0, %v2992
      %v2994 = vpop.f32.mrf.mxu0
      %v2995 = vpop.f32.mrf.mxu0
      %v2996 = vadd.f32 0.0, %v2995
      %v2997 = vpop.f32.mrf.mxu0
      %2998 = vmatprep.mubr.bf16.mxu0 0
      %2999 = vmatmul.mubr.bf16.gmra.mxu0 %v2856
      %v3000 = vpop.f32.mrf.mxu0
      %v3001 = vadd.f32 0.0, %v3000
      %v3002 = vpop.f32.mrf.mxu0
      %v3003 = vpop.f32.mrf.mxu0
      %v3004 = vadd.f32 0.0, %v3003
      %v3005 = vpop.f32.mrf.mxu0
      %3006 = vmatprep.mubr.bf16.mxu0 0
      %3007 = vmatmul.mubr.bf16.gmra.mxu0 %v2859
      %v3008 = vpop.f32.mrf.mxu0
      %v3009 = vadd.f32 0.0, %v3008
      %v3010 = vpop.f32.mrf.mxu0
      %v3011 = vpop.f32.mrf.mxu0
      %v3012 = vadd.f32 0.0, %v3011
      %v3013 = vpop.f32.mrf.mxu0
      %3014 = vmatprep.mubr.bf16.mxu0 0
      %3015 = vmatmul.mubr.bf16.gmra.mxu0 %v2862
      %v3016 = vpop.f32.mrf.mxu0
      %v3017 = vadd.f32 0.0, %v3016
      %v3018 = vpop.f32.mrf.mxu0
      %v3019 = vpop.f32.mrf.mxu0
      %v3020 = vadd.f32 0.0, %v3019
      %v3021 = vpop.f32.mrf.mxu0
      %3022 = vmatprep.mubr.bf16.mxu0 0
      %3023 = vmatmul.mubr.bf16.gmra.mxu0 %v2865
      %v3024 = vpop.f32.mrf.mxu0
      %v3025 = vadd.f32 0.0, %v3024
      %v3026 = vpop.f32.mrf.mxu0
      %v3027 = vpop.f32.mrf.mxu0
      %v3028 = vadd.f32 0.0, %v3027
      %v3029 = vpop.f32.mrf.mxu0
      %3030 = vdwg.mxu0
      %v3031 = vadd.f32 %v2669, %v2905
      %v3032 = vadd.f32 %v2670, %v2908
      %v3033 = vadd.f32 %v2671, %v2913
      %v3034 = vadd.f32 %v2672, %v2916
      %v3035 = vadd.f32 %v2673, %v2921
      %v3036 = vadd.f32 %v2674, %v2924
      %v3037 = vadd.f32 %v2675, %v2929
      %v3038 = vadd.f32 %v2676, %v2932
      %v3039 = vadd.f32 %v2677, %v2937
      %v3040 = vadd.f32 %v2678, %v2940
      %v3041 = vadd.f32 %v2679, %v2945
      %v3042 = vadd.f32 %v2680, %v2948
      %v3043 = vadd.f32 %v2681, %v2953
      %v3044 = vadd.f32 %v2682, %v2956
      %v3045 = vadd.f32 %v2683, %v2961
      %v3046 = vadd.f32 %v2684, %v2964
      %v3047 = vadd.f32 %v2685, %v2969
      %v3048 = vadd.f32 %v2686, %v2972
      %v3049 = vadd.f32 %v2687, %v2977
      %v3050 = vadd.f32 %v2688, %v2980
      %v3051 = vadd.f32 %v2689, %v2985
      %v3052 = vadd.f32 %v2690, %v2988
      %v3053 = vadd.f32 %v2691, %v2993
      %v3054 = vadd.f32 %v2692, %v2996
      %v3055 = vadd.f32 %v2693, %v3001
      %v3056 = vadd.f32 %v2694, %v3004
      %v3057 = vadd.f32 %v2695, %v3009
      %v3058 = vadd.f32 %v2696, %v3012
      %v3059 = vadd.f32 %v2697, %v3017
      %v3060 = vadd.f32 %v2698, %v3020
      %v3061 = vadd.f32 %v2699, %v3025
      %v3062 = vadd.f32 %v2700, %v3028
      %v3063 = vld [vmem:[%s2701] sm:$0xf]
      %v3064 = vld [vmem:[%s2701 + $0x4] sm:$0xf]
      %v3065 = vld [vmem:[%s2701 + $0x8] sm:$0x1]
      %v3066 = vld [vmem:[%s2701 + $0xc] sm:$0xf]
      %v3067 = vld [vmem:[%s2701 + $0x10] sm:$0xf]
      %v3068 = vld [vmem:[%s2701 + $0x14] sm:$0x1]
      %v3069 = vld [vmem:[%s2701 + $0x18] sm:$0xf]
      %v3070 = vld [vmem:[%s2701 + $0x1c] sm:$0xf]
      %v3071 = vld [vmem:[%s2701 + $0x20] sm:$0x1]
      %v3072 = vld [vmem:[%s2701 + $0x24] sm:$0xf]
      %v3073 = vld [vmem:[%s2701 + $0x28] sm:$0xf]
      %v3074 = vld [vmem:[%s2701 + $0x2c] sm:$0x1]
      %v3075 = vld [vmem:[%s2701 + $0x30] sm:$0xf]
      %v3076 = vld [vmem:[%s2701 + $0x34] sm:$0xf]
      %v3077 = vld [vmem:[%s2701 + $0x38] sm:$0x1]
      %v3078 = vld [vmem:[%s2701 + $0x3c] sm:$0xf]
      %v3079 = vld [vmem:[%s2701 + $0x40] sm:$0xf]
      %v3080 = vld [vmem:[%s2701 + $0x44] sm:$0x1]
      %v3081 = vld [vmem:[%s2701 + $0x48] sm:$0xf]
      %v3082 = vld [vmem:[%s2701 + $0x4c] sm:$0xf]
      %v3083 = vld [vmem:[%s2701 + $0x50] sm:$0x1]
      %v3084 = vld [vmem:[%s2701 + $0x54] sm:$0xf]
      %v3085 = vld [vmem:[%s2701 + $0x58] sm:$0xf]
      %v3086 = vld [vmem:[%s2701 + $0x5c] sm:$0x1]
      %v3087 = vld [vmem:[%s2701 + $0x60] sm:$0xf]
      %v3088 = vld [vmem:[%s2701 + $0x64] sm:$0xf]
      %v3089 = vld [vmem:[%s2701 + $0x68] sm:$0x1]
      %v3090 = vld [vmem:[%s2701 + $0x6c] sm:$0xf]
      %v3091 = vld [vmem:[%s2701 + $0x70] sm:$0xf]
      %v3092 = vld [vmem:[%s2701 + $0x74] sm:$0x1]
      %v3093 = vld [vmem:[%s2701 + $0x78] sm:$0xf]
      %v3094 = vld [vmem:[%s2701 + $0x7c] sm:$0xf]
      %v3095 = vld [vmem:[%s2701 + $0x80] sm:$0x1]
      %v3096 = vld [vmem:[%s2701 + $0x84] sm:$0xf]
      %v3097 = vld [vmem:[%s2701 + $0x88] sm:$0xf]
      %v3098 = vld [vmem:[%s2701 + $0x8c] sm:$0x1]
      %v3099 = vld [vmem:[%s2701 + $0x90] sm:$0xf]
      %v3100 = vld [vmem:[%s2701 + $0x94] sm:$0xf]
      %v3101 = vld [vmem:[%s2701 + $0x98] sm:$0x1]
      %v3102 = vld [vmem:[%s2701 + $0x9c] sm:$0xf]
      %v3103 = vld [vmem:[%s2701 + $0xa0] sm:$0xf]
      %v3104 = vld [vmem:[%s2701 + $0xa4] sm:$0x1]
      %v3105 = vld [vmem:[%s2701 + $0xa8] sm:$0xf]
      %v3106 = vld [vmem:[%s2701 + $0xac] sm:$0xf]
      %v3107 = vld [vmem:[%s2701 + $0xb0] sm:$0x1]
      %v3108 = vld [vmem:[%s2701 + $0xb4] sm:$0xf]
      %v3109 = vld [vmem:[%s2701 + $0xb8] sm:$0xf]
      %v3110 = vld [vmem:[%s2701 + $0xbc] sm:$0x1]
      %v3112 = vshrl.u32 %v3063, 16
      %v3114 = vrot.slane %v3112, 4
      %v3115 = vshll.u32 %v3063, 16
      %v3117 = vrot.slane %v3115, 5
      %v3118 = vor.u32 %v3114, %v3117
      %v3119 = vrot.slane %v3118, 4
      %v3121 = vshll.u32 %v3064, 16
      %v3123 = vrot.slane %v3121, 5
      %v3124 = vsel %vm1301, %v3119, %v3123
      %v3125 = vshrl.u32 %v3064, 16
      %v3127 = vrot.slane %v3125, 4
      %v3128 = vor.u32 %v3127, %v3123
      %v3129 = vrot.slane %v3128, 4
      %v3131 = vshll.u32 %v3065, 16
      %v3133 = vrot.slane %v3131, 5
      %v3134 = vsel %vm1301, %v3129, %v3133
      %v3136 = vshrl.u32 %v3066, 16
      %v3138 = vrot.slane %v3136, 4
      %v3139 = vshll.u32 %v3066, 16
      %v3141 = vrot.slane %v3139, 5
      %v3142 = vor.u32 %v3138, %v3141
      %v3143 = vrot.slane %v3142, 4
      %v3145 = vshll.u32 %v3067, 16
      %v3147 = vrot.slane %v3145, 5
      %v3148 = vsel %vm1301, %v3143, %v3147
      %v3149 = vshrl.u32 %v3067, 16
      %v3151 = vrot.slane %v3149, 4
      %v3152 = vor.u32 %v3151, %v3147
      %v3153 = vrot.slane %v3152, 4
      %v3155 = vshll.u32 %v3068, 16
      %v3157 = vrot.slane %v3155, 5
      %v3158 = vsel %vm1301, %v3153, %v3157
      %v3160 = vshrl.u32 %v3069, 16
      %v3162 = vrot.slane %v3160, 4
      %v3163 = vshll.u32 %v3069, 16
      %v3165 = vrot.slane %v3163, 5
      %v3166 = vor.u32 %v3162, %v3165
      %v3167 = vrot.slane %v3166, 4
      %v3169 = vshll.u32 %v3070, 16
      %v3171 = vrot.slane %v3169, 5
      %v3172 = vsel %vm1301, %v3167, %v3171
      %v3173 = vshrl.u32 %v3070, 16
      %v3175 = vrot.slane %v3173, 4
      %v3176 = vor.u32 %v3175, %v3171
      %v3177 = vrot.slane %v3176, 4
      %v3179 = vshll.u32 %v3071, 16
      %v3181 = vrot.slane %v3179, 5
      %v3182 = vsel %vm1301, %v3177, %v3181
      %v3184 = vshrl.u32 %v3072, 16
      %v3186 = vrot.slane %v3184, 4
      %v3187 = vshll.u32 %v3072, 16
      %v3189 = vrot.slane %v3187, 5
      %v3190 = vor.u32 %v3186, %v3189
      %v3191 = vrot.slane %v3190, 4
      %v3193 = vshll.u32 %v3073, 16
      %v3195 = vrot.slane %v3193, 5
      %v3196 = vsel %vm1301, %v3191, %v3195
      %v3197 = vshrl.u32 %v3073, 16
      %v3199 = vrot.slane %v3197, 4
      %v3200 = vor.u32 %v3199, %v3195
      %v3201 = vrot.slane %v3200, 4
      %v3203 = vshll.u32 %v3074, 16
      %v3205 = vrot.slane %v3203, 5
      %v3206 = vsel %vm1301, %v3201, %v3205
      %v3208 = vshrl.u32 %v3075, 16
      %v3210 = vrot.slane %v3208, 4
      %v3211 = vshll.u32 %v3075, 16
      %v3213 = vrot.slane %v3211, 5
      %v3214 = vor.u32 %v3210, %v3213
      %v3215 = vrot.slane %v3214, 4
      %v3217 = vshll.u32 %v3076, 16
      %v3219 = vrot.slane %v3217, 5
      %v3220 = vsel %vm1301, %v3215, %v3219
      %v3221 = vshrl.u32 %v3076, 16
      %v3223 = vrot.slane %v3221, 4
      %v3224 = vor.u32 %v3223, %v3219
      %v3225 = vrot.slane %v3224, 4
      %v3227 = vshll.u32 %v3077, 16
      %v3229 = vrot.slane %v3227, 5
      %v3230 = vsel %vm1301, %v3225, %v3229
      %v3232 = vshrl.u32 %v3078, 16
      %v3234 = vrot.slane %v3232, 4
      %v3235 = vshll.u32 %v3078, 16
      %v3237 = vrot.slane %v3235, 5
      %v3238 = vor.u32 %v3234, %v3237
      %v3239 = vrot.slane %v3238, 4
      %v3241 = vshll.u32 %v3079, 16
      %v3243 = vrot.slane %v3241, 5
      %v3244 = vsel %vm1301, %v3239, %v3243
      %v3245 = vshrl.u32 %v3079, 16
      %v3247 = vrot.slane %v3245, 4
      %v3248 = vor.u32 %v3247, %v3243
      %v3249 = vrot.slane %v3248, 4
      %v3251 = vshll.u32 %v3080, 16
      %v3253 = vrot.slane %v3251, 5
      %v3254 = vsel %vm1301, %v3249, %v3253
      %v3256 = vshrl.u32 %v3081, 16
      %v3258 = vrot.slane %v3256, 4
      %v3259 = vshll.u32 %v3081, 16
      %v3261 = vrot.slane %v3259, 5
      %v3262 = vor.u32 %v3258, %v3261
      %v3263 = vrot.slane %v3262, 4
      %v3265 = vshll.u32 %v3082, 16
      %v3267 = vrot.slane %v3265, 5
      %v3268 = vsel %vm1301, %v3263, %v3267
      %v3269 = vshrl.u32 %v3082, 16
      %v3271 = vrot.slane %v3269, 4
      %v3272 = vor.u32 %v3271, %v3267
      %v3273 = vrot.slane %v3272, 4
      %v3275 = vshll.u32 %v3083, 16
      %v3277 = vrot.slane %v3275, 5
      %v3278 = vsel %vm1301, %v3273, %v3277
      %v3280 = vshrl.u32 %v3084, 16
      %v3282 = vrot.slane %v3280, 4
      %v3283 = vshll.u32 %v3084, 16
      %v3285 = vrot.slane %v3283, 5
      %v3286 = vor.u32 %v3282, %v3285
      %v3287 = vrot.slane %v3286, 4
      %v3289 = vshll.u32 %v3085, 16
      %v3291 = vrot.slane %v3289, 5
      %v3292 = vsel %vm1301, %v3287, %v3291
      %v3293 = vshrl.u32 %v3085, 16
      %v3295 = vrot.slane %v3293, 4
      %v3296 = vor.u32 %v3295, %v3291
      %v3297 = vrot.slane %v3296, 4
      %v3299 = vshll.u32 %v3086, 16
      %v3301 = vrot.slane %v3299, 5
      %v3302 = vsel %vm1301, %v3297, %v3301
      %v3304 = vshrl.u32 %v3087, 16
      %v3306 = vrot.slane %v3304, 4
      %v3307 = vshll.u32 %v3087, 16
      %v3309 = vrot.slane %v3307, 5
      %v3310 = vor.u32 %v3306, %v3309
      %v3311 = vrot.slane %v3310, 4
      %v3313 = vshll.u32 %v3088, 16
      %v3315 = vrot.slane %v3313, 5
      %v3316 = vsel %vm1301, %v3311, %v3315
      %v3317 = vshrl.u32 %v3088, 16
      %v3319 = vrot.slane %v3317, 4
      %v3320 = vor.u32 %v3319, %v3315
      %v3321 = vrot.slane %v3320, 4
      %v3323 = vshll.u32 %v3089, 16
      %v3325 = vrot.slane %v3323, 5
      %v3326 = vsel %vm1301, %v3321, %v3325
      %v3328 = vshrl.u32 %v3090, 16
      %v3330 = vrot.slane %v3328, 4
      %v3331 = vshll.u32 %v3090, 16
      %v3333 = vrot.slane %v3331, 5
      %v3334 = vor.u32 %v3330, %v3333
      %v3335 = vrot.slane %v3334, 4
      %v3337 = vshll.u32 %v3091, 16
      %v3339 = vrot.slane %v3337, 5
      %v3340 = vsel %vm1301, %v3335, %v3339
      %v3341 = vshrl.u32 %v3091, 16
      %v3343 = vrot.slane %v3341, 4
      %v3344 = vor.u32 %v3343, %v3339
      %v3345 = vrot.slane %v3344, 4
      %v3347 = vshll.u32 %v3092, 16
      %v3349 = vrot.slane %v3347, 5
      %v3350 = vsel %vm1301, %v3345, %v3349
      %v3352 = vshrl.u32 %v3093, 16
      %v3354 = vrot.slane %v3352, 4
      %v3355 = vshll.u32 %v3093, 16
      %v3357 = vrot.slane %v3355, 5
      %v3358 = vor.u32 %v3354, %v3357
      %v3359 = vrot.slane %v3358, 4
      %v3361 = vshll.u32 %v3094, 16
      %v3363 = vrot.slane %v3361, 5
      %v3364 = vsel %vm1301, %v3359, %v3363
      %v3365 = vshrl.u32 %v3094, 16
      %v3367 = vrot.slane %v3365, 4
      %v3368 = vor.u32 %v3367, %v3363
      %v3369 = vrot.slane %v3368, 4
      %v3371 = vshll.u32 %v3095, 16
      %v3373 = vrot.slane %v3371, 5
      %v3374 = vsel %vm1301, %v3369, %v3373
      %v3376 = vshrl.u32 %v3096, 16
      %v3378 = vrot.slane %v3376, 4
      %v3379 = vshll.u32 %v3096, 16
      %v3381 = vrot.slane %v3379, 5
      %v3382 = vor.u32 %v3378, %v3381
      %v3383 = vrot.slane %v3382, 4
      %v3385 = vshll.u32 %v3097, 16
      %v3387 = vrot.slane %v3385, 5
      %v3388 = vsel %vm1301, %v3383, %v3387
      %v3389 = vshrl.u32 %v3097, 16
      %v3391 = vrot.slane %v3389, 4
      %v3392 = vor.u32 %v3391, %v3387
      %v3393 = vrot.slane %v3392, 4
      %v3395 = vshll.u32 %v3098, 16
      %v3397 = vrot.slane %v3395, 5
      %v3398 = vsel %vm1301, %v3393, %v3397
      %v3400 = vshrl.u32 %v3099, 16
      %v3402 = vrot.slane %v3400, 4
      %v3403 = vshll.u32 %v3099, 16
      %v3405 = vrot.slane %v3403, 5
      %v3406 = vor.u32 %v3402, %v3405
      %v3407 = vrot.slane %v3406, 4
      %v3409 = vshll.u32 %v3100, 16
      %v3411 = vrot.slane %v3409, 5
      %v3412 = vsel %vm1301, %v3407, %v3411
      %v3413 = vshrl.u32 %v3100, 16
      %v3415 = vrot.slane %v3413, 4
      %v3416 = vor.u32 %v3415, %v3411
      %v3417 = vrot.slane %v3416, 4
      %v3419 = vshll.u32 %v3101, 16
      %v3421 = vrot.slane %v3419, 5
      %v3422 = vsel %vm1301, %v3417, %v3421
      %v3424 = vshrl.u32 %v3102, 16
      %v3426 = vrot.slane %v3424, 4
      %v3427 = vshll.u32 %v3102, 16
      %v3429 = vrot.slane %v3427, 5
      %v3430 = vor.u32 %v3426, %v3429
      %v3431 = vrot.slane %v3430, 4
      %v3433 = vshll.u32 %v3103, 16
      %v3435 = vrot.slane %v3433, 5
      %v3436 = vsel %vm1301, %v3431, %v3435
      %v3437 = vshrl.u32 %v3103, 16
      %v3439 = vrot.slane %v3437, 4
      %v3440 = vor.u32 %v3439, %v3435
      %v3441 = vrot.slane %v3440, 4
      %v3443 = vshll.u32 %v3104, 16
      %v3445 = vrot.slane %v3443, 5
      %v3446 = vsel %vm1301, %v3441, %v3445
      %v3448 = vshrl.u32 %v3105, 16
      %v3450 = vrot.slane %v3448, 4
      %v3451 = vshll.u32 %v3105, 16
      %v3453 = vrot.slane %v3451, 5
      %v3454 = vor.u32 %v3450, %v3453
      %v3455 = vrot.slane %v3454, 4
      %v3457 = vshll.u32 %v3106, 16
      %v3459 = vrot.slane %v3457, 5
      %v3460 = vsel %vm1301, %v3455, %v3459
      %v3461 = vshrl.u32 %v3106, 16
      %v3463 = vrot.slane %v3461, 4
      %v3464 = vor.u32 %v3463, %v3459
      %v3465 = vrot.slane %v3464, 4
      %v3467 = vshll.u32 %v3107, 16
      %v3469 = vrot.slane %v3467, 5
      %v3470 = vsel %vm1301, %v3465, %v3469
      %v3472 = vshrl.u32 %v3108, 16
      %v3474 = vrot.slane %v3472, 4
      %v3475 = vshll.u32 %v3108, 16
      %v3477 = vrot.slane %v3475, 5
      %v3478 = vor.u32 %v3474, %v3477
      %v3479 = vrot.slane %v3478, 4
      %v3481 = vshll.u32 %v3109, 16
      %v3483 = vrot.slane %v3481, 5
      %v3484 = vsel %vm1301, %v3479, %v3483
      %v3485 = vshrl.u32 %v3109, 16
      %v3487 = vrot.slane %v3485, 4
      %v3488 = vor.u32 %v3487, %v3483
      %v3489 = vrot.slane %v3488, 4
      %v3491 = vshll.u32 %v3110, 16
      %v3493 = vrot.slane %v3491, 5
      %v3494 = vsel %vm1301, %v3489, %v3493
      %v3495 = vld [vmem:[%s1 + $0x8] sm:$0x3]
      %v3496 = vunpack.c.l.b16 %v3124
      %v3497 = vunpack.c.l.b16 %v3134
      %v3498 = vunpack.c.l.b16 %v3148
      %v3499 = vunpack.c.l.b16 %v3158
      %v3500 = vunpack.c.l.b16 %v3172
      %v3501 = vunpack.c.l.b16 %v3182
      %v3502 = vunpack.c.l.b16 %v3196
      %v3503 = vunpack.c.l.b16 %v3206
      %v3504 = vunpack.c.l.b16 %v3220
      %v3505 = vunpack.c.l.b16 %v3230
      %v3506 = vunpack.c.l.b16 %v3244
      %v3507 = vunpack.c.l.b16 %v3254
      %v3508 = vunpack.c.l.b16 %v3268
      %v3509 = vunpack.c.l.b16 %v3278
      %v3510 = vunpack.c.l.b16 %v3292
      %v3511 = vunpack.c.l.b16 %v3302
      %v3512 = vunpack.c.l.b16 %v3316
      %v3513 = vunpack.c.l.b16 %v3326
      %v3514 = vunpack.c.l.b16 %v3340
      %v3515 = vunpack.c.l.b16 %v3350
      %v3516 = vunpack.c.l.b16 %v3364
      %v3517 = vunpack.c.l.b16 %v3374
      %v3518 = vunpack.c.l.b16 %v3388
      %v3519 = vunpack.c.l.b16 %v3398
      %v3520 = vunpack.c.l.b16 %v3412
      %v3521 = vunpack.c.l.b16 %v3422
      %v3522 = vunpack.c.l.b16 %v3436
      %v3523 = vunpack.c.l.b16 %v3446
      %v3524 = vunpack.c.l.b16 %v3460
      %v3525 = vunpack.c.l.b16 %v3470
      %v3526 = vunpack.c.l.b16 %v3484
      %v3527 = vunpack.c.l.b16 %v3494
      %v3528 = vpack.c.b16 %v3497, %v3496
      %v3529 = vpack.c.b16 %v3499, %v3498
      %v3530 = vpack.c.b16 %v3501, %v3500
      %v3531 = vpack.c.b16 %v3503, %v3502
      %v3532 = vpack.c.b16 %v3505, %v3504
      %v3533 = vpack.c.b16 %v3507, %v3506
      %v3534 = vpack.c.b16 %v3509, %v3508
      %v3535 = vpack.c.b16 %v3511, %v3510
      %v3536 = vpack.c.b16 %v3513, %v3512
      %v3537 = vpack.c.b16 %v3515, %v3514
      %v3538 = vpack.c.b16 %v3517, %v3516
      %v3539 = vpack.c.b16 %v3519, %v3518
      %v3540 = vpack.c.b16 %v3521, %v3520
      %v3541 = vpack.c.b16 %v3523, %v3522
      %v3542 = vpack.c.b16 %v3525, %v3524
      %v3543 = vpack.c.b16 %v3527, %v3526
      %v3545 = vsel %vm1739, %v3528, 0
      %v3548 = vsel %vm1739, %v3529, 0
      %v3551 = vsel %vm1739, %v3530, 0
      %v3554 = vsel %vm1739, %v3531, 0
      %v3557 = vsel %vm1739, %v3532, 0
      %v3560 = vsel %vm1739, %v3533, 0
      %v3563 = vsel %vm1739, %v3534, 0
      %v3566 = vsel %vm1739, %v3535, 0
      %v3569 = vsel %vm1739, %v3536, 0
      %v3572 = vsel %vm1739, %v3537, 0
      %v3575 = vsel %vm1739, %v3538, 0
      %v3578 = vsel %vm1739, %v3539, 0
      %v3581 = vsel %vm1739, %v3540, 0
      %v3584 = vsel %vm1739, %v3541, 0
      %v3587 = vsel %vm1739, %v3542, 0
      %v3590 = vsel %vm1739, %v3543, 0
      %v3593 = vsel %vm1788, %v3495, 0
      %3595 = vmatprep.subr.bf16.mxu0 0
      %3596 = vmatpush1.bf16.msra.mxu0 0
      %3597 = vmatprep.subr.bf16.mxu0 0
      %3598 = vmatpush1.bf16.msra.mxu0 0
      %3599 = vmatprep.subr.bf16.mxu0 0
      %3600 = vmatpush1.bf16.msra.mxu0 0
      %3601 = vmatprep.subr.bf16.mxu0 0
      %3602 = vmatpush1.bf16.msra.mxu0 0
      %3603 = vmatprep.subr.bf16.mxu0 0
      %3604 = vmatpush1.bf16.msra.mxu0 0
      %3605 = vmatprep.subr.bf16.mxu0 0
      %3606 = vmatpush1.bf16.msra.mxu0 0
      %3607 = vmatprep.subr.bf16.mxu0 0
      %3608 = vmatpush1.bf16.msra.mxu0 0
      %3609 = vmatprep.subr.bf16.mxu0 0
      %3610 = vmatpush1.bf16.msra.mxu0 %v3593
      %3611 = vmatprep.subr.bf16.mxu0 0
      %3612 = vmatpush2.bf16.msra.mxu0 0
      %3613 = vmatprep.subr.bf16.mxu0 0
      %3614 = vmatpush2.bf16.msra.mxu0 0
      %3615 = vmatprep.subr.bf16.mxu0 0
      %3616 = vmatpush2.bf16.msra.mxu0 0
      %3617 = vmatprep.subr.bf16.mxu0 0
      %3618 = vmatpush2.bf16.msra.mxu0 0
      %3619 = vmatprep.subr.bf16.mxu0 0
      %3620 = vmatpush2.bf16.msra.mxu0 0
      %3621 = vmatprep.subr.bf16.mxu0 0
      %3622 = vmatpush2.bf16.msra.mxu0 0
      %3623 = vmatprep.subr.bf16.mxu0 0
      %3624 = vmatpush2.bf16.msra.mxu0 0
      %3625 = vmatprep.subr.bf16.mxu0 0
      %3626 = vmatpush2.bf16.msra.mxu0 0
      %3627 = vmatprep.mubr.bf16.mxu0 0
      %3628 = vmatmul.mubr.bf16.gmra.mxu0 %v3545
      %v3629 = vpop.f32.mrf.mxu0
      %v3630 = vadd.f32 0.0, %v3629
      %v3631 = vpop.f32.mrf.mxu0
      %v3632 = vpop.f32.mrf.mxu0
      %v3633 = vadd.f32 0.0, %v3632
      %v3634 = vpop.f32.mrf.mxu0
      %3635 = vmatprep.mubr.bf16.mxu0 0
      %3636 = vmatmul.mubr.bf16.gmra.mxu0 %v3548
      %v3637 = vpop.f32.mrf.mxu0
      %v3638 = vadd.f32 0.0, %v3637
      %v3639 = vpop.f32.mrf.mxu0
      %v3640 = vpop.f32.mrf.mxu0
      %v3641 = vadd.f32 0.0, %v3640
      %v3642 = vpop.f32.mrf.mxu0
      %3643 = vmatprep.mubr.bf16.mxu0 0
      %3644 = vmatmul.mubr.bf16.gmra.mxu0 %v3551
      %v3645 = vpop.f32.mrf.mxu0
      %v3646 = vadd.f32 0.0, %v3645
      %v3647 = vpop.f32.mrf.mxu0
      %v3648 = vpop.f32.mrf.mxu0
      %v3649 = vadd.f32 0.0, %v3648
      %v3650 = vpop.f32.mrf.mxu0
      %3651 = vmatprep.mubr.bf16.mxu0 0
      %3652 = vmatmul.mubr.bf16.gmra.mxu0 %v3554
      %v3653 = vpop.f32.mrf.mxu0
      %v3654 = vadd.f32 0.0, %v3653
      %v3655 = vpop.f32.mrf.mxu0
      %v3656 = vpop.f32.mrf.mxu0
      %v3657 = vadd.f32 0.0, %v3656
      %v3658 = vpop.f32.mrf.mxu0
      %3659 = vmatprep.mubr.bf16.mxu0 0
      %3660 = vmatmul.mubr.bf16.gmra.mxu0 %v3557
      %v3661 = vpop.f32.mrf.mxu0
      %v3662 = vadd.f32 0.0, %v3661
      %v3663 = vpop.f32.mrf.mxu0
      %v3664 = vpop.f32.mrf.mxu0
      %v3665 = vadd.f32 0.0, %v3664
      %v3666 = vpop.f32.mrf.mxu0
      %3667 = vmatprep.mubr.bf16.mxu0 0
      %3668 = vmatmul.mubr.bf16.gmra.mxu0 %v3560
      %v3669 = vpop.f32.mrf.mxu0
      %v3670 = vadd.f32 0.0, %v3669
      %v3671 = vpop.f32.mrf.mxu0
      %v3672 = vpop.f32.mrf.mxu0
      %v3673 = vadd.f32 0.0, %v3672
      %v3674 = vpop.f32.mrf.mxu0
      %3675 = vmatprep.mubr.bf16.mxu0 0
      %3676 = vmatmul.mubr.bf16.gmra.mxu0 %v3563
      %v3677 = vpop.f32.mrf.mxu0
      %v3678 = vadd.f32 0.0, %v3677
      %v3679 = vpop.f32.mrf.mxu0
      %v3680 = vpop.f32.mrf.mxu0
      %v3681 = vadd.f32 0.0, %v3680
      %v3682 = vpop.f32.mrf.mxu0
      %3683 = vmatprep.mubr.bf16.mxu0 0
      %3684 = vmatmul.mubr.bf16.gmra.mxu0 %v3566
      %v3685 = vpop.f32.mrf.mxu0
      %v3686 = vadd.f32 0.0, %v3685
      %v3687 = vpop.f32.mrf.mxu0
      %v3688 = vpop.f32.mrf.mxu0
      %v3689 = vadd.f32 0.0, %v3688
      %v3690 = vpop.f32.mrf.mxu0
      %3691 = vmatprep.mubr.bf16.mxu0 0
      %3692 = vmatmul.mubr.bf16.gmra.mxu0 %v3569
      %v3693 = vpop.f32.mrf.mxu0
      %v3694 = vadd.f32 0.0, %v3693
      %v3695 = vpop.f32.mrf.mxu0
      %v3696 = vpop.f32.mrf.mxu0
      %v3697 = vadd.f32 0.0, %v3696
      %v3698 = vpop.f32.mrf.mxu0
      %3699 = vmatprep.mubr.bf16.mxu0 0
      %3700 = vmatmul.mubr.bf16.gmra.mxu0 %v3572
      %v3701 = vpop.f32.mrf.mxu0
      %v3702 = vadd.f32 0.0, %v3701
      %v3703 = vpop.f32.mrf.mxu0
      %v3704 = vpop.f32.mrf.mxu0
      %v3705 = vadd.f32 0.0, %v3704
      %v3706 = vpop.f32.mrf.mxu0
      %3707 = vmatprep.mubr.bf16.mxu0 0
      %3708 = vmatmul.mubr.bf16.gmra.mxu0 %v3575
      %v3709 = vpop.f32.mrf.mxu0
      %v3710 = vadd.f32 0.0, %v3709
      %v3711 = vpop.f32.mrf.mxu0
      %v3712 = vpop.f32.mrf.mxu0
      %v3713 = vadd.f32 0.0, %v3712
      %v3714 = vpop.f32.mrf.mxu0
      %3715 = vmatprep.mubr.bf16.mxu0 0
      %3716 = vmatmul.mubr.bf16.gmra.mxu0 %v3578
      %v3717 = vpop.f32.mrf.mxu0
      %v3718 = vadd.f32 0.0, %v3717
      %v3719 = vpop.f32.mrf.mxu0
      %v3720 = vpop.f32.mrf.mxu0
      %v3721 = vadd.f32 0.0, %v3720
      %v3722 = vpop.f32.mrf.mxu0
      %3723 = vmatprep.mubr.bf16.mxu0 0
      %3724 = vmatmul.mubr.bf16.gmra.mxu0 %v3581
      %v3725 = vpop.f32.mrf.mxu0
      %v3726 = vadd.f32 0.0, %v3725
      %v3727 = vpop.f32.mrf.mxu0
      %v3728 = vpop.f32.mrf.mxu0
      %v3729 = vadd.f32 0.0, %v3728
      %v3730 = vpop.f32.mrf.mxu0
      %3731 = vmatprep.mubr.bf16.mxu0 0
      %3732 = vmatmul.mubr.bf16.gmra.mxu0 %v3584
      %v3733 = vpop.f32.mrf.mxu0
      %v3734 = vadd.f32 0.0, %v3733
      %v3735 = vpop.f32.mrf.mxu0
      %v3736 = vpop.f32.mrf.mxu0
      %v3737 = vadd.f32 0.0, %v3736
      %v3738 = vpop.f32.mrf.mxu0
      %3739 = vmatprep.mubr.bf16.mxu0 0
      %3740 = vmatmul.mubr.bf16.gmra.mxu0 %v3587
      %v3741 = vpop.f32.mrf.mxu0
      %v3742 = vadd.f32 0.0, %v3741
      %v3743 = vpop.f32.mrf.mxu0
      %v3744 = vpop.f32.mrf.mxu0
      %v3745 = vadd.f32 0.0, %v3744
      %v3746 = vpop.f32.mrf.mxu0
      %3747 = vmatprep.mubr.bf16.mxu0 0
      %3748 = vmatmul.mubr.bf16.gmra.mxu0 %v3590
      %v3749 = vpop.f32.mrf.mxu0
      %v3750 = vadd.f32 0.0, %v3749
      %v3751 = vpop.f32.mrf.mxu0
      %v3752 = vpop.f32.mrf.mxu0
      %v3753 = vadd.f32 0.0, %v3752
      %v3754 = vpop.f32.mrf.mxu0
      %3755 = vdwg.mxu0
      %v3756 = vadd.f32 %v3031, %v3630
      %v3757 = vadd.f32 %v3032, %v3633
      %v3758 = vadd.f32 %v3033, %v3638
      %v3759 = vadd.f32 %v3034, %v3641
      %v3760 = vadd.f32 %v3035, %v3646
      %v3761 = vadd.f32 %v3036, %v3649
      %v3762 = vadd.f32 %v3037, %v3654
      %v3763 = vadd.f32 %v3038, %v3657
      %v3764 = vadd.f32 %v3039, %v3662
      %v3765 = vadd.f32 %v3040, %v3665
      %v3766 = vadd.f32 %v3041, %v3670
      %v3767 = vadd.f32 %v3042, %v3673
      %v3768 = vadd.f32 %v3043, %v3678
      %v3769 = vadd.f32 %v3044, %v3681
      %v3770 = vadd.f32 %v3045, %v3686
      %v3771 = vadd.f32 %v3046, %v3689
      %v3772 = vadd.f32 %v3047, %v3694
      %v3773 = vadd.f32 %v3048, %v3697
      %v3774 = vadd.f32 %v3049, %v3702
      %v3775 = vadd.f32 %v3050, %v3705
      %v3776 = vadd.f32 %v3051, %v3710
      %v3777 = vadd.f32 %v3052, %v3713
      %v3778 = vadd.f32 %v3053, %v3718
      %v3779 = vadd.f32 %v3054, %v3721
      %v3780 = vadd.f32 %v3055, %v3726
      %v3781 = vadd.f32 %v3056, %v3729
      %v3782 = vadd.f32 %v3057, %v3734
      %v3783 = vadd.f32 %v3058, %v3737
      %v3784 = vadd.f32 %v3059, %v3742
      %v3785 = vadd.f32 %v3060, %v3745
      %v3786 = vadd.f32 %v3061, %v3750
      %v3787 = vadd.f32 %v3062, %v3753
      %v3788 = vld [vmem:[%s2701] sm:$0xe]
      %v3789 = vld [vmem:[%s2701 + $0xc] sm:$0xe]
      %v3790 = vld [vmem:[%s2701 + $0x18] sm:$0xe]
      %v3791 = vld [vmem:[%s2701 + $0x24] sm:$0xe]
      %v3792 = vld [vmem:[%s2701 + $0x30] sm:$0xe]
      %v3793 = vld [vmem:[%s2701 + $0x3c] sm:$0xe]
      %v3794 = vld [vmem:[%s2701 + $0x48] sm:$0xe]
      %v3795 = vld [vmem:[%s2701 + $0x54] sm:$0xe]
      %v3796 = vld [vmem:[%s2701 + $0x60] sm:$0xe]
      %v3797 = vld [vmem:[%s2701 + $0x6c] sm:$0xe]
      %v3798 = vld [vmem:[%s2701 + $0x78] sm:$0xe]
      %v3799 = vld [vmem:[%s2701 + $0x84] sm:$0xe]
      %v3800 = vld [vmem:[%s2701 + $0x90] sm:$0xe]
      %v3801 = vld [vmem:[%s2701 + $0x9c] sm:$0xe]
      %v3802 = vld [vmem:[%s2701 + $0xa8] sm:$0xe]
      %v3803 = vld [vmem:[%s2701 + $0xb4] sm:$0xe]
      %v3852 = vrot.slane %v3788, 5
      %v3853 = vrot.slane %v3852, 4
      %v3854 = vrot.slane %v3064, 5
      %v3855 = vsel %vm2295, %v3853, %v3854
      %v3856 = vrot.slane %v3854, 4
      %v3857 = vrot.slane %v3065, 5
      %v3858 = vsel %vm2295, %v3856, %v3857
      %v3859 = vrot.slane %v3789, 5
      %v3860 = vrot.slane %v3859, 4
      %v3861 = vrot.slane %v3067, 5
      %v3862 = vsel %vm2295, %v3860, %v3861
      %v3863 = vrot.slane %v3861, 4
      %v3864 = vrot.slane %v3068, 5
      %v3865 = vsel %vm2295, %v3863, %v3864
      %v3866 = vrot.slane %v3790, 5
      %v3867 = vrot.slane %v3866, 4
      %v3868 = vrot.slane %v3070, 5
      %v3869 = vsel %vm2295, %v3867, %v3868
      %v3870 = vrot.slane %v3868, 4
      %v3871 = vrot.slane %v3071, 5
      %v3872 = vsel %vm2295, %v3870, %v3871
      %v3873 = vrot.slane %v3791, 5
      %v3874 = vrot.slane %v3873, 4
      %v3875 = vrot.slane %v3073, 5
      %v3876 = vsel %vm2295, %v3874, %v3875
      %v3877 = vrot.slane %v3875, 4
      %v3878 = vrot.slane %v3074, 5
      %v3879 = vsel %vm2295, %v3877, %v3878
      %v3880 = vrot.slane %v3792, 5
      %v3881 = vrot.slane %v3880, 4
      %v3882 = vrot.slane %v3076, 5
      %v3883 = vsel %vm2295, %v3881, %v3882
      %v3884 = vrot.slane %v3882, 4
      %v3885 = vrot.slane %v3077, 5
      %v3886 = vsel %vm2295, %v3884, %v3885
      %v3887 = vrot.slane %v3793, 5
      %v3888 = vrot.slane %v3887, 4
      %v3889 = vrot.slane %v3079, 5
      %v3890 = vsel %vm2295, %v3888, %v3889
      %v3891 = vrot.slane %v3889, 4
      %v3892 = vrot.slane %v3080, 5
      %v3893 = vsel %vm2295, %v3891, %v3892
      %v3894 = vrot.slane %v3794, 5
      %v3895 = vrot.slane %v3894, 4
      %v3896 = vrot.slane %v3082, 5
      %v3897 = vsel %vm2295, %v3895, %v3896
      %v3898 = vrot.slane %v3896, 4
      %v3899 = vrot.slane %v3083, 5
      %v3900 = vsel %vm2295, %v3898, %v3899
      %v3901 = vrot.slane %v3795, 5
      %v3902 = vrot.slane %v3901, 4
      %v3903 = vrot.slane %v3085, 5
      %v3904 = vsel %vm2295, %v3902, %v3903
      %v3905 = vrot.slane %v3903, 4
      %v3906 = vrot.slane %v3086, 5
      %v3907 = vsel %vm2295, %v3905, %v3906
      %v3908 = vrot.slane %v3796, 5
      %v3909 = vrot.slane %v3908, 4
      %v3910 = vrot.slane %v3088, 5
      %v3911 = vsel %vm2295, %v3909, %v3910
      %v3912 = vrot.slane %v3910, 4
      %v3913 = vrot.slane %v3089, 5
      %v3914 = vsel %vm2295, %v3912, %v3913
      %v3915 = vrot.slane %v3797, 5
      %v3916 = vrot.slane %v3915, 4
      %v3917 = vrot.slane %v3091, 5
      %v3918 = vsel %vm2295, %v3916, %v3917
      %v3919 = vrot.slane %v3917, 4
      %v3920 = vrot.slane %v3092, 5
      %v3921 = vsel %vm2295, %v3919, %v3920
      %v3922 = vrot.slane %v3798, 5
      %v3923 = vrot.slane %v3922, 4
      %v3924 = vrot.slane %v3094, 5
      %v3925 = vsel %vm2295, %v3923, %v3924
      %v3926 = vrot.slane %v3924, 4
      %v3927 = vrot.slane %v3095, 5
      %v3928 = vsel %vm2295, %v3926, %v3927
      %v3929 = vrot.slane %v3799, 5
      %v3930 = vrot.slane %v3929, 4
      %v3931 = vrot.slane %v3097, 5
      %v3932 = vsel %vm2295, %v3930, %v3931
      %v3933 = vrot.slane %v3931, 4
      %v3934 = vrot.slane %v3098, 5
      %v3935 = vsel %vm2295, %v3933, %v3934
      %v3936 = vrot.slane %v3800, 5
      %v3937 = vrot.slane %v3936, 4
      %v3938 = vrot.slane %v3100, 5
      %v3939 = vsel %vm2295, %v3937, %v3938
      %v3940 = vrot.slane %v3938, 4
      %v3941 = vrot.slane %v3101, 5
      %v3942 = vsel %vm2295, %v3940, %v3941
      %v3943 = vrot.slane %v3801, 5
      %v3944 = vrot.slane %v3943, 4
      %v3945 = vrot.slane %v3103, 5
      %v3946 = vsel %vm2295, %v3944, %v3945
      %v3947 = vrot.slane %v3945, 4
      %v3948 = vrot.slane %v3104, 5
      %v3949 = vsel %vm2295, %v3947, %v3948
      %v3950 = vrot.slane %v3802, 5
      %v3951 = vrot.slane %v3950, 4
      %v3952 = vrot.slane %v3106, 5
      %v3953 = vsel %vm2295, %v3951, %v3952
      %v3954 = vrot.slane %v3952, 4
      %v3955 = vrot.slane %v3107, 5
      %v3956 = vsel %vm2295, %v3954, %v3955
      %v3957 = vrot.slane %v3803, 5
      %v3958 = vrot.slane %v3957, 4
      %v3959 = vrot.slane %v3109, 5
      %v3960 = vsel %vm2295, %v3958, %v3959
      %v3961 = vrot.slane %v3959, 4
      %v3962 = vrot.slane %v3110, 5
      %v3963 = vsel %vm2295, %v3961, %v3962
      %v3964 = vld [vmem:[%s1 + $0x8] sm:$0xc]
      %v3965 = vunpack.c.l.b16 %v3855
      %v3966 = vunpack.c.l.b16 %v3858
      %v3967 = vunpack.c.l.b16 %v3862
      %v3968 = vunpack.c.l.b16 %v3865
      %v3969 = vunpack.c.l.b16 %v3869
      %v3970 = vunpack.c.l.b16 %v3872
      %v3971 = vunpack.c.l.b16 %v3876
      %v3972 = vunpack.c.l.b16 %v3879
      %v3973 = vunpack.c.l.b16 %v3883
      %v3974 = vunpack.c.l.b16 %v3886
      %v3975 = vunpack.c.l.b16 %v3890
      %v3976 = vunpack.c.l.b16 %v3893
      %v3977 = vunpack.c.l.b16 %v3897
      %v3978 = vunpack.c.l.b16 %v3900
      %v3979 = vunpack.c.l.b16 %v3904
      %v3980 = vunpack.c.l.b16 %v3907
      %v3981 = vunpack.c.l.b16 %v3911
      %v3982 = vunpack.c.l.b16 %v3914
      %v3983 = vunpack.c.l.b16 %v3918
      %v3984 = vunpack.c.l.b16 %v3921
      %v3985 = vunpack.c.l.b16 %v3925
      %v3986 = vunpack.c.l.b16 %v3928
      %v3987 = vunpack.c.l.b16 %v3932
      %v3988 = vunpack.c.l.b16 %v3935
      %v3989 = vunpack.c.l.b16 %v3939
      %v3990 = vunpack.c.l.b16 %v3942
      %v3991 = vunpack.c.l.b16 %v3946
      %v3992 = vunpack.c.l.b16 %v3949
      %v3993 = vunpack.c.l.b16 %v3953
      %v3994 = vunpack.c.l.b16 %v3956
      %v3995 = vunpack.c.l.b16 %v3960
      %v3996 = vunpack.c.l.b16 %v3963
      %v3997 = vpack.c.b16 %v3966, %v3965
      %v3998 = vpack.c.b16 %v3968, %v3967
      %v3999 = vpack.c.b16 %v3970, %v3969
      %v4000 = vpack.c.b16 %v3972, %v3971
      %v4001 = vpack.c.b16 %v3974, %v3973
      %v4002 = vpack.c.b16 %v3976, %v3975
      %v4003 = vpack.c.b16 %v3978, %v3977
      %v4004 = vpack.c.b16 %v3980, %v3979
      %v4005 = vpack.c.b16 %v3982, %v3981
      %v4006 = vpack.c.b16 %v3984, %v3983
      %v4007 = vpack.c.b16 %v3986, %v3985
      %v4008 = vpack.c.b16 %v3988, %v3987
      %v4009 = vpack.c.b16 %v3990, %v3989
      %v4010 = vpack.c.b16 %v3992, %v3991
      %v4011 = vpack.c.b16 %v3994, %v3993
      %v4012 = vpack.c.b16 %v3996, %v3995
      %v4014 = vunpack.c.l.b16 %v3964
      %v4015 = vpack.c.b16 %v4014, %v4014
      %v4016 = vrot.slane %v4015, 2
      %v4018 = vsel %vm1739, %v3997, 0
      %v4021 = vsel %vm1739, %v3998, 0
      %v4024 = vsel %vm1739, %v3999, 0
      %v4027 = vsel %vm1739, %v4000, 0
      %v4030 = vsel %vm1739, %v4001, 0
      %v4033 = vsel %vm1739, %v4002, 0
      %v4036 = vsel %vm1739, %v4003, 0
      %v4039 = vsel %vm1739, %v4004, 0
      %v4042 = vsel %vm1739, %v4005, 0
      %v4045 = vsel %vm1739, %v4006, 0
      %v4048 = vsel %vm1739, %v4007, 0
      %v4051 = vsel %vm1739, %v4008, 0
      %v4054 = vsel %vm1739, %v4009, 0
      %v4057 = vsel %vm1739, %v4010, 0
      %v4060 = vsel %vm1739, %v4011, 0
      %v4063 = vsel %vm1739, %v4012, 0
      %v4066 = vsel %vm1788, %v4016, 0
      %4068 = vmatprep.subr.bf16.mxu0 0
      %4069 = vmatpush1.bf16.msra.mxu0 0
      %4070 = vmatprep.subr.bf16.mxu0 0
      %4071 = vmatpush1.bf16.msra.mxu0 0
      %4072 = vmatprep.subr.bf16.mxu0 0
      %4073 = vmatpush1.bf16.msra.mxu0 0
      %4074 = vmatprep.subr.bf16.mxu0 0
      %4075 = vmatpush1.bf16.msra.mxu0 0
      %4076 = vmatprep.subr.bf16.mxu0 0
      %4077 = vmatpush1.bf16.msra.mxu0 0
      %4078 = vmatprep.subr.bf16.mxu0 0
      %4079 = vmatpush1.bf16.msra.mxu0 0
      %4080 = vmatprep.subr.bf16.mxu0 0
      %4081 = vmatpush1.bf16.msra.mxu0 0
      %4082 = vmatprep.subr.bf16.mxu0 0
      %4083 = vmatpush1.bf16.msra.mxu0 %v4066
      %4084 = vmatprep.subr.bf16.mxu0 0
      %4085 = vmatpush2.bf16.msra.mxu0 0
      %4086 = vmatprep.subr.bf16.mxu0 0
      %4087 = vmatpush2.bf16.msra.mxu0 0
      %4088 = vmatprep.subr.bf16.mxu0 0
      %4089 = vmatpush2.bf16.msra.mxu0 0
      %4090 = vmatprep.subr.bf16.mxu0 0
      %4091 = vmatpush2.bf16.msra.mxu0 0
      %4092 = vmatprep.subr.bf16.mxu0 0
      %4093 = vmatpush2.bf16.msra.mxu0 0
      %4094 = vmatprep.subr.bf16.mxu0 0
      %4095 = vmatpush2.bf16.msra.mxu0 0
      %4096 = vmatprep.subr.bf16.mxu0 0
      %4097 = vmatpush2.bf16.msra.mxu0 0
      %4098 = vmatprep.subr.bf16.mxu0 0
      %4099 = vmatpush2.bf16.msra.mxu0 0
      %4100 = vmatprep.mubr.bf16.mxu0 0
      %4101 = vmatmul.mubr.bf16.gmra.mxu0 %v4018
      %v4102 = vpop.f32.mrf.mxu0
      %v4103 = vadd.f32 0.0, %v4102
      %v4104 = vpop.f32.mrf.mxu0
      %v4105 = vpop.f32.mrf.mxu0
      %v4106 = vadd.f32 0.0, %v4105
      %v4107 = vpop.f32.mrf.mxu0
      %4108 = vmatprep.mubr.bf16.mxu0 0
      %4109 = vmatmul.mubr.bf16.gmra.mxu0 %v4021
      %v4110 = vpop.f32.mrf.mxu0
      %v4111 = vadd.f32 0.0, %v4110
      %v4112 = vpop.f32.mrf.mxu0
      %v4113 = vpop.f32.mrf.mxu0
      %v4114 = vadd.f32 0.0, %v4113
      %v4115 = vpop.f32.mrf.mxu0
      %4116 = vmatprep.mubr.bf16.mxu0 0
      %4117 = vmatmul.mubr.bf16.gmra.mxu0 %v4024
      %v4118 = vpop.f32.mrf.mxu0
      %v4119 = vadd.f32 0.0, %v4118
      %v4120 = vpop.f32.mrf.mxu0
      %v4121 = vpop.f32.mrf.mxu0
      %v4122 = vadd.f32 0.0, %v4121
      %v4123 = vpop.f32.mrf.mxu0
      %4124 = vmatprep.mubr.bf16.mxu0 0
      %4125 = vmatmul.mubr.bf16.gmra.mxu0 %v4027
      %v4126 = vpop.f32.mrf.mxu0
      %v4127 = vadd.f32 0.0, %v4126
      %v4128 = vpop.f32.mrf.mxu0
      %v4129 = vpop.f32.mrf.mxu0
      %v4130 = vadd.f32 0.0, %v4129
      %v4131 = vpop.f32.mrf.mxu0
      %4132 = vmatprep.mubr.bf16.mxu0 0
      %4133 = vmatmul.mubr.bf16.gmra.mxu0 %v4030
      %v4134 = vpop.f32.mrf.mxu0
      %v4135 = vadd.f32 0.0, %v4134
      %v4136 = vpop.f32.mrf.mxu0
      %v4137 = vpop.f32.mrf.mxu0
      %v4138 = vadd.f32 0.0, %v4137
      %v4139 = vpop.f32.mrf.mxu0
      %4140 = vmatprep.mubr.bf16.mxu0 0
      %4141 = vmatmul.mubr.bf16.gmra.mxu0 %v4033
      %v4142 = vpop.f32.mrf.mxu0
      %v4143 = vadd.f32 0.0, %v4142
      %v4144 = vpop.f32.mrf.mxu0
      %v4145 = vpop.f32.mrf.mxu0
      %v4146 = vadd.f32 0.0, %v4145
      %v4147 = vpop.f32.mrf.mxu0
      %4148 = vmatprep.mubr.bf16.mxu0 0
      %4149 = vmatmul.mubr.bf16.gmra.mxu0 %v4036
      %v4150 = vpop.f32.mrf.mxu0
      %v4151 = vadd.f32 0.0, %v4150
      %v4152 = vpop.f32.mrf.mxu0
      %v4153 = vpop.f32.mrf.mxu0
      %v4154 = vadd.f32 0.0, %v4153
      %v4155 = vpop.f32.mrf.mxu0
      %4156 = vmatprep.mubr.bf16.mxu0 0
      %4157 = vmatmul.mubr.bf16.gmra.mxu0 %v4039
      %v4158 = vpop.f32.mrf.mxu0
      %v4159 = vadd.f32 0.0, %v4158
      %v4160 = vpop.f32.mrf.mxu0
      %v4161 = vpop.f32.mrf.mxu0
      %v4162 = vadd.f32 0.0, %v4161
      %v4163 = vpop.f32.mrf.mxu0
      %4164 = vmatprep.mubr.bf16.mxu0 0
      %4165 = vmatmul.mubr.bf16.gmra.mxu0 %v4042
      %v4166 = vpop.f32.mrf.mxu0
      %v4167 = vadd.f32 0.0, %v4166
      %v4168 = vpop.f32.mrf.mxu0
      %v4169 = vpop.f32.mrf.mxu0
      %v4170 = vadd.f32 0.0, %v4169
      %v4171 = vpop.f32.mrf.mxu0
      %4172 = vmatprep.mubr.bf16.mxu0 0
      %4173 = vmatmul.mubr.bf16.gmra.mxu0 %v4045
      %v4174 = vpop.f32.mrf.mxu0
      %v4175 = vadd.f32 0.0, %v4174
      %v4176 = vpop.f32.mrf.mxu0
      %v4177 = vpop.f32.mrf.mxu0
      %v4178 = vadd.f32 0.0, %v4177
      %v4179 = vpop.f32.mrf.mxu0
      %4180 = vmatprep.mubr.bf16.mxu0 0
      %4181 = vmatmul.mubr.bf16.gmra.mxu0 %v4048
      %v4182 = vpop.f32.mrf.mxu0
      %v4183 = vadd.f32 0.0, %v4182
      %v4184 = vpop.f32.mrf.mxu0
      %v4185 = vpop.f32.mrf.mxu0
      %v4186 = vadd.f32 0.0, %v4185
      %v4187 = vpop.f32.mrf.mxu0
      %4188 = vmatprep.mubr.bf16.mxu0 0
      %4189 = vmatmul.mubr.bf16.gmra.mxu0 %v4051
      %v4190 = vpop.f32.mrf.mxu0
      %v4191 = vadd.f32 0.0, %v4190
      %v4192 = vpop.f32.mrf.mxu0
      %v4193 = vpop.f32.mrf.mxu0
      %v4194 = vadd.f32 0.0, %v4193
      %v4195 = vpop.f32.mrf.mxu0
      %4196 = vmatprep.mubr.bf16.mxu0 0
      %4197 = vmatmul.mubr.bf16.gmra.mxu0 %v4054
      %v4198 = vpop.f32.mrf.mxu0
      %v4199 = vadd.f32 0.0, %v4198
      %v4200 = vpop.f32.mrf.mxu0
      %v4201 = vpop.f32.mrf.mxu0
      %v4202 = vadd.f32 0.0, %v4201
      %v4203 = vpop.f32.mrf.mxu0
      %4204 = vmatprep.mubr.bf16.mxu0 0
      %4205 = vmatmul.mubr.bf16.gmra.mxu0 %v4057
      %v4206 = vpop.f32.mrf.mxu0
      %v4207 = vadd.f32 0.0, %v4206
      %v4208 = vpop.f32.mrf.mxu0
      %v4209 = vpop.f32.mrf.mxu0
      %v4210 = vadd.f32 0.0, %v4209
      %v4211 = vpop.f32.mrf.mxu0
      %4212 = vmatprep.mubr.bf16.mxu0 0
      %4213 = vmatmul.mubr.bf16.gmra.mxu0 %v4060
      %v4214 = vpop.f32.mrf.mxu0
      %v4215 = vadd.f32 0.0, %v4214
      %v4216 = vpop.f32.mrf.mxu0
      %v4217 = vpop.f32.mrf.mxu0
      %v4218 = vadd.f32 0.0, %v4217
      %v4219 = vpop.f32.mrf.mxu0
      %4220 = vmatprep.mubr.bf16.mxu0 0
      %4221 = vmatmul.mubr.bf16.gmra.mxu0 %v4063
      %v4222 = vpop.f32.mrf.mxu0
      %v4223 = vadd.f32 0.0, %v4222
      %v4224 = vpop.f32.mrf.mxu0
      %v4225 = vpop.f32.mrf.mxu0
      %v4226 = vadd.f32 0.0, %v4225
      %v4227 = vpop.f32.mrf.mxu0
      %4228 = vdwg.mxu0
      %v4229 = vadd.f32 %v3756, %v4103
      %v4230 = vadd.f32 %v3757, %v4106
      %v4231 = vadd.f32 %v3758, %v4111
      %v4232 = vadd.f32 %v3759, %v4114
      %v4233 = vadd.f32 %v3760, %v4119
      %v4234 = vadd.f32 %v3761, %v4122
      %v4235 = vadd.f32 %v3762, %v4127
      %v4236 = vadd.f32 %v3763, %v4130
      %v4237 = vadd.f32 %v3764, %v4135
      %v4238 = vadd.f32 %v3765, %v4138
      %v4239 = vadd.f32 %v3766, %v4143
      %v4240 = vadd.f32 %v3767, %v4146
      %v4241 = vadd.f32 %v3768, %v4151
      %v4242 = vadd.f32 %v3769, %v4154
      %v4243 = vadd.f32 %v3770, %v4159
      %v4244 = vadd.f32 %v3771, %v4162
      %v4245 = vadd.f32 %v3772, %v4167
      %v4246 = vadd.f32 %v3773, %v4170
      %v4247 = vadd.f32 %v3774, %v4175
      %v4248 = vadd.f32 %v3775, %v4178
      %v4249 = vadd.f32 %v3776, %v4183
      %v4250 = vadd.f32 %v3777, %v4186
      %v4251 = vadd.f32 %v3778, %v4191
      %v4252 = vadd.f32 %v3779, %v4194
      %v4253 = vadd.f32 %v3780, %v4199
      %v4254 = vadd.f32 %v3781, %v4202
      %v4255 = vadd.f32 %v3782, %v4207
      %v4256 = vadd.f32 %v3783, %v4210
      %v4257 = vadd.f32 %v3784, %v4215
      %v4258 = vadd.f32 %v3785, %v4218
      %v4259 = vadd.f32 %v3786, %v4223
      %v4260 = vadd.f32 %v3787, %v4226
      %s4261 = scalar_lea.vmem [#allocation2], 24
      %v4262 = vld [vmem:[%s4261] sm:$0xf]
      %v4263 = vld [vmem:[%s4261 + $0x4] sm:$0xf]
      %v4264 = vld [vmem:[%s4261 + $0xc] sm:$0xf]
      %v4265 = vld [vmem:[%s4261 + $0x10] sm:$0xf]
      %v4266 = vld [vmem:[%s4261 + $0x18] sm:$0xf]
      %v4267 = vld [vmem:[%s4261 + $0x1c] sm:$0xf]
      %v4268 = vld [vmem:[%s4261 + $0x24] sm:$0xf]
      %v4269 = vld [vmem:[%s4261 + $0x28] sm:$0xf]
      %v4270 = vld [vmem:[%s4261 + $0x30] sm:$0xf]
      %v4271 = vld [vmem:[%s4261 + $0x34] sm:$0xf]
      %v4272 = vld [vmem:[%s4261 + $0x3c] sm:$0xf]
      %v4273 = vld [vmem:[%s4261 + $0x40] sm:$0xf]
      %v4274 = vld [vmem:[%s4261 + $0x48] sm:$0xf]
      %v4275 = vld [vmem:[%s4261 + $0x4c] sm:$0xf]
      %v4276 = vld [vmem:[%s4261 + $0x54] sm:$0xf]
      %v4277 = vld [vmem:[%s4261 + $0x58] sm:$0xf]
      %v4278 = vld [vmem:[%s4261 + $0x60] sm:$0xf]
      %v4279 = vld [vmem:[%s4261 + $0x64] sm:$0xf]
      %v4280 = vld [vmem:[%s4261 + $0x6c] sm:$0xf]
      %v4281 = vld [vmem:[%s4261 + $0x70] sm:$0xf]
      %v4282 = vld [vmem:[%s4261 + $0x78] sm:$0xf]
      %v4283 = vld [vmem:[%s4261 + $0x7c] sm:$0xf]
      %v4284 = vld [vmem:[%s4261 + $0x84] sm:$0xf]
      %v4285 = vld [vmem:[%s4261 + $0x88] sm:$0xf]
      %v4286 = vld [vmem:[%s4261 + $0x90] sm:$0xf]
      %v4287 = vld [vmem:[%s4261 + $0x94] sm:$0xf]
      %v4288 = vld [vmem:[%s4261 + $0x9c] sm:$0xf]
      %v4289 = vld [vmem:[%s4261 + $0xa0] sm:$0xf]
      %v4290 = vld [vmem:[%s4261 + $0xa8] sm:$0xf]
      %v4291 = vld [vmem:[%s4261 + $0xac] sm:$0xf]
      %v4292 = vld [vmem:[%s4261 + $0xb4] sm:$0xf]
      %v4293 = vld [vmem:[%s4261 + $0xb8] sm:$0xf]
      %v4294 = vld [vmem:[%s1 + $0xc] sm:$0x3]
      %v4327 = vunpack.c.l.b16 %v4262
      %v4328 = vunpack.c.l.b16 %v4263
      %v4329 = vunpack.c.l.b16 %v4264
      %v4330 = vunpack.c.l.b16 %v4265
      %v4331 = vunpack.c.l.b16 %v4266
      %v4332 = vunpack.c.l.b16 %v4267
      %v4333 = vunpack.c.l.b16 %v4268
      %v4334 = vunpack.c.l.b16 %v4269
      %v4335 = vunpack.c.l.b16 %v4270
      %v4336 = vunpack.c.l.b16 %v4271
      %v4337 = vunpack.c.l.b16 %v4272
      %v4338 = vunpack.c.l.b16 %v4273
      %v4339 = vunpack.c.l.b16 %v4274
      %v4340 = vunpack.c.l.b16 %v4275
      %v4341 = vunpack.c.l.b16 %v4276
      %v4342 = vunpack.c.l.b16 %v4277
      %v4343 = vunpack.c.l.b16 %v4278
      %v4344 = vunpack.c.l.b16 %v4279
      %v4345 = vunpack.c.l.b16 %v4280
      %v4346 = vunpack.c.l.b16 %v4281
      %v4347 = vunpack.c.l.b16 %v4282
      %v4348 = vunpack.c.l.b16 %v4283
      %v4349 = vunpack.c.l.b16 %v4284
      %v4350 = vunpack.c.l.b16 %v4285
      %v4351 = vunpack.c.l.b16 %v4286
      %v4352 = vunpack.c.l.b16 %v4287
      %v4353 = vunpack.c.l.b16 %v4288
      %v4354 = vunpack.c.l.b16 %v4289
      %v4355 = vunpack.c.l.b16 %v4290
      %v4356 = vunpack.c.l.b16 %v4291
      %v4357 = vunpack.c.l.b16 %v4292
      %v4358 = vunpack.c.l.b16 %v4293
      %v4359 = vpack.c.b16 %v4328, %v4327
      %v4360 = vpack.c.b16 %v4330, %v4329
      %v4361 = vpack.c.b16 %v4332, %v4331
      %v4362 = vpack.c.b16 %v4334, %v4333
      %v4363 = vpack.c.b16 %v4336, %v4335
      %v4364 = vpack.c.b16 %v4338, %v4337
      %v4365 = vpack.c.b16 %v4340, %v4339
      %v4366 = vpack.c.b16 %v4342, %v4341
      %v4367 = vpack.c.b16 %v4344, %v4343
      %v4368 = vpack.c.b16 %v4346, %v4345
      %v4369 = vpack.c.b16 %v4348, %v4347
      %v4370 = vpack.c.b16 %v4350, %v4349
      %v4371 = vpack.c.b16 %v4352, %v4351
      %v4372 = vpack.c.b16 %v4354, %v4353
      %v4373 = vpack.c.b16 %v4356, %v4355
      %v4374 = vpack.c.b16 %v4358, %v4357
      %v4376 = vsel %vm1739, %v4359, 0
      %v4379 = vsel %vm1739, %v4360, 0
      %v4382 = vsel %vm1739, %v4361, 0
      %v4385 = vsel %vm1739, %v4362, 0
      %v4388 = vsel %vm1739, %v4363, 0
      %v4391 = vsel %vm1739, %v4364, 0
      %v4394 = vsel %vm1739, %v4365, 0
      %v4397 = vsel %vm1739, %v4366, 0
      %v4400 = vsel %vm1739, %v4367, 0
      %v4403 = vsel %vm1739, %v4368, 0
      %v4406 = vsel %vm1739, %v4369, 0
      %v4409 = vsel %vm1739, %v4370, 0
      %v4412 = vsel %vm1739, %v4371, 0
      %v4415 = vsel %vm1739, %v4372, 0
      %v4418 = vsel %vm1739, %v4373, 0
      %v4421 = vsel %vm1739, %v4374, 0
      %v4424 = vsel %vm1788, %v4294, 0
      %4426 = vmatprep.subr.bf16.mxu0 0
      %4427 = vmatpush1.bf16.msra.mxu0 0
      %4428 = vmatprep.subr.bf16.mxu0 0
      %4429 = vmatpush1.bf16.msra.mxu0 0
      %4430 = vmatprep.subr.bf16.mxu0 0
      %4431 = vmatpush1.bf16.msra.mxu0 0
      %4432 = vmatprep.subr.bf16.mxu0 0
      %4433 = vmatpush1.bf16.msra.mxu0 0
      %4434 = vmatprep.subr.bf16.mxu0 0
      %4435 = vmatpush1.bf16.msra.mxu0 0
      %4436 = vmatprep.subr.bf16.mxu0 0
      %4437 = vmatpush1.bf16.msra.mxu0 0
      %4438 = vmatprep.subr.bf16.mxu0 0
      %4439 = vmatpush1.bf16.msra.mxu0 0
      %4440 = vmatprep.subr.bf16.mxu0 0
      %4441 = vmatpush1.bf16.msra.mxu0 %v4424
      %4442 = vmatprep.subr.bf16.mxu0 0
      %4443 = vmatpush2.bf16.msra.mxu0 0
      %4444 = vmatprep.subr.bf16.mxu0 0
      %4445 = vmatpush2.bf16.msra.mxu0 0
      %4446 = vmatprep.subr.bf16.mxu0 0
      %4447 = vmatpush2.bf16.msra.mxu0 0
      %4448 = vmatprep.subr.bf16.mxu0 0
      %4449 = vmatpush2.bf16.msra.mxu0 0
      %4450 = vmatprep.subr.bf16.mxu0 0
      %4451 = vmatpush2.bf16.msra.mxu0 0
      %4452 = vmatprep.subr.bf16.mxu0 0
      %4453 = vmatpush2.bf16.msra.mxu0 0
      %4454 = vmatprep.subr.bf16.mxu0 0
      %4455 = vmatpush2.bf16.msra.mxu0 0
      %4456 = vmatprep.subr.bf16.mxu0 0
      %4457 = vmatpush2.bf16.msra.mxu0 0
      %4458 = vmatprep.mubr.bf16.mxu0 0
      %4459 = vmatmul.mubr.bf16.gmra.mxu0 %v4376
      %v4460 = vpop.f32.mrf.mxu0
      %v4461 = vadd.f32 0.0, %v4460
      %v4462 = vpop.f32.mrf.mxu0
      %v4463 = vpop.f32.mrf.mxu0
      %v4464 = vadd.f32 0.0, %v4463
      %v4465 = vpop.f32.mrf.mxu0
      %4466 = vmatprep.mubr.bf16.mxu0 0
      %4467 = vmatmul.mubr.bf16.gmra.mxu0 %v4379
      %v4468 = vpop.f32.mrf.mxu0
      %v4469 = vadd.f32 0.0, %v4468
      %v4470 = vpop.f32.mrf.mxu0
      %v4471 = vpop.f32.mrf.mxu0
      %v4472 = vadd.f32 0.0, %v4471
      %v4473 = vpop.f32.mrf.mxu0
      %4474 = vmatprep.mubr.bf16.mxu0 0
      %4475 = vmatmul.mubr.bf16.gmra.mxu0 %v4382
      %v4476 = vpop.f32.mrf.mxu0
      %v4477 = vadd.f32 0.0, %v4476
      %v4478 = vpop.f32.mrf.mxu0
      %v4479 = vpop.f32.mrf.mxu0
      %v4480 = vadd.f32 0.0, %v4479
      %v4481 = vpop.f32.mrf.mxu0
      %4482 = vmatprep.mubr.bf16.mxu0 0
      %4483 = vmatmul.mubr.bf16.gmra.mxu0 %v4385
      %v4484 = vpop.f32.mrf.mxu0
      %v4485 = vadd.f32 0.0, %v4484
      %v4486 = vpop.f32.mrf.mxu0
      %v4487 = vpop.f32.mrf.mxu0
      %v4488 = vadd.f32 0.0, %v4487
      %v4489 = vpop.f32.mrf.mxu0
      %4490 = vmatprep.mubr.bf16.mxu0 0
      %4491 = vmatmul.mubr.bf16.gmra.mxu0 %v4388
      %v4492 = vpop.f32.mrf.mxu0
      %v4493 = vadd.f32 0.0, %v4492
      %v4494 = vpop.f32.mrf.mxu0
      %v4495 = vpop.f32.mrf.mxu0
      %v4496 = vadd.f32 0.0, %v4495
      %v4497 = vpop.f32.mrf.mxu0
      %4498 = vmatprep.mubr.bf16.mxu0 0
      %4499 = vmatmul.mubr.bf16.gmra.mxu0 %v4391
      %v4500 = vpop.f32.mrf.mxu0
      %v4501 = vadd.f32 0.0, %v4500
      %v4502 = vpop.f32.mrf.mxu0
      %v4503 = vpop.f32.mrf.mxu0
      %v4504 = vadd.f32 0.0, %v4503
      %v4505 = vpop.f32.mrf.mxu0
      %4506 = vmatprep.mubr.bf16.mxu0 0
      %4507 = vmatmul.mubr.bf16.gmra.mxu0 %v4394
      %v4508 = vpop.f32.mrf.mxu0
      %v4509 = vadd.f32 0.0, %v4508
      %v4510 = vpop.f32.mrf.mxu0
      %v4511 = vpop.f32.mrf.mxu0
      %v4512 = vadd.f32 0.0, %v4511
      %v4513 = vpop.f32.mrf.mxu0
      %4514 = vmatprep.mubr.bf16.mxu0 0
      %4515 = vmatmul.mubr.bf16.gmra.mxu0 %v4397
      %v4516 = vpop.f32.mrf.mxu0
      %v4517 = vadd.f32 0.0, %v4516
      %v4518 = vpop.f32.mrf.mxu0
      %v4519 = vpop.f32.mrf.mxu0
      %v4520 = vadd.f32 0.0, %v4519
      %v4521 = vpop.f32.mrf.mxu0
      %4522 = vmatprep.mubr.bf16.mxu0 0
      %4523 = vmatmul.mubr.bf16.gmra.mxu0 %v4400
      %v4524 = vpop.f32.mrf.mxu0
      %v4525 = vadd.f32 0.0, %v4524
      %v4526 = vpop.f32.mrf.mxu0
      %v4527 = vpop.f32.mrf.mxu0
      %v4528 = vadd.f32 0.0, %v4527
      %v4529 = vpop.f32.mrf.mxu0
      %4530 = vmatprep.mubr.bf16.mxu0 0
      %4531 = vmatmul.mubr.bf16.gmra.mxu0 %v4403
      %v4532 = vpop.f32.mrf.mxu0
      %v4533 = vadd.f32 0.0, %v4532
      %v4534 = vpop.f32.mrf.mxu0
      %v4535 = vpop.f32.mrf.mxu0
      %v4536 = vadd.f32 0.0, %v4535
      %v4537 = vpop.f32.mrf.mxu0
      %4538 = vmatprep.mubr.bf16.mxu0 0
      %4539 = vmatmul.mubr.bf16.gmra.mxu0 %v4406
      %v4540 = vpop.f32.mrf.mxu0
      %v4541 = vadd.f32 0.0, %v4540
      %v4542 = vpop.f32.mrf.mxu0
      %v4543 = vpop.f32.mrf.mxu0
      %v4544 = vadd.f32 0.0, %v4543
      %v4545 = vpop.f32.mrf.mxu0
      %4546 = vmatprep.mubr.bf16.mxu0 0
      %4547 = vmatmul.mubr.bf16.gmra.mxu0 %v4409
      %v4548 = vpop.f32.mrf.mxu0
      %v4549 = vadd.f32 0.0, %v4548
      %v4550 = vpop.f32.mrf.mxu0
      %v4551 = vpop.f32.mrf.mxu0
      %v4552 = vadd.f32 0.0, %v4551
      %v4553 = vpop.f32.mrf.mxu0
      %4554 = vmatprep.mubr.bf16.mxu0 0
      %4555 = vmatmul.mubr.bf16.gmra.mxu0 %v4412
      %v4556 = vpop.f32.mrf.mxu0
      %v4557 = vadd.f32 0.0, %v4556
      %v4558 = vpop.f32.mrf.mxu0
      %v4559 = vpop.f32.mrf.mxu0
      %v4560 = vadd.f32 0.0, %v4559
      %v4561 = vpop.f32.mrf.mxu0
      %4562 = vmatprep.mubr.bf16.mxu0 0
      %4563 = vmatmul.mubr.bf16.gmra.mxu0 %v4415
      %v4564 = vpop.f32.mrf.mxu0
      %v4565 = vadd.f32 0.0, %v4564
      %v4566 = vpop.f32.mrf.mxu0
      %v4567 = vpop.f32.mrf.mxu0
      %v4568 = vadd.f32 0.0, %v4567
      %v4569 = vpop.f32.mrf.mxu0
      %4570 = vmatprep.mubr.bf16.mxu0 0
      %4571 = vmatmul.mubr.bf16.gmra.mxu0 %v4418
      %v4572 = vpop.f32.mrf.mxu0
      %v4573 = vadd.f32 0.0, %v4572
      %v4574 = vpop.f32.mrf.mxu0
      %v4575 = vpop.f32.mrf.mxu0
      %v4576 = vadd.f32 0.0, %v4575
      %v4577 = vpop.f32.mrf.mxu0
      %4578 = vmatprep.mubr.bf16.mxu0 0
      %4579 = vmatmul.mubr.bf16.gmra.mxu0 %v4421
      %v4580 = vpop.f32.mrf.mxu0
      %v4581 = vadd.f32 0.0, %v4580
      %v4582 = vpop.f32.mrf.mxu0
      %v4583 = vpop.f32.mrf.mxu0
      %v4584 = vadd.f32 0.0, %v4583
      %v4585 = vpop.f32.mrf.mxu0
      %4586 = vdwg.mxu0
      %v4587 = vadd.f32 %v4229, %v4461
      %v4588 = vadd.f32 %v4230, %v4464
      %v4589 = vadd.f32 %v4231, %v4469
      %v4590 = vadd.f32 %v4232, %v4472
      %v4591 = vadd.f32 %v4233, %v4477
      %v4592 = vadd.f32 %v4234, %v4480
      %v4593 = vadd.f32 %v4235, %v4485
      %v4594 = vadd.f32 %v4236, %v4488
      %v4595 = vadd.f32 %v4237, %v4493
      %v4596 = vadd.f32 %v4238, %v4496
      %v4597 = vadd.f32 %v4239, %v4501
      %v4598 = vadd.f32 %v4240, %v4504
      %v4599 = vadd.f32 %v4241, %v4509
      %v4600 = vadd.f32 %v4242, %v4512
      %v4601 = vadd.f32 %v4243, %v4517
      %v4602 = vadd.f32 %v4244, %v4520
      %v4603 = vadd.f32 %v4245, %v4525
      %v4604 = vadd.f32 %v4246, %v4528
      %v4605 = vadd.f32 %v4247, %v4533
      %v4606 = vadd.f32 %v4248, %v4536
      %v4607 = vadd.f32 %v4249, %v4541
      %v4608 = vadd.f32 %v4250, %v4544
      %v4609 = vadd.f32 %v4251, %v4549
      %v4610 = vadd.f32 %v4252, %v4552
      %v4611 = vadd.f32 %v4253, %v4557
      %v4612 = vadd.f32 %v4254, %v4560
      %v4613 = vadd.f32 %v4255, %v4565
      %v4614 = vadd.f32 %v4256, %v4568
      %v4615 = vadd.f32 %v4257, %v4573
      %v4616 = vadd.f32 %v4258, %v4576
      %v4617 = vadd.f32 %v4259, %v4581
      %v4618 = vadd.f32 %v4260, %v4584
      %v4619 = vld [vmem:[%s4261] sm:$0xf]
      %v4620 = vld [vmem:[%s4261 + $0x4] sm:$0xf]
      %v4621 = vld [vmem:[%s4261 + $0x8] sm:$0x1]
      %v4622 = vld [vmem:[%s4261 + $0xc] sm:$0xf]
      %v4623 = vld [vmem:[%s4261 + $0x10] sm:$0xf]
      %v4624 = vld [vmem:[%s4261 + $0x14] sm:$0x1]
      %v4625 = vld [vmem:[%s4261 + $0x18] sm:$0xf]
      %v4626 = vld [vmem:[%s4261 + $0x1c] sm:$0xf]
      %v4627 = vld [vmem:[%s4261 + $0x20] sm:$0x1]
      %v4628 = vld [vmem:[%s4261 + $0x24] sm:$0xf]
      %v4629 = vld [vmem:[%s4261 + $0x28] sm:$0xf]
      %v4630 = vld [vmem:[%s4261 + $0x2c] sm:$0x1]
      %v4631 = vld [vmem:[%s4261 + $0x30] sm:$0xf]
      %v4632 = vld [vmem:[%s4261 + $0x34] sm:$0xf]
      %v4633 = vld [vmem:[%s4261 + $0x38] sm:$0x1]
      %v4634 = vld [vmem:[%s4261 + $0x3c] sm:$0xf]
      %v4635 = vld [vmem:[%s4261 + $0x40] sm:$0xf]
      %v4636 = vld [vmem:[%s4261 + $0x44] sm:$0x1]
      %v4637 = vld [vmem:[%s4261 + $0x48] sm:$0xf]
      %v4638 = vld [vmem:[%s4261 + $0x4c] sm:$0xf]
      %v4639 = vld [vmem:[%s4261 + $0x50] sm:$0x1]
      %v4640 = vld [vmem:[%s4261 + $0x54] sm:$0xf]
      %v4641 = vld [vmem:[%s4261 + $0x58] sm:$0xf]
      %v4642 = vld [vmem:[%s4261 + $0x5c] sm:$0x1]
      %v4643 = vld [vmem:[%s4261 + $0x60] sm:$0xf]
      %v4644 = vld [vmem:[%s4261 + $0x64] sm:$0xf]
      %v4645 = vld [vmem:[%s4261 + $0x68] sm:$0x1]
      %v4646 = vld [vmem:[%s4261 + $0x6c] sm:$0xf]
      %v4647 = vld [vmem:[%s4261 + $0x70] sm:$0xf]
      %v4648 = vld [vmem:[%s4261 + $0x74] sm:$0x1]
      %v4649 = vld [vmem:[%s4261 + $0x78] sm:$0xf]
      %v4650 = vld [vmem:[%s4261 + $0x7c] sm:$0xf]
      %v4651 = vld [vmem:[%s4261 + $0x80] sm:$0x1]
      %v4652 = vld [vmem:[%s4261 + $0x84] sm:$0xf]
      %v4653 = vld [vmem:[%s4261 + $0x88] sm:$0xf]
      %v4654 = vld [vmem:[%s4261 + $0x8c] sm:$0x1]
      %v4655 = vld [vmem:[%s4261 + $0x90] sm:$0xf]
      %v4656 = vld [vmem:[%s4261 + $0x94] sm:$0xf]
      %v4657 = vld [vmem:[%s4261 + $0x98] sm:$0x1]
      %v4658 = vld [vmem:[%s4261 + $0x9c] sm:$0xf]
      %v4659 = vld [vmem:[%s4261 + $0xa0] sm:$0xf]
      %v4660 = vld [vmem:[%s4261 + $0xa4] sm:$0x1]
      %v4661 = vld [vmem:[%s4261 + $0xa8] sm:$0xf]
      %v4662 = vld [vmem:[%s4261 + $0xac] sm:$0xf]
      %v4663 = vld [vmem:[%s4261 + $0xb0] sm:$0x1]
      %v4664 = vld [vmem:[%s4261 + $0xb4] sm:$0xf]
      %v4665 = vld [vmem:[%s4261 + $0xb8] sm:$0xf]
      %v4666 = vld [vmem:[%s4261 + $0xbc] sm:$0x1]
      %v4668 = vshrl.u32 %v4619, 16
      %v4670 = vrot.slane %v4668, 4
      %v4671 = vshll.u32 %v4619, 16
      %v4673 = vrot.slane %v4671, 5
      %v4674 = vor.u32 %v4670, %v4673
      %v4675 = vrot.slane %v4674, 4
      %v4677 = vshll.u32 %v4620, 16
      %v4679 = vrot.slane %v4677, 5
      %v4680 = vsel %vm1301, %v4675, %v4679
      %v4681 = vshrl.u32 %v4620, 16
      %v4683 = vrot.slane %v4681, 4
      %v4684 = vor.u32 %v4683, %v4679
      %v4685 = vrot.slane %v4684, 4
      %v4687 = vshll.u32 %v4621, 16
      %v4689 = vrot.slane %v4687, 5
      %v4690 = vsel %vm1301, %v4685, %v4689
      %v4692 = vshrl.u32 %v4622, 16
      %v4694 = vrot.slane %v4692, 4
      %v4695 = vshll.u32 %v4622, 16
      %v4697 = vrot.slane %v4695, 5
      %v4698 = vor.u32 %v4694, %v4697
      %v4699 = vrot.slane %v4698, 4
      %v4701 = vshll.u32 %v4623, 16
      %v4703 = vrot.slane %v4701, 5
      %v4704 = vsel %vm1301, %v4699, %v4703
      %v4705 = vshrl.u32 %v4623, 16
      %v4707 = vrot.slane %v4705, 4
      %v4708 = vor.u32 %v4707, %v4703
      %v4709 = vrot.slane %v4708, 4
      %v4711 = vshll.u32 %v4624, 16
      %v4713 = vrot.slane %v4711, 5
      %v4714 = vsel %vm1301, %v4709, %v4713
      %v4716 = vshrl.u32 %v4625, 16
      %v4718 = vrot.slane %v4716, 4
      %v4719 = vshll.u32 %v4625, 16
      %v4721 = vrot.slane %v4719, 5
      %v4722 = vor.u32 %v4718, %v4721
      %v4723 = vrot.slane %v4722, 4
      %v4725 = vshll.u32 %v4626, 16
      %v4727 = vrot.slane %v4725, 5
      %v4728 = vsel %vm1301, %v4723, %v4727
      %v4729 = vshrl.u32 %v4626, 16
      %v4731 = vrot.slane %v4729, 4
      %v4732 = vor.u32 %v4731, %v4727
      %v4733 = vrot.slane %v4732, 4
      %v4735 = vshll.u32 %v4627, 16
      %v4737 = vrot.slane %v4735, 5
      %v4738 = vsel %vm1301, %v4733, %v4737
      %v4740 = vshrl.u32 %v4628, 16
      %v4742 = vrot.slane %v4740, 4
      %v4743 = vshll.u32 %v4628, 16
      %v4745 = vrot.slane %v4743, 5
      %v4746 = vor.u32 %v4742, %v4745
      %v4747 = vrot.slane %v4746, 4
      %v4749 = vshll.u32 %v4629, 16
      %v4751 = vrot.slane %v4749, 5
      %v4752 = vsel %vm1301, %v4747, %v4751
      %v4753 = vshrl.u32 %v4629, 16
      %v4755 = vrot.slane %v4753, 4
      %v4756 = vor.u32 %v4755, %v4751
      %v4757 = vrot.slane %v4756, 4
      %v4759 = vshll.u32 %v4630, 16
      %v4761 = vrot.slane %v4759, 5
      %v4762 = vsel %vm1301, %v4757, %v4761
      %v4764 = vshrl.u32 %v4631, 16
      %v4766 = vrot.slane %v4764, 4
      %v4767 = vshll.u32 %v4631, 16
      %v4769 = vrot.slane %v4767, 5
      %v4770 = vor.u32 %v4766, %v4769
      %v4771 = vrot.slane %v4770, 4
      %v4773 = vshll.u32 %v4632, 16
      %v4775 = vrot.slane %v4773, 5
      %v4776 = vsel %vm1301, %v4771, %v4775
      %v4777 = vshrl.u32 %v4632, 16
      %v4779 = vrot.slane %v4777, 4
      %v4780 = vor.u32 %v4779, %v4775
      %v4781 = vrot.slane %v4780, 4
      %v4783 = vshll.u32 %v4633, 16
      %v4785 = vrot.slane %v4783, 5
      %v4786 = vsel %vm1301, %v4781, %v4785
      %v4788 = vshrl.u32 %v4634, 16
      %v4790 = vrot.slane %v4788, 4
      %v4791 = vshll.u32 %v4634, 16
      %v4793 = vrot.slane %v4791, 5
      %v4794 = vor.u32 %v4790, %v4793
      %v4795 = vrot.slane %v4794, 4
      %v4797 = vshll.u32 %v4635, 16
      %v4799 = vrot.slane %v4797, 5
      %v4800 = vsel %vm1301, %v4795, %v4799
      %v4801 = vshrl.u32 %v4635, 16
      %v4803 = vrot.slane %v4801, 4
      %v4804 = vor.u32 %v4803, %v4799
      %v4805 = vrot.slane %v4804, 4
      %v4807 = vshll.u32 %v4636, 16
      %v4809 = vrot.slane %v4807, 5
      %v4810 = vsel %vm1301, %v4805, %v4809
      %v4812 = vshrl.u32 %v4637, 16
      %v4814 = vrot.slane %v4812, 4
      %v4815 = vshll.u32 %v4637, 16
      %v4817 = vrot.slane %v4815, 5
      %v4818 = vor.u32 %v4814, %v4817
      %v4819 = vrot.slane %v4818, 4
      %v4821 = vshll.u32 %v4638, 16
      %v4823 = vrot.slane %v4821, 5
      %v4824 = vsel %vm1301, %v4819, %v4823
      %v4825 = vshrl.u32 %v4638, 16
      %v4827 = vrot.slane %v4825, 4
      %v4828 = vor.u32 %v4827, %v4823
      %v4829 = vrot.slane %v4828, 4
      %v4831 = vshll.u32 %v4639, 16
      %v4833 = vrot.slane %v4831, 5
      %v4834 = vsel %vm1301, %v4829, %v4833
      %v4836 = vshrl.u32 %v4640, 16
      %v4838 = vrot.slane %v4836, 4
      %v4839 = vshll.u32 %v4640, 16
      %v4841 = vrot.slane %v4839, 5
      %v4842 = vor.u32 %v4838, %v4841
      %v4843 = vrot.slane %v4842, 4
      %v4845 = vshll.u32 %v4641, 16
      %v4847 = vrot.slane %v4845, 5
      %v4848 = vsel %vm1301, %v4843, %v4847
      %v4849 = vshrl.u32 %v4641, 16
      %v4851 = vrot.slane %v4849, 4
      %v4852 = vor.u32 %v4851, %v4847
      %v4853 = vrot.slane %v4852, 4
      %v4855 = vshll.u32 %v4642, 16
      %v4857 = vrot.slane %v4855, 5
      %v4858 = vsel %vm1301, %v4853, %v4857
      %v4860 = vshrl.u32 %v4643, 16
      %v4862 = vrot.slane %v4860, 4
      %v4863 = vshll.u32 %v4643, 16
      %v4865 = vrot.slane %v4863, 5
      %v4866 = vor.u32 %v4862, %v4865
      %v4867 = vrot.slane %v4866, 4
      %v4869 = vshll.u32 %v4644, 16
      %v4871 = vrot.slane %v4869, 5
      %v4872 = vsel %vm1301, %v4867, %v4871
      %v4873 = vshrl.u32 %v4644, 16
      %v4875 = vrot.slane %v4873, 4
      %v4876 = vor.u32 %v4875, %v4871
      %v4877 = vrot.slane %v4876, 4
      %v4879 = vshll.u32 %v4645, 16
      %v4881 = vrot.slane %v4879, 5
      %v4882 = vsel %vm1301, %v4877, %v4881
      %v4884 = vshrl.u32 %v4646, 16
      %v4886 = vrot.slane %v4884, 4
      %v4887 = vshll.u32 %v4646, 16
      %v4889 = vrot.slane %v4887, 5
      %v4890 = vor.u32 %v4886, %v4889
      %v4891 = vrot.slane %v4890, 4
      %v4893 = vshll.u32 %v4647, 16
      %v4895 = vrot.slane %v4893, 5
      %v4896 = vsel %vm1301, %v4891, %v4895
      %v4897 = vshrl.u32 %v4647, 16
      %v4899 = vrot.slane %v4897, 4
      %v4900 = vor.u32 %v4899, %v4895
      %v4901 = vrot.slane %v4900, 4
      %v4903 = vshll.u32 %v4648, 16
      %v4905 = vrot.slane %v4903, 5
      %v4906 = vsel %vm1301, %v4901, %v4905
      %v4908 = vshrl.u32 %v4649, 16
      %v4910 = vrot.slane %v4908, 4
      %v4911 = vshll.u32 %v4649, 16
      %v4913 = vrot.slane %v4911, 5
      %v4914 = vor.u32 %v4910, %v4913
      %v4915 = vrot.slane %v4914, 4
      %v4917 = vshll.u32 %v4650, 16
      %v4919 = vrot.slane %v4917, 5
      %v4920 = vsel %vm1301, %v4915, %v4919
      %v4921 = vshrl.u32 %v4650, 16
      %v4923 = vrot.slane %v4921, 4
      %v4924 = vor.u32 %v4923, %v4919
      %v4925 = vrot.slane %v4924, 4
      %v4927 = vshll.u32 %v4651, 16
      %v4929 = vrot.slane %v4927, 5
      %v4930 = vsel %vm1301, %v4925, %v4929
      %v4932 = vshrl.u32 %v4652, 16
      %v4934 = vrot.slane %v4932, 4
      %v4935 = vshll.u32 %v4652, 16
      %v4937 = vrot.slane %v4935, 5
      %v4938 = vor.u32 %v4934, %v4937
      %v4939 = vrot.slane %v4938, 4
      %v4941 = vshll.u32 %v4653, 16
      %v4943 = vrot.slane %v4941, 5
      %v4944 = vsel %vm1301, %v4939, %v4943
      %v4945 = vshrl.u32 %v4653, 16
      %v4947 = vrot.slane %v4945, 4
      %v4948 = vor.u32 %v4947, %v4943
      %v4949 = vrot.slane %v4948, 4
      %v4951 = vshll.u32 %v4654, 16
      %v4953 = vrot.slane %v4951, 5
      %v4954 = vsel %vm1301, %v4949, %v4953
      %v4956 = vshrl.u32 %v4655, 16
      %v4958 = vrot.slane %v4956, 4
      %v4959 = vshll.u32 %v4655, 16
      %v4961 = vrot.slane %v4959, 5
      %v4962 = vor.u32 %v4958, %v4961
      %v4963 = vrot.slane %v4962, 4
      %v4965 = vshll.u32 %v4656, 16
      %v4967 = vrot.slane %v4965, 5
      %v4968 = vsel %vm1301, %v4963, %v4967
      %v4969 = vshrl.u32 %v4656, 16
      %v4971 = vrot.slane %v4969, 4
      %v4972 = vor.u32 %v4971, %v4967
      %v4973 = vrot.slane %v4972, 4
      %v4975 = vshll.u32 %v4657, 16
      %v4977 = vrot.slane %v4975, 5
      %v4978 = vsel %vm1301, %v4973, %v4977
      %v4980 = vshrl.u32 %v4658, 16
      %v4982 = vrot.slane %v4980, 4
      %v4983 = vshll.u32 %v4658, 16
      %v4985 = vrot.slane %v4983, 5
      %v4986 = vor.u32 %v4982, %v4985
      %v4987 = vrot.slane %v4986, 4
      %v4989 = vshll.u32 %v4659, 16
      %v4991 = vrot.slane %v4989, 5
      %v4992 = vsel %vm1301, %v4987, %v4991
      %v4993 = vshrl.u32 %v4659, 16
      %v4995 = vrot.slane %v4993, 4
      %v4996 = vor.u32 %v4995, %v4991
      %v4997 = vrot.slane %v4996, 4
      %v4999 = vshll.u32 %v4660, 16
      %v5001 = vrot.slane %v4999, 5
      %v5002 = vsel %vm1301, %v4997, %v5001
      %v5004 = vshrl.u32 %v4661, 16
      %v5006 = vrot.slane %v5004, 4
      %v5007 = vshll.u32 %v4661, 16
      %v5009 = vrot.slane %v5007, 5
      %v5010 = vor.u32 %v5006, %v5009
      %v5011 = vrot.slane %v5010, 4
      %v5013 = vshll.u32 %v4662, 16
      %v5015 = vrot.slane %v5013, 5
      %v5016 = vsel %vm1301, %v5011, %v5015
      %v5017 = vshrl.u32 %v4662, 16
      %v5019 = vrot.slane %v5017, 4
      %v5020 = vor.u32 %v5019, %v5015
      %v5021 = vrot.slane %v5020, 4
      %v5023 = vshll.u32 %v4663, 16
      %v5025 = vrot.slane %v5023, 5
      %v5026 = vsel %vm1301, %v5021, %v5025
      %v5028 = vshrl.u32 %v4664, 16
      %v5030 = vrot.slane %v5028, 4
      %v5031 = vshll.u32 %v4664, 16
      %v5033 = vrot.slane %v5031, 5
      %v5034 = vor.u32 %v5030, %v5033
      %v5035 = vrot.slane %v5034, 4
      %v5037 = vshll.u32 %v4665, 16
      %v5039 = vrot.slane %v5037, 5
      %v5040 = vsel %vm1301, %v5035, %v5039
      %v5041 = vshrl.u32 %v4665, 16
      %v5043 = vrot.slane %v5041, 4
      %v5044 = vor.u32 %v5043, %v5039
      %v5045 = vrot.slane %v5044, 4
      %v5047 = vshll.u32 %v4666, 16
      %v5049 = vrot.slane %v5047, 5
      %v5050 = vsel %vm1301, %v5045, %v5049
      %v5051 = vld [vmem:[%s1 + $0xc] sm:$0xc]
      %v5052 = vunpack.c.l.b16 %v4680
      %v5053 = vunpack.c.l.b16 %v4690
      %v5054 = vunpack.c.l.b16 %v4704
      %v5055 = vunpack.c.l.b16 %v4714
      %v5056 = vunpack.c.l.b16 %v4728
      %v5057 = vunpack.c.l.b16 %v4738
      %v5058 = vunpack.c.l.b16 %v4752
      %v5059 = vunpack.c.l.b16 %v4762
      %v5060 = vunpack.c.l.b16 %v4776
      %v5061 = vunpack.c.l.b16 %v4786
      %v5062 = vunpack.c.l.b16 %v4800
      %v5063 = vunpack.c.l.b16 %v4810
      %v5064 = vunpack.c.l.b16 %v4824
      %v5065 = vunpack.c.l.b16 %v4834
      %v5066 = vunpack.c.l.b16 %v4848
      %v5067 = vunpack.c.l.b16 %v4858
      %v5068 = vunpack.c.l.b16 %v4872
      %v5069 = vunpack.c.l.b16 %v4882
      %v5070 = vunpack.c.l.b16 %v4896
      %v5071 = vunpack.c.l.b16 %v4906
      %v5072 = vunpack.c.l.b16 %v4920
      %v5073 = vunpack.c.l.b16 %v4930
      %v5074 = vunpack.c.l.b16 %v4944
      %v5075 = vunpack.c.l.b16 %v4954
      %v5076 = vunpack.c.l.b16 %v4968
      %v5077 = vunpack.c.l.b16 %v4978
      %v5078 = vunpack.c.l.b16 %v4992
      %v5079 = vunpack.c.l.b16 %v5002
      %v5080 = vunpack.c.l.b16 %v5016
      %v5081 = vunpack.c.l.b16 %v5026
      %v5082 = vunpack.c.l.b16 %v5040
      %v5083 = vunpack.c.l.b16 %v5050
      %v5084 = vpack.c.b16 %v5053, %v5052
      %v5085 = vpack.c.b16 %v5055, %v5054
      %v5086 = vpack.c.b16 %v5057, %v5056
      %v5087 = vpack.c.b16 %v5059, %v5058
      %v5088 = vpack.c.b16 %v5061, %v5060
      %v5089 = vpack.c.b16 %v5063, %v5062
      %v5090 = vpack.c.b16 %v5065, %v5064
      %v5091 = vpack.c.b16 %v5067, %v5066
      %v5092 = vpack.c.b16 %v5069, %v5068
      %v5093 = vpack.c.b16 %v5071, %v5070
      %v5094 = vpack.c.b16 %v5073, %v5072
      %v5095 = vpack.c.b16 %v5075, %v5074
      %v5096 = vpack.c.b16 %v5077, %v5076
      %v5097 = vpack.c.b16 %v5079, %v5078
      %v5098 = vpack.c.b16 %v5081, %v5080
      %v5099 = vpack.c.b16 %v5083, %v5082
      %v5101 = vunpack.c.l.b16 %v5051
      %v5102 = vpack.c.b16 %v5101, %v5101
      %v5103 = vrot.slane %v5102, 2
      %v5105 = vsel %vm1739, %v5084, 0
      %v5108 = vsel %vm1739, %v5085, 0
      %v5111 = vsel %vm1739, %v5086, 0
      %v5114 = vsel %vm1739, %v5087, 0
      %v5117 = vsel %vm1739, %v5088, 0
      %v5120 = vsel %vm1739, %v5089, 0
      %v5123 = vsel %vm1739, %v5090, 0
      %v5126 = vsel %vm1739, %v5091, 0
      %v5129 = vsel %vm1739, %v5092, 0
      %v5132 = vsel %vm1739, %v5093, 0
      %v5135 = vsel %vm1739, %v5094, 0
      %v5138 = vsel %vm1739, %v5095, 0
      %v5141 = vsel %vm1739, %v5096, 0
      %v5144 = vsel %vm1739, %v5097, 0
      %v5147 = vsel %vm1739, %v5098, 0
      %v5150 = vsel %vm1739, %v5099, 0
      %v5153 = vsel %vm1788, %v5103, 0
      %5155 = vmatprep.subr.bf16.mxu0 0
      %5156 = vmatpush1.bf16.msra.mxu0 0
      %5157 = vmatprep.subr.bf16.mxu0 0
      %5158 = vmatpush1.bf16.msra.mxu0 0
      %5159 = vmatprep.subr.bf16.mxu0 0
      %5160 = vmatpush1.bf16.msra.mxu0 0
      %5161 = vmatprep.subr.bf16.mxu0 0
      %5162 = vmatpush1.bf16.msra.mxu0 0
      %5163 = vmatprep.subr.bf16.mxu0 0
      %5164 = vmatpush1.bf16.msra.mxu0 0
      %5165 = vmatprep.subr.bf16.mxu0 0
      %5166 = vmatpush1.bf16.msra.mxu0 0
      %5167 = vmatprep.subr.bf16.mxu0 0
      %5168 = vmatpush1.bf16.msra.mxu0 0
      %5169 = vmatprep.subr.bf16.mxu0 0
      %5170 = vmatpush1.bf16.msra.mxu0 %v5153
      %5171 = vmatprep.subr.bf16.mxu0 0
      %5172 = vmatpush2.bf16.msra.mxu0 0
      %5173 = vmatprep.subr.bf16.mxu0 0
      %5174 = vmatpush2.bf16.msra.mxu0 0
      %5175 = vmatprep.subr.bf16.mxu0 0
      %5176 = vmatpush2.bf16.msra.mxu0 0
      %5177 = vmatprep.subr.bf16.mxu0 0
      %5178 = vmatpush2.bf16.msra.mxu0 0
      %5179 = vmatprep.subr.bf16.mxu0 0
      %5180 = vmatpush2.bf16.msra.mxu0 0
      %5181 = vmatprep.subr.bf16.mxu0 0
      %5182 = vmatpush2.bf16.msra.mxu0 0
      %5183 = vmatprep.subr.bf16.mxu0 0
      %5184 = vmatpush2.bf16.msra.mxu0 0
      %5185 = vmatprep.subr.bf16.mxu0 0
      %5186 = vmatpush2.bf16.msra.mxu0 0
      %5187 = vmatprep.mubr.bf16.mxu0 0
      %5188 = vmatmul.mubr.bf16.gmra.mxu0 %v5105
      %v5189 = vpop.f32.mrf.mxu0
      %v5190 = vadd.f32 0.0, %v5189
      %v5191 = vpop.f32.mrf.mxu0
      %v5192 = vpop.f32.mrf.mxu0
      %v5193 = vadd.f32 0.0, %v5192
      %v5194 = vpop.f32.mrf.mxu0
      %5195 = vmatprep.mubr.bf16.mxu0 0
      %5196 = vmatmul.mubr.bf16.gmra.mxu0 %v5108
      %v5197 = vpop.f32.mrf.mxu0
      %v5198 = vadd.f32 0.0, %v5197
      %v5199 = vpop.f32.mrf.mxu0
      %v5200 = vpop.f32.mrf.mxu0
      %v5201 = vadd.f32 0.0, %v5200
      %v5202 = vpop.f32.mrf.mxu0
      %5203 = vmatprep.mubr.bf16.mxu0 0
      %5204 = vmatmul.mubr.bf16.gmra.mxu0 %v5111
      %v5205 = vpop.f32.mrf.mxu0
      %v5206 = vadd.f32 0.0, %v5205
      %v5207 = vpop.f32.mrf.mxu0
      %v5208 = vpop.f32.mrf.mxu0
      %v5209 = vadd.f32 0.0, %v5208
      %v5210 = vpop.f32.mrf.mxu0
      %5211 = vmatprep.mubr.bf16.mxu0 0
      %5212 = vmatmul.mubr.bf16.gmra.mxu0 %v5114
      %v5213 = vpop.f32.mrf.mxu0
      %v5214 = vadd.f32 0.0, %v5213
      %v5215 = vpop.f32.mrf.mxu0
      %v5216 = vpop.f32.mrf.mxu0
      %v5217 = vadd.f32 0.0, %v5216
      %v5218 = vpop.f32.mrf.mxu0
      %5219 = vmatprep.mubr.bf16.mxu0 0
      %5220 = vmatmul.mubr.bf16.gmra.mxu0 %v5117
      %v5221 = vpop.f32.mrf.mxu0
      %v5222 = vadd.f32 0.0, %v5221
      %v5223 = vpop.f32.mrf.mxu0
      %v5224 = vpop.f32.mrf.mxu0
      %v5225 = vadd.f32 0.0, %v5224
      %v5226 = vpop.f32.mrf.mxu0
      %5227 = vmatprep.mubr.bf16.mxu0 0
      %5228 = vmatmul.mubr.bf16.gmra.mxu0 %v5120
      %v5229 = vpop.f32.mrf.mxu0
      %v5230 = vadd.f32 0.0, %v5229
      %v5231 = vpop.f32.mrf.mxu0
      %v5232 = vpop.f32.mrf.mxu0
      %v5233 = vadd.f32 0.0, %v5232
      %v5234 = vpop.f32.mrf.mxu0
      %5235 = vmatprep.mubr.bf16.mxu0 0
      %5236 = vmatmul.mubr.bf16.gmra.mxu0 %v5123
      %v5237 = vpop.f32.mrf.mxu0
      %v5238 = vadd.f32 0.0, %v5237
      %v5239 = vpop.f32.mrf.mxu0
      %v5240 = vpop.f32.mrf.mxu0
      %v5241 = vadd.f32 0.0, %v5240
      %v5242 = vpop.f32.mrf.mxu0
      %5243 = vmatprep.mubr.bf16.mxu0 0
      %5244 = vmatmul.mubr.bf16.gmra.mxu0 %v5126
      %v5245 = vpop.f32.mrf.mxu0
      %v5246 = vadd.f32 0.0, %v5245
      %v5247 = vpop.f32.mrf.mxu0
      %v5248 = vpop.f32.mrf.mxu0
      %v5249 = vadd.f32 0.0, %v5248
      %v5250 = vpop.f32.mrf.mxu0
      %5251 = vmatprep.mubr.bf16.mxu0 0
      %5252 = vmatmul.mubr.bf16.gmra.mxu0 %v5129
      %v5253 = vpop.f32.mrf.mxu0
      %v5254 = vadd.f32 0.0, %v5253
      %v5255 = vpop.f32.mrf.mxu0
      %v5256 = vpop.f32.mrf.mxu0
      %v5257 = vadd.f32 0.0, %v5256
      %v5258 = vpop.f32.mrf.mxu0
      %5259 = vmatprep.mubr.bf16.mxu0 0
      %5260 = vmatmul.mubr.bf16.gmra.mxu0 %v5132
      %v5261 = vpop.f32.mrf.mxu0
      %v5262 = vadd.f32 0.0, %v5261
      %v5263 = vpop.f32.mrf.mxu0
      %v5264 = vpop.f32.mrf.mxu0
      %v5265 = vadd.f32 0.0, %v5264
      %v5266 = vpop.f32.mrf.mxu0
      %5267 = vmatprep.mubr.bf16.mxu0 0
      %5268 = vmatmul.mubr.bf16.gmra.mxu0 %v5135
      %v5269 = vpop.f32.mrf.mxu0
      %v5270 = vadd.f32 0.0, %v5269
      %v5271 = vpop.f32.mrf.mxu0
      %v5272 = vpop.f32.mrf.mxu0
      %v5273 = vadd.f32 0.0, %v5272
      %v5274 = vpop.f32.mrf.mxu0
      %5275 = vmatprep.mubr.bf16.mxu0 0
      %5276 = vmatmul.mubr.bf16.gmra.mxu0 %v5138
      %v5277 = vpop.f32.mrf.mxu0
      %v5278 = vadd.f32 0.0, %v5277
      %v5279 = vpop.f32.mrf.mxu0
      %v5280 = vpop.f32.mrf.mxu0
      %v5281 = vadd.f32 0.0, %v5280
      %v5282 = vpop.f32.mrf.mxu0
      %5283 = vmatprep.mubr.bf16.mxu0 0
      %5284 = vmatmul.mubr.bf16.gmra.mxu0 %v5141
      %v5285 = vpop.f32.mrf.mxu0
      %v5286 = vadd.f32 0.0, %v5285
      %v5287 = vpop.f32.mrf.mxu0
      %v5288 = vpop.f32.mrf.mxu0
      %v5289 = vadd.f32 0.0, %v5288
      %v5290 = vpop.f32.mrf.mxu0
      %5291 = vmatprep.mubr.bf16.mxu0 0
      %5292 = vmatmul.mubr.bf16.gmra.mxu0 %v5144
      %v5293 = vpop.f32.mrf.mxu0
      %v5294 = vadd.f32 0.0, %v5293
      %v5295 = vpop.f32.mrf.mxu0
      %v5296 = vpop.f32.mrf.mxu0
      %v5297 = vadd.f32 0.0, %v5296
      %v5298 = vpop.f32.mrf.mxu0
      %5299 = vmatprep.mubr.bf16.mxu0 0
      %5300 = vmatmul.mubr.bf16.gmra.mxu0 %v5147
      %v5301 = vpop.f32.mrf.mxu0
      %v5302 = vadd.f32 0.0, %v5301
      %v5303 = vpop.f32.mrf.mxu0
      %v5304 = vpop.f32.mrf.mxu0
      %v5305 = vadd.f32 0.0, %v5304
      %v5306 = vpop.f32.mrf.mxu0
      %5307 = vmatprep.mubr.bf16.mxu0 0
      %5308 = vmatmul.mubr.bf16.gmra.mxu0 %v5150
      %v5309 = vpop.f32.mrf.mxu0
      %v5310 = vadd.f32 0.0, %v5309
      %v5311 = vpop.f32.mrf.mxu0
      %v5312 = vpop.f32.mrf.mxu0
      %v5313 = vadd.f32 0.0, %v5312
      %v5314 = vpop.f32.mrf.mxu0
      %5315 = vdwg.mxu0
      %v5316 = vadd.f32 %v4587, %v5190
      %v5317 = vadd.f32 %v4588, %v5193
      %v5318 = vadd.f32 %v4589, %v5198
      %v5319 = vadd.f32 %v4590, %v5201
      %v5320 = vadd.f32 %v4591, %v5206
      %v5321 = vadd.f32 %v4592, %v5209
      %v5322 = vadd.f32 %v4593, %v5214
      %v5323 = vadd.f32 %v4594, %v5217
      %v5324 = vadd.f32 %v4595, %v5222
      %v5325 = vadd.f32 %v4596, %v5225
      %v5326 = vadd.f32 %v4597, %v5230
      %v5327 = vadd.f32 %v4598, %v5233
      %v5328 = vadd.f32 %v4599, %v5238
      %v5329 = vadd.f32 %v4600, %v5241
      %v5330 = vadd.f32 %v4601, %v5246
      %v5331 = vadd.f32 %v4602, %v5249
      %v5332 = vadd.f32 %v4603, %v5254
      %v5333 = vadd.f32 %v4604, %v5257
      %v5334 = vadd.f32 %v4605, %v5262
      %v5335 = vadd.f32 %v4606, %v5265
      %v5336 = vadd.f32 %v4607, %v5270
      %v5337 = vadd.f32 %v4608, %v5273
      %v5338 = vadd.f32 %v4609, %v5278
      %v5339 = vadd.f32 %v4610, %v5281
      %v5340 = vadd.f32 %v4611, %v5286
      %v5341 = vadd.f32 %v4612, %v5289
      %v5342 = vadd.f32 %v4613, %v5294
      %v5343 = vadd.f32 %v4614, %v5297
      %v5344 = vadd.f32 %v4615, %v5302
      %v5345 = vadd.f32 %v4616, %v5305
      %v5346 = vadd.f32 %v4617, %v5310
      %v5347 = vadd.f32 %v4618, %v5313
      %v5348 = vld [vmem:[%s4261] sm:$0xe]
      %v5349 = vld [vmem:[%s4261 + $0xc] sm:$0xe]
      %v5350 = vld [vmem:[%s4261 + $0x18] sm:$0xe]
      %v5351 = vld [vmem:[%s4261 + $0x24] sm:$0xe]
      %v5352 = vld [vmem:[%s4261 + $0x30] sm:$0xe]
      %v5353 = vld [vmem:[%s4261 + $0x3c] sm:$0xe]
      %v5354 = vld [vmem:[%s4261 + $0x48] sm:$0xe]
      %v5355 = vld [vmem:[%s4261 + $0x54] sm:$0xe]
      %v5356 = vld [vmem:[%s4261 + $0x60] sm:$0xe]
      %v5357 = vld [vmem:[%s4261 + $0x6c] sm:$0xe]
      %v5358 = vld [vmem:[%s4261 + $0x78] sm:$0xe]
      %v5359 = vld [vmem:[%s4261 + $0x84] sm:$0xe]
      %v5360 = vld [vmem:[%s4261 + $0x90] sm:$0xe]
      %v5361 = vld [vmem:[%s4261 + $0x9c] sm:$0xe]
      %v5362 = vld [vmem:[%s4261 + $0xa8] sm:$0xe]
      %v5363 = vld [vmem:[%s4261 + $0xb4] sm:$0xe]
      %v5412 = vrot.slane %v5348, 5
      %v5413 = vrot.slane %v5412, 4
      %v5414 = vrot.slane %v4620, 5
      %v5415 = vsel %vm2295, %v5413, %v5414
      %v5416 = vrot.slane %v5414, 4
      %v5417 = vrot.slane %v4621, 5
      %v5418 = vsel %vm2295, %v5416, %v5417
      %v5419 = vrot.slane %v5349, 5
      %v5420 = vrot.slane %v5419, 4
      %v5421 = vrot.slane %v4623, 5
      %v5422 = vsel %vm2295, %v5420, %v5421
      %v5423 = vrot.slane %v5421, 4
      %v5424 = vrot.slane %v4624, 5
      %v5425 = vsel %vm2295, %v5423, %v5424
      %v5426 = vrot.slane %v5350, 5
      %v5427 = vrot.slane %v5426, 4
      %v5428 = vrot.slane %v4626, 5
      %v5429 = vsel %vm2295, %v5427, %v5428
      %v5430 = vrot.slane %v5428, 4
      %v5431 = vrot.slane %v4627, 5
      %v5432 = vsel %vm2295, %v5430, %v5431
      %v5433 = vrot.slane %v5351, 5
      %v5434 = vrot.slane %v5433, 4
      %v5435 = vrot.slane %v4629, 5
      %v5436 = vsel %vm2295, %v5434, %v5435
      %v5437 = vrot.slane %v5435, 4
      %v5438 = vrot.slane %v4630, 5
      %v5439 = vsel %vm2295, %v5437, %v5438
      %v5440 = vrot.slane %v5352, 5
      %v5441 = vrot.slane %v5440, 4
      %v5442 = vrot.slane %v4632, 5
      %v5443 = vsel %vm2295, %v5441, %v5442
      %v5444 = vrot.slane %v5442, 4
      %v5445 = vrot.slane %v4633, 5
      %v5446 = vsel %vm2295, %v5444, %v5445
      %v5447 = vrot.slane %v5353, 5
      %v5448 = vrot.slane %v5447, 4
      %v5449 = vrot.slane %v4635, 5
      %v5450 = vsel %vm2295, %v5448, %v5449
      %v5451 = vrot.slane %v5449, 4
      %v5452 = vrot.slane %v4636, 5
      %v5453 = vsel %vm2295, %v5451, %v5452
      %v5454 = vrot.slane %v5354, 5
      %v5455 = vrot.slane %v5454, 4
      %v5456 = vrot.slane %v4638, 5
      %v5457 = vsel %vm2295, %v5455, %v5456
      %v5458 = vrot.slane %v5456, 4
      %v5459 = vrot.slane %v4639, 5
      %v5460 = vsel %vm2295, %v5458, %v5459
      %v5461 = vrot.slane %v5355, 5
      %v5462 = vrot.slane %v5461, 4
      %v5463 = vrot.slane %v4641, 5
      %v5464 = vsel %vm2295, %v5462, %v5463
      %v5465 = vrot.slane %v5463, 4
      %v5466 = vrot.slane %v4642, 5
      %v5467 = vsel %vm2295, %v5465, %v5466
      %v5468 = vrot.slane %v5356, 5
      %v5469 = vrot.slane %v5468, 4
      %v5470 = vrot.slane %v4644, 5
      %v5471 = vsel %vm2295, %v5469, %v5470
      %v5472 = vrot.slane %v5470, 4
      %v5473 = vrot.slane %v4645, 5
      %v5474 = vsel %vm2295, %v5472, %v5473
      %v5475 = vrot.slane %v5357, 5
      %v5476 = vrot.slane %v5475, 4
      %v5477 = vrot.slane %v4647, 5
      %v5478 = vsel %vm2295, %v5476, %v5477
      %v5479 = vrot.slane %v5477, 4
      %v5480 = vrot.slane %v4648, 5
      %v5481 = vsel %vm2295, %v5479, %v5480
      %v5482 = vrot.slane %v5358, 5
      %v5483 = vrot.slane %v5482, 4
      %v5484 = vrot.slane %v4650, 5
      %v5485 = vsel %vm2295, %v5483, %v5484
      %v5486 = vrot.slane %v5484, 4
      %v5487 = vrot.slane %v4651, 5
      %v5488 = vsel %vm2295, %v5486, %v5487
      %v5489 = vrot.slane %v5359, 5
      %v5490 = vrot.slane %v5489, 4
      %v5491 = vrot.slane %v4653, 5
      %v5492 = vsel %vm2295, %v5490, %v5491
      %v5493 = vrot.slane %v5491, 4
      %v5494 = vrot.slane %v4654, 5
      %v5495 = vsel %vm2295, %v5493, %v5494
      %v5496 = vrot.slane %v5360, 5
      %v5497 = vrot.slane %v5496, 4
      %v5498 = vrot.slane %v4656, 5
      %v5499 = vsel %vm2295, %v5497, %v5498
      %v5500 = vrot.slane %v5498, 4
      %v5501 = vrot.slane %v4657, 5
      %v5502 = vsel %vm2295, %v5500, %v5501
      %v5503 = vrot.slane %v5361, 5
      %v5504 = vrot.slane %v5503, 4
      %v5505 = vrot.slane %v4659, 5
      %v5506 = vsel %vm2295, %v5504, %v5505
      %v5507 = vrot.slane %v5505, 4
      %v5508 = vrot.slane %v4660, 5
      %v5509 = vsel %vm2295, %v5507, %v5508
      %v5510 = vrot.slane %v5362, 5
      %v5511 = vrot.slane %v5510, 4
      %v5512 = vrot.slane %v4662, 5
      %v5513 = vsel %vm2295, %v5511, %v5512
      %v5514 = vrot.slane %v5512, 4
      %v5515 = vrot.slane %v4663, 5
      %v5516 = vsel %vm2295, %v5514, %v5515
      %v5517 = vrot.slane %v5363, 5
      %v5518 = vrot.slane %v5517, 4
      %v5519 = vrot.slane %v4665, 5
      %v5520 = vsel %vm2295, %v5518, %v5519
      %v5521 = vrot.slane %v5519, 4
      %v5522 = vrot.slane %v4666, 5
      %v5523 = vsel %vm2295, %v5521, %v5522
      %v5524 = vld [vmem:[%s1 + $0x10] sm:$0x3]
      %v5525 = vunpack.c.l.b16 %v5415
      %v5526 = vunpack.c.l.b16 %v5418
      %v5527 = vunpack.c.l.b16 %v5422
      %v5528 = vunpack.c.l.b16 %v5425
      %v5529 = vunpack.c.l.b16 %v5429
      %v5530 = vunpack.c.l.b16 %v5432
      %v5531 = vunpack.c.l.b16 %v5436
      %v5532 = vunpack.c.l.b16 %v5439
      %v5533 = vunpack.c.l.b16 %v5443
      %v5534 = vunpack.c.l.b16 %v5446
      %v5535 = vunpack.c.l.b16 %v5450
      %v5536 = vunpack.c.l.b16 %v5453
      %v5537 = vunpack.c.l.b16 %v5457
      %v5538 = vunpack.c.l.b16 %v5460
      %v5539 = vunpack.c.l.b16 %v5464
      %v5540 = vunpack.c.l.b16 %v5467
      %v5541 = vunpack.c.l.b16 %v5471
      %v5542 = vunpack.c.l.b16 %v5474
      %v5543 = vunpack.c.l.b16 %v5478
      %v5544 = vunpack.c.l.b16 %v5481
      %v5545 = vunpack.c.l.b16 %v5485
      %v5546 = vunpack.c.l.b16 %v5488
      %v5547 = vunpack.c.l.b16 %v5492
      %v5548 = vunpack.c.l.b16 %v5495
      %v5549 = vunpack.c.l.b16 %v5499
      %v5550 = vunpack.c.l.b16 %v5502
      %v5551 = vunpack.c.l.b16 %v5506
      %v5552 = vunpack.c.l.b16 %v5509
      %v5553 = vunpack.c.l.b16 %v5513
      %v5554 = vunpack.c.l.b16 %v5516
      %v5555 = vunpack.c.l.b16 %v5520
      %v5556 = vunpack.c.l.b16 %v5523
      %v5557 = vpack.c.b16 %v5526, %v5525
      %v5558 = vpack.c.b16 %v5528, %v5527
      %v5559 = vpack.c.b16 %v5530, %v5529
      %v5560 = vpack.c.b16 %v5532, %v5531
      %v5561 = vpack.c.b16 %v5534, %v5533
      %v5562 = vpack.c.b16 %v5536, %v5535
      %v5563 = vpack.c.b16 %v5538, %v5537
      %v5564 = vpack.c.b16 %v5540, %v5539
      %v5565 = vpack.c.b16 %v5542, %v5541
      %v5566 = vpack.c.b16 %v5544, %v5543
      %v5567 = vpack.c.b16 %v5546, %v5545
      %v5568 = vpack.c.b16 %v5548, %v5547
      %v5569 = vpack.c.b16 %v5550, %v5549
      %v5570 = vpack.c.b16 %v5552, %v5551
      %v5571 = vpack.c.b16 %v5554, %v5553
      %v5572 = vpack.c.b16 %v5556, %v5555
      %v5574 = vsel %vm1739, %v5557, 0
      %v5577 = vsel %vm1739, %v5558, 0
      %v5580 = vsel %vm1739, %v5559, 0
      %v5583 = vsel %vm1739, %v5560, 0
      %v5586 = vsel %vm1739, %v5561, 0
      %v5589 = vsel %vm1739, %v5562, 0
      %v5592 = vsel %vm1739, %v5563, 0
      %v5595 = vsel %vm1739, %v5564, 0
      %v5598 = vsel %vm1739, %v5565, 0
      %v5601 = vsel %vm1739, %v5566, 0
      %v5604 = vsel %vm1739, %v5567, 0
      %v5607 = vsel %vm1739, %v5568, 0
      %v5610 = vsel %vm1739, %v5569, 0
      %v5613 = vsel %vm1739, %v5570, 0
      %v5616 = vsel %vm1739, %v5571, 0
      %v5619 = vsel %vm1739, %v5572, 0
      %v5622 = vsel %vm1788, %v5524, 0
      %5624 = vmatprep.subr.bf16.mxu0 0
      %5625 = vmatpush1.bf16.msra.mxu0 0
      %5626 = vmatprep.subr.bf16.mxu0 0
      %5627 = vmatpush1.bf16.msra.mxu0 0
      %5628 = vmatprep.subr.bf16.mxu0 0
      %5629 = vmatpush1.bf16.msra.mxu0 0
      %5630 = vmatprep.subr.bf16.mxu0 0
      %5631 = vmatpush1.bf16.msra.mxu0 0
      %5632 = vmatprep.subr.bf16.mxu0 0
      %5633 = vmatpush1.bf16.msra.mxu0 0
      %5634 = vmatprep.subr.bf16.mxu0 0
      %5635 = vmatpush1.bf16.msra.mxu0 0
      %5636 = vmatprep.subr.bf16.mxu0 0
      %5637 = vmatpush1.bf16.msra.mxu0 0
      %5638 = vmatprep.subr.bf16.mxu0 0
      %5639 = vmatpush1.bf16.msra.mxu0 %v5622
      %5640 = vmatprep.subr.bf16.mxu0 0
      %5641 = vmatpush2.bf16.msra.mxu0 0
      %5642 = vmatprep.subr.bf16.mxu0 0
      %5643 = vmatpush2.bf16.msra.mxu0 0
      %5644 = vmatprep.subr.bf16.mxu0 0
      %5645 = vmatpush2.bf16.msra.mxu0 0
      %5646 = vmatprep.subr.bf16.mxu0 0
      %5647 = vmatpush2.bf16.msra.mxu0 0
      %5648 = vmatprep.subr.bf16.mxu0 0
      %5649 = vmatpush2.bf16.msra.mxu0 0
      %5650 = vmatprep.subr.bf16.mxu0 0
      %5651 = vmatpush2.bf16.msra.mxu0 0
      %5652 = vmatprep.subr.bf16.mxu0 0
      %5653 = vmatpush2.bf16.msra.mxu0 0
      %5654 = vmatprep.subr.bf16.mxu0 0
      %5655 = vmatpush2.bf16.msra.mxu0 0
      %5656 = vmatprep.mubr.bf16.mxu0 0
      %5657 = vmatmul.mubr.bf16.gmra.mxu0 %v5574
      %v5658 = vpop.f32.mrf.mxu0
      %v5659 = vadd.f32 0.0, %v5658
      %v5660 = vpop.f32.mrf.mxu0
      %v5661 = vpop.f32.mrf.mxu0
      %v5662 = vadd.f32 0.0, %v5661
      %v5663 = vpop.f32.mrf.mxu0
      %5664 = vmatprep.mubr.bf16.mxu0 0
      %5665 = vmatmul.mubr.bf16.gmra.mxu0 %v5577
      %v5666 = vpop.f32.mrf.mxu0
      %v5667 = vadd.f32 0.0, %v5666
      %v5668 = vpop.f32.mrf.mxu0
      %v5669 = vpop.f32.mrf.mxu0
      %v5670 = vadd.f32 0.0, %v5669
      %v5671 = vpop.f32.mrf.mxu0
      %5672 = vmatprep.mubr.bf16.mxu0 0
      %5673 = vmatmul.mubr.bf16.gmra.mxu0 %v5580
      %v5674 = vpop.f32.mrf.mxu0
      %v5675 = vadd.f32 0.0, %v5674
      %v5676 = vpop.f32.mrf.mxu0
      %v5677 = vpop.f32.mrf.mxu0
      %v5678 = vadd.f32 0.0, %v5677
      %v5679 = vpop.f32.mrf.mxu0
      %5680 = vmatprep.mubr.bf16.mxu0 0
      %5681 = vmatmul.mubr.bf16.gmra.mxu0 %v5583
      %v5682 = vpop.f32.mrf.mxu0
      %v5683 = vadd.f32 0.0, %v5682
      %v5684 = vpop.f32.mrf.mxu0
      %v5685 = vpop.f32.mrf.mxu0
      %v5686 = vadd.f32 0.0, %v5685
      %v5687 = vpop.f32.mrf.mxu0
      %5688 = vmatprep.mubr.bf16.mxu0 0
      %5689 = vmatmul.mubr.bf16.gmra.mxu0 %v5586
      %v5690 = vpop.f32.mrf.mxu0
      %v5691 = vadd.f32 0.0, %v5690
      %v5692 = vpop.f32.mrf.mxu0
      %v5693 = vpop.f32.mrf.mxu0
      %v5694 = vadd.f32 0.0, %v5693
      %v5695 = vpop.f32.mrf.mxu0
      %5696 = vmatprep.mubr.bf16.mxu0 0
      %5697 = vmatmul.mubr.bf16.gmra.mxu0 %v5589
      %v5698 = vpop.f32.mrf.mxu0
      %v5699 = vadd.f32 0.0, %v5698
      %v5700 = vpop.f32.mrf.mxu0
      %v5701 = vpop.f32.mrf.mxu0
      %v5702 = vadd.f32 0.0, %v5701
      %v5703 = vpop.f32.mrf.mxu0
      %5704 = vmatprep.mubr.bf16.mxu0 0
      %5705 = vmatmul.mubr.bf16.gmra.mxu0 %v5592
      %v5706 = vpop.f32.mrf.mxu0
      %v5707 = vadd.f32 0.0, %v5706
      %v5708 = vpop.f32.mrf.mxu0
      %v5709 = vpop.f32.mrf.mxu0
      %v5710 = vadd.f32 0.0, %v5709
      %v5711 = vpop.f32.mrf.mxu0
      %5712 = vmatprep.mubr.bf16.mxu0 0
      %5713 = vmatmul.mubr.bf16.gmra.mxu0 %v5595
      %v5714 = vpop.f32.mrf.mxu0
      %v5715 = vadd.f32 0.0, %v5714
      %v5716 = vpop.f32.mrf.mxu0
      %v5717 = vpop.f32.mrf.mxu0
      %v5718 = vadd.f32 0.0, %v5717
      %v5719 = vpop.f32.mrf.mxu0
      %5720 = vmatprep.mubr.bf16.mxu0 0
      %5721 = vmatmul.mubr.bf16.gmra.mxu0 %v5598
      %v5722 = vpop.f32.mrf.mxu0
      %v5723 = vadd.f32 0.0, %v5722
      %v5724 = vpop.f32.mrf.mxu0
      %v5725 = vpop.f32.mrf.mxu0
      %v5726 = vadd.f32 0.0, %v5725
      %v5727 = vpop.f32.mrf.mxu0
      %5728 = vmatprep.mubr.bf16.mxu0 0
      %5729 = vmatmul.mubr.bf16.gmra.mxu0 %v5601
      %v5730 = vpop.f32.mrf.mxu0
      %v5731 = vadd.f32 0.0, %v5730
      %v5732 = vpop.f32.mrf.mxu0
      %v5733 = vpop.f32.mrf.mxu0
      %v5734 = vadd.f32 0.0, %v5733
      %v5735 = vpop.f32.mrf.mxu0
      %5736 = vmatprep.mubr.bf16.mxu0 0
      %5737 = vmatmul.mubr.bf16.gmra.mxu0 %v5604
      %v5738 = vpop.f32.mrf.mxu0
      %v5739 = vadd.f32 0.0, %v5738
      %v5740 = vpop.f32.mrf.mxu0
      %v5741 = vpop.f32.mrf.mxu0
      %v5742 = vadd.f32 0.0, %v5741
      %v5743 = vpop.f32.mrf.mxu0
      %5744 = vmatprep.mubr.bf16.mxu0 0
      %5745 = vmatmul.mubr.bf16.gmra.mxu0 %v5607
      %v5746 = vpop.f32.mrf.mxu0
      %v5747 = vadd.f32 0.0, %v5746
      %v5748 = vpop.f32.mrf.mxu0
      %v5749 = vpop.f32.mrf.mxu0
      %v5750 = vadd.f32 0.0, %v5749
      %v5751 = vpop.f32.mrf.mxu0
      %5752 = vmatprep.mubr.bf16.mxu0 0
      %5753 = vmatmul.mubr.bf16.gmra.mxu0 %v5610
      %v5754 = vpop.f32.mrf.mxu0
      %v5755 = vadd.f32 0.0, %v5754
      %v5756 = vpop.f32.mrf.mxu0
      %v5757 = vpop.f32.mrf.mxu0
      %v5758 = vadd.f32 0.0, %v5757
      %v5759 = vpop.f32.mrf.mxu0
      %5760 = vmatprep.mubr.bf16.mxu0 0
      %5761 = vmatmul.mubr.bf16.gmra.mxu0 %v5613
      %v5762 = vpop.f32.mrf.mxu0
      %v5763 = vadd.f32 0.0, %v5762
      %v5764 = vpop.f32.mrf.mxu0
      %v5765 = vpop.f32.mrf.mxu0
      %v5766 = vadd.f32 0.0, %v5765
      %v5767 = vpop.f32.mrf.mxu0
      %5768 = vmatprep.mubr.bf16.mxu0 0
      %5769 = vmatmul.mubr.bf16.gmra.mxu0 %v5616
      %v5770 = vpop.f32.mrf.mxu0
      %v5771 = vadd.f32 0.0, %v5770
      %v5772 = vpop.f32.mrf.mxu0
      %v5773 = vpop.f32.mrf.mxu0
      %v5774 = vadd.f32 0.0, %v5773
      %v5775 = vpop.f32.mrf.mxu0
      %5776 = vmatprep.mubr.bf16.mxu0 0
      %5777 = vmatmul.mubr.bf16.gmra.mxu0 %v5619
      %v5778 = vpop.f32.mrf.mxu0
      %v5779 = vadd.f32 0.0, %v5778
      %v5780 = vpop.f32.mrf.mxu0
      %v5781 = vpop.f32.mrf.mxu0
      %v5782 = vadd.f32 0.0, %v5781
      %v5783 = vpop.f32.mrf.mxu0
      %5784 = vdwg.mxu0
      %v5785 = vadd.f32 %v5316, %v5659
      %v5786 = vadd.f32 %v5317, %v5662
      %v5787 = vadd.f32 %v5318, %v5667
      %v5788 = vadd.f32 %v5319, %v5670
      %v5789 = vadd.f32 %v5320, %v5675
      %v5790 = vadd.f32 %v5321, %v5678
      %v5791 = vadd.f32 %v5322, %v5683
      %v5792 = vadd.f32 %v5323, %v5686
      %v5793 = vadd.f32 %v5324, %v5691
      %v5794 = vadd.f32 %v5325, %v5694
      %v5795 = vadd.f32 %v5326, %v5699
      %v5796 = vadd.f32 %v5327, %v5702
      %v5797 = vadd.f32 %v5328, %v5707
      %v5798 = vadd.f32 %v5329, %v5710
      %v5799 = vadd.f32 %v5330, %v5715
      %v5800 = vadd.f32 %v5331, %v5718
      %v5801 = vadd.f32 %v5332, %v5723
      %v5802 = vadd.f32 %v5333, %v5726
      %v5803 = vadd.f32 %v5334, %v5731
      %v5804 = vadd.f32 %v5335, %v5734
      %v5805 = vadd.f32 %v5336, %v5739
      %v5806 = vadd.f32 %v5337, %v5742
      %v5807 = vadd.f32 %v5338, %v5747
      %v5808 = vadd.f32 %v5339, %v5750
      %v5809 = vadd.f32 %v5340, %v5755
      %v5810 = vadd.f32 %v5341, %v5758
      %v5811 = vadd.f32 %v5342, %v5763
      %v5812 = vadd.f32 %v5343, %v5766
      %v5813 = vadd.f32 %v5344, %v5771
      %v5814 = vadd.f32 %v5345, %v5774
      %v5815 = vadd.f32 %v5346, %v5779
      %v5816 = vadd.f32 %v5347, %v5782
      %5849 = vrot.lane.b32.xlu0 %v5785, 4
      %v5850 = vpop.permute.xlu0 %5849
      %5851 = vrot.lane.b32.xlu0 %v5786, 4
      %v5852 = vpop.permute.xlu0 %5851
      %5853 = vrot.lane.b32.xlu0 %v5787, 4
      %v5854 = vpop.permute.xlu0 %5853
      %5855 = vrot.lane.b32.xlu0 %v5788, 4
      %v5856 = vpop.permute.xlu0 %5855
      %5857 = vrot.lane.b32.xlu0 %v5789, 4
      %v5858 = vpop.permute.xlu0 %5857
      %5859 = vrot.lane.b32.xlu0 %v5790, 4
      %v5860 = vpop.permute.xlu0 %5859
      %5861 = vrot.lane.b32.xlu0 %v5791, 4
      %v5862 = vpop.permute.xlu0 %5861
      %5863 = vrot.lane.b32.xlu0 %v5792, 4
      %v5864 = vpop.permute.xlu0 %5863
      %5865 = vrot.lane.b32.xlu0 %v5793, 4
      %v5866 = vpop.permute.xlu0 %5865
      %5867 = vrot.lane.b32.xlu0 %v5794, 4
      %v5868 = vpop.permute.xlu0 %5867
      %5869 = vrot.lane.b32.xlu0 %v5795, 4
      %v5870 = vpop.permute.xlu0 %5869
      %5871 = vrot.lane.b32.xlu0 %v5796, 4
      %v5872 = vpop.permute.xlu0 %5871
      %5873 = vrot.lane.b32.xlu0 %v5797, 4
      %v5874 = vpop.permute.xlu0 %5873
      %5875 = vrot.lane.b32.xlu0 %v5798, 4
      %v5876 = vpop.permute.xlu0 %5875
      %5877 = vrot.lane.b32.xlu0 %v5799, 4
      %v5878 = vpop.permute.xlu0 %5877
      %5879 = vrot.lane.b32.xlu0 %v5800, 4
      %v5880 = vpop.permute.xlu0 %5879
      %5881 = vrot.lane.b32.xlu0 %v5801, 4
      %v5882 = vpop.permute.xlu0 %5881
      %5883 = vrot.lane.b32.xlu0 %v5802, 4
      %v5884 = vpop.permute.xlu0 %5883
      %5885 = vrot.lane.b32.xlu0 %v5803, 4
      %v5886 = vpop.permute.xlu0 %5885
      %5887 = vrot.lane.b32.xlu0 %v5804, 4
      %v5888 = vpop.permute.xlu0 %5887
      %5889 = vrot.lane.b32.xlu0 %v5805, 4
      %v5890 = vpop.permute.xlu0 %5889
      %5891 = vrot.lane.b32.xlu0 %v5806, 4
      %v5892 = vpop.permute.xlu0 %5891
      %5893 = vrot.lane.b32.xlu0 %v5807, 4
      %v5894 = vpop.permute.xlu0 %5893
      %5895 = vrot.lane.b32.xlu0 %v5808, 4
      %v5896 = vpop.permute.xlu0 %5895
      %5897 = vrot.lane.b32.xlu0 %v5809, 4
      %v5898 = vpop.permute.xlu0 %5897
      %5899 = vrot.lane.b32.xlu0 %v5810, 4
      %v5900 = vpop.permute.xlu0 %5899
      %5901 = vrot.lane.b32.xlu0 %v5811, 4
      %v5902 = vpop.permute.xlu0 %5901
      %5903 = vrot.lane.b32.xlu0 %v5812, 4
      %v5904 = vpop.permute.xlu0 %5903
      %5905 = vrot.lane.b32.xlu0 %v5813, 4
      %v5906 = vpop.permute.xlu0 %5905
      %5907 = vrot.lane.b32.xlu0 %v5814, 4
      %v5908 = vpop.permute.xlu0 %5907
      %5909 = vrot.lane.b32.xlu0 %v5815, 4
      %v5910 = vpop.permute.xlu0 %5909
      %5911 = vrot.lane.b32.xlu0 %v5816, 4
      %v5912 = vpop.permute.xlu0 %5911
      %v5945 = vsel %vm1739, %v237, %v5850
      %v5946 = vsel %vm1739, %v238, %v5852
      %v5947 = vsel %vm1739, %v239, %v5854
      %v5948 = vsel %vm1739, %v240, %v5856
      %v5949 = vsel %vm1739, %v241, %v5858
      %v5950 = vsel %vm1739, %v242, %v5860
      %v5951 = vsel %vm1739, %v243, %v5862
      %v5952 = vsel %vm1739, %v244, %v5864
      %v5953 = vsel %vm1739, %v245, %v5866
      %v5954 = vsel %vm1739, %v246, %v5868
      %v5955 = vsel %vm1739, %v247, %v5870
      %v5956 = vsel %vm1739, %v248, %v5872
      %v5957 = vsel %vm1739, %v249, %v5874
      %v5958 = vsel %vm1739, %v250, %v5876
      %v5959 = vsel %vm1739, %v251, %v5878
      %v5960 = vsel %vm1739, %v252, %v5880
      %v5961 = vsel %vm1739, %v253, %v5882
      %v5962 = vsel %vm1739, %v254, %v5884
      %v5963 = vsel %vm1739, %v255, %v5886
      %v5964 = vsel %vm1739, %v256, %v5888
      %v5965 = vsel %vm1739, %v257, %v5890
      %v5966 = vsel %vm1739, %v258, %v5892
      %v5967 = vsel %vm1739, %v259, %v5894
      %v5968 = vsel %vm1739, %v260, %v5896
      %v5969 = vsel %vm1739, %v261, %v5898
      %v5970 = vsel %vm1739, %v262, %v5900
      %v5971 = vsel %vm1739, %v263, %v5902
      %v5972 = vsel %vm1739, %v264, %v5904
      %v5973 = vsel %vm1739, %v265, %v5906
      %v5974 = vsel %vm1739, %v266, %v5908
      %v5975 = vsel %vm1739, %v267, %v5910
      %v5976 = vsel %vm1739, %v268, %v5912
      %vm5977 = vcmask 97280
      %5978 = vst.msk [vmem:[%s221] sm:$0xff] %vm5977, %v5945
      %5979 = vst.msk [vmem:[%s221 + $0x8] sm:$0xff] %vm5977, %v5946
      %5980 = vst.msk [vmem:[%s221 + $0x10] sm:$0xff] %vm5977, %v5947
      %5981 = vst.msk [vmem:[%s221 + $0x18] sm:$0xff] %vm5977, %v5948
      %5982 = vst.msk [vmem:[%s221 + $0x20] sm:$0xff] %vm5977, %v5949
      %5983 = vst.msk [vmem:[%s221 + $0x28] sm:$0xff] %vm5977, %v5950
      %5984 = vst.msk [vmem:[%s221 + $0x30] sm:$0xff] %vm5977, %v5951
      %5985 = vst.msk [vmem:[%s221 + $0x38] sm:$0xff] %vm5977, %v5952
      %5986 = vst.msk [vmem:[%s221 + $0x40] sm:$0xff] %vm5977, %v5953
      %5987 = vst.msk [vmem:[%s221 + $0x48] sm:$0xff] %vm5977, %v5954
      %5988 = vst.msk [vmem:[%s221 + $0x50] sm:$0xff] %vm5977, %v5955
      %5989 = vst.msk [vmem:[%s221 + $0x58] sm:$0xff] %vm5977, %v5956
      %5990 = vst.msk [vmem:[%s221 + $0x60] sm:$0xff] %vm5977, %v5957
      %5991 = vst.msk [vmem:[%s221 + $0x68] sm:$0xff] %vm5977, %v5958
      %5992 = vst.msk [vmem:[%s221 + $0x70] sm:$0xff] %vm5977, %v5959
      %5993 = vst.msk [vmem:[%s221 + $0x78] sm:$0xff] %vm5977, %v5960
      %5994 = vst.msk [vmem:[%s221 + $0x80] sm:$0xff] %vm5977, %v5961
      %5995 = vst.msk [vmem:[%s221 + $0x88] sm:$0xff] %vm5977, %v5962
      %5996 = vst.msk [vmem:[%s221 + $0x90] sm:$0xff] %vm5977, %v5963
      %5997 = vst.msk [vmem:[%s221 + $0x98] sm:$0xff] %vm5977, %v5964
      %5998 = vst.msk [vmem:[%s221 + $0xa0] sm:$0xff] %vm5977, %v5965
      %5999 = vst.msk [vmem:[%s221 + $0xa8] sm:$0xff] %vm5977, %v5966
      %6000 = vst.msk [vmem:[%s221 + $0xb0] sm:$0xff] %vm5977, %v5967
      %6001 = vst.msk [vmem:[%s221 + $0xb8] sm:$0xff] %vm5977, %v5968
      %6002 = vst.msk [vmem:[%s221 + $0xc0] sm:$0xff] %vm5977, %v5969
      %6003 = vst.msk [vmem:[%s221 + $0xc8] sm:$0xff] %vm5977, %v5970
      %6004 = vst.msk [vmem:[%s221 + $0xd0] sm:$0xff] %vm5977, %v5971
      %6005 = vst.msk [vmem:[%s221 + $0xd8] sm:$0xff] %vm5977, %v5972
      %6006 = vst.msk [vmem:[%s221 + $0xe0] sm:$0xff] %vm5977, %v5973
      %6007 = vst.msk [vmem:[%s221 + $0xe8] sm:$0xff] %vm5977, %v5974
      %6008 = vst.msk [vmem:[%s221 + $0xf0] sm:$0xff] %vm5977, %v5975
      %6009 = vst.msk [vmem:[%s221 + $0xf8] sm:$0xff] %vm5977, %v5976
      %s6010 = smul.u32 16, %s20
      %p6011 = scmp.lt.s32.totalorder %s19, 1
      %s6012 = scalar_select %p6011, %s19, 1
      %p6013 = scmp.lt.s32.totalorder %s6010, 15
      %s6014 = scalar_select %p6013, %s6010, 15
      %s6015 = smul.addr %s6014, 2
      %s6016 = smul.addr %s6012, 32
      %s6017 = sadd.s32 %s6015, %s6016
      %s6018 = smul.addr %s6017, 8
      %s6019 = scalar_lea.vmem %s4, %s6018
      // Predicated region
      $region37: #{dense_layer_forward.1} parent=35 // pred_check
        %p6020 = pneg %p136
      $region38: #{dense_layer_forward.1} parent=35 // pred_check_branch
        %6022 = sbr.rel (%p6020) target = $region40
      $region39: #{dense_layer_forward.1} parent=35 // pred_region
        %s6023 = smul.u32 16, %s20
      $region40: #{dense_layer_forward.1} parent=35 // pred_fallthru
        _
    $region36: #{dense_layer_forward.1} parent=5 // pred_fallthru
      _
    %p6024 = scmp.le.s32.totalorder 2, %s10
    // Predicated region
    $region41: #{dense_layer_forward.1} parent=5 // pred_check
      %p6025 = pneg %p6024
    $region42: #{dense_layer_forward.1} parent=5 // pred_check_branch
      %6027 = sbr.rel (%p6025) target = $region44
    $region43: #{dense_layer_forward.1} parent=5 // pred_region
      %s6028 = ssub.s32 %s10, 2
      // Predicated region
      $region45: #{dense_layer_forward.1} parent=43 // pred_check
        %p6029 = pneg %p142
      $region46: #{dense_layer_forward.1} parent=43 // pred_check_branch
        %6031 = sbr.rel (%p6029) target = $region48
      $region47: #{dense_layer_forward.1} parent=43 // pred_region
        %s6032 = smul.u32 16, %s22
        %p6033 = scmp.lt.s32.totalorder %s21, 1
        %s6034 = scalar_select %p6033, %s21, 1
        %p6035 = scmp.lt.s32.totalorder %s6032, 15
        %s6036 = scalar_select %p6035, %s6032, 15
        %s6037 = smul.addr %s6036, 2
        %s6038 = smul.addr %s6034, 32
        %s6039 = sadd.s32 %s6037, %s6038
        %s6040 = smul.addr %s6039, 8
        %s6041 = scalar_lea.vmem %s4, %s6040
      $region48: #{dense_layer_forward.1} parent=43 // pred_fallthru
        _
    $region44: #{dense_layer_forward.1} parent=5 // pred_fallthru
      _
  $region6: #{dense_layer_forward.1} parent=0 // loop_footer
    %s14 = sadd.s32 1, %s10
  $region7: #{dense_layer_forward.1} parent=0 // loop_footer_branch
    %9 = sbr.rel target = $region3
  $region8: #{dense_layer_forward.1} parent=0 // loop_exit
    _

</llo_original>
